<compile_context>
chip_gen: v7x
topology: tpu7x:2x2x1
jax: 0.10.0
libtpu: 0.0.40
codegen_flags: <defaults>
</compile_context>

<pallas_src>
import functools

import jax
import jax.numpy as jnp
from jax.experimental import pallas as pl
from jax.experimental.pallas import tpu as pltpu


_VMEM = pl.BlockSpec(memory_space=pltpu.MemorySpace.VMEM)
_SMEM = pl.BlockSpec(memory_space=pltpu.MemorySpace.SMEM)


# ----------------------------------------------------------------------------- fused kernel

def _rztx_layer_kernel(
    tgt_ref,      # (B, T, D)
    mem_ref,      # (B, S, D)
    sa_w_in_ref,  # (D, 3D)   self-attn in-proj, pre-transposed
    sa_b_in_ref,  # (1, 3D)
    sa_w_out_ref, # (D, D)
    sa_b_out_ref, # (1, D)
    ca_wq_ref,    # (D, D)    cross-attn q-proj, pre-transposed
    ca_bq_ref,    # (1, D)
    ca_wkv_ref,   # (D, 2D)   cross-attn kv-proj, pre-transposed
    ca_bkv_ref,   # (1, 2D)
    ca_w_out_ref, # (D, D)
    ca_b_out_ref, # (1, D)
    w1_ref,       # (D, dff)
    b1_ref,       # (1, dff)
    w2_ref,       # (dff, D)
    b2_ref,       # (1, D)
    rw_ref,       # (1,) in SMEM — resweight scalar
    o_ref,        # (B, T, D)
    *, nhead,
):
    B, T, D = tgt_ref.shape
    S = mem_ref.shape[1]
    H = nhead
    dh = D // H
    scale = 1.0 / (dh ** 0.5)
    rw = rw_ref[0]

    x = tgt_ref[...].astype(jnp.float32).reshape(B * T, D)      # (B*T, D)
    mem = mem_ref[...].astype(jnp.float32).reshape(B * S, D)    # (B*S, D)

    def mha(q, k, v, q_len, kv_len, w_out, b_out):
        # q: (B*q_len, D) already scaled by 1/sqrt(dh); k, v: (B*kv_len, D)
        q = q.reshape(B, q_len, D)
        k = k.reshape(B, kv_len, D)
        v = v.reshape(B, kv_len, D)
        heads = []
        for h in range(H):                                       # unrolled, H=4
            lo, hi = h * dh, (h + 1) * dh
            s = jnp.einsum("bqd,bkd->bqk", q[:, :, lo:hi], k[:, :, lo:hi],
                           preferred_element_type=jnp.float32)
            s = s - jnp.max(s, axis=-1, keepdims=True)
            p = jnp.exp(s)
            p = p * pl.reciprocal(jnp.sum(p, axis=-1, keepdims=True), approx=True)
            heads.append(jnp.einsum("bqk,bkd->bqd", p, v[:, :, lo:hi],
                                    preferred_element_type=jnp.float32))
        attn = jnp.concatenate(heads, axis=-1).reshape(B * q_len, D)
        return jnp.dot(attn, w_out, preferred_element_type=jnp.float32) + b_out

    # --- self-attention + ReZero residual ----------------------------------
    qkv = jnp.dot(x, sa_w_in_ref[...], preferred_element_type=jnp.float32) + sa_b_in_ref[...]
    sa = mha(qkv[:, :D] * scale, qkv[:, D:2 * D], qkv[:, 2 * D:], T, T,
             sa_w_out_ref[...], sa_b_out_ref[...])
    t1 = x + rw * sa

    # --- cross-attention (memory) + ReZero residual -------------------------
    q_c = jnp.dot(t1, ca_wq_ref[...], preferred_element_type=jnp.float32) + ca_bq_ref[...]
    kv_c = jnp.dot(mem, ca_wkv_ref[...], preferred_element_type=jnp.float32) + ca_bkv_ref[...]
    ca = mha(q_c * scale, kv_c[:, :D], kv_c[:, D:], T, S,
             ca_w_out_ref[...], ca_b_out_ref[...])
    t2 = t1 + rw * ca

    # --- feed-forward + ReZero residual -------------------------------------
    hdn = jnp.maximum(
        jnp.dot(t2, w1_ref[...], preferred_element_type=jnp.float32) + b1_ref[...], 0.0)
    ffn = jnp.dot(hdn, w2_ref[...], preferred_element_type=jnp.float32) + b2_ref[...]
    out = t2 + rw * ffn

    o_ref[...] = out.reshape(B, T, D).astype(o_ref.dtype)


# ----------------------------------------------------------------------------- wrapper

@functools.partial(jax.jit, static_argnames=("nhead",))
def rztx_decoder_layer(tgt, memory, params, nhead):
    T, B, D = tgt.shape
    S = memory.shape[0]
    dff = params["w1"].shape[0]

    # Single boundary transpose to batch-first; transposed back at the end.
    tgt_b = jnp.transpose(tgt, (1, 0, 2))      # (B, T, D)
    mem_b = jnp.transpose(memory, (1, 0, 2))   # (B, S, D)

    # Pre-transpose / pre-split weights once (outside the kernel).
    sa_w_in = params["sa_w_in"].T                       # (D, 3D)
    sa_b_in = params["sa_b_in"].reshape(1, 3 * D)
    sa_w_out = params["sa_w_out"].T                     # (D, D)
    sa_b_out = params["sa_b_out"].reshape(1, D)

    ca_wq = params["ca_w_in"][:D].T                     # (D, D)
    ca_bq = params["ca_b_in"][:D].reshape(1, D)
    ca_wkv = params["ca_w_in"][D:].T                    # (D, 2D)
    ca_bkv = params["ca_b_in"][D:].reshape(1, 2 * D)
    ca_w_out = params["ca_w_out"].T                     # (D, D)
    ca_b_out = params["ca_b_out"].reshape(1, D)

    w1 = params["w1"].T                                 # (D, dff)
    b1 = params["b1"].reshape(1, dff)
    w2 = params["w2"].T                                 # (dff, D)
    b2 = params["b2"].reshape(1, D)
    rw = params["resweight"]

    out_b = pl.pallas_call(
        functools.partial(_rztx_layer_kernel, nhead=nhead),
        out_shape=jax.ShapeDtypeStruct((B, T, D), tgt.dtype),
        in_specs=[_VMEM] * 16 + [_SMEM],
        out_specs=_VMEM,
        input_output_aliases={0: 0},   # reuse the transient batch-first input buffer
    )(tgt_b, mem_b,
      sa_w_in, sa_b_in, sa_w_out, sa_b_out,
      ca_wq, ca_bq, ca_wkv, ca_bkv, ca_w_out, ca_b_out,
      w1, b1, w2, b2, rw)

    return jnp.transpose(out_b, (1, 0, 2))     # back to (T, B, D)


# ----------------------------------------------------------------------------- pure-JAX reference

def _ref_mha(q_in, k_in, v_in, w_in, b_in, w_out, b_out, nhead):
    Tq, B, D = q_in.shape
    Tk = k_in.shape[0]
    dh = D // nhead
    q = q_in.reshape(Tq * B, D) @ w_in[:D].T + b_in[:D]
    k = k_in.reshape(Tk * B, D) @ w_in[D:2 * D].T + b_in[D:2 * D]
    v = v_in.reshape(Tk * B, D) @ w_in[2 * D:].T + b_in[2 * D:]
    qh = q.reshape(Tq, B, nhead, dh).transpose(1, 2, 0, 3)
    kh = k.reshape(Tk, B, nhead, dh).transpose(1, 2, 0, 3)
    vh = v.reshape(Tk, B, nhead, dh).transpose(1, 2, 0, 3)
    s = jnp.einsum("bhqd,bhkd->bhqk", qh, kh) / jnp.sqrt(dh).astype(jnp.float32)
    p = jax.nn.softmax(s, axis=-1)
    o = jnp.einsum("bhqk,bhkd->bhqd", p, vh)           # (B, H, Tq, dh)
    o = o.transpose(2, 0, 1, 3).reshape(Tq * B, D)
    return (o @ w_out.T + b_out).reshape(Tq, B, D)


def _ref_layer(tgt, memory, p, nhead):
    rw = p["resweight"][0]
    t2 = _ref_mha(tgt, tgt, tgt, p["sa_w_in"], p["sa_b_in"], p["sa_w_out"], p["sa_b_out"], nhead)
    tgt = tgt + rw * t2
    t2 = _ref_mha(tgt, memory, memory, p["ca_w_in"], p["ca_b_in"], p["ca_w_out"], p["ca_b_out"], nhead)
    tgt = tgt + rw * t2
    h = jnp.maximum(tgt @ p["w1"].T + p["b1"], 0.0)
    t2 = h @ p["w2"].T + p["b2"]
    return tgt + rw * t2


# ----------------------------------------------------------------------------- main

if __name__ == "__main__":
    d_model, nhead, dim_feedforward = 32, 4, 64
    T, S, B = 8, 16, 2

    key = jax.random.PRNGKey(0)
    ks = jax.random.split(key, 12)

    def init(k, shape, scale=0.05):
        return (scale * jax.random.normal(k, shape)).astype(jnp.float32)

    params = {
        "sa_w_in":  init(ks[0], (3 * d_model, d_model)),
        "sa_b_in":  init(ks[1], (3 * d_model,)),
        "sa_w_out": init(ks[2], (d_model, d_model)),
        "sa_b_out": init(ks[3], (d_model,)),
        "ca_w_in":  init(ks[4], (3 * d_model, d_model)),
        "ca_b_in":  init(ks[5], (3 * d_model,)),
        "ca_w_out": init(ks[6], (d_model, d_model)),
        "ca_b_out": init(ks[7], (d_model,)),
        "w1":       init(ks[8], (dim_feedforward, d_model)),
        "b1":       init(ks[9], (dim_feedforward,)),
        "w2":       init(ks[10], (d_model, dim_feedforward)),
        "b2":       init(ks[11], (d_model,)),
        # torch inits resweight to 0 (layer == identity); use a nonzero
        # deterministic value so the kernels are actually exercised.
        "resweight": jnp.array([0.25], dtype=jnp.float32),
    }

    tgt = jax.random.normal(jax.random.PRNGKey(1), (T, B, d_model), dtype=jnp.float32)
    memory = jax.random.normal(jax.random.PRNGKey(2), (S, B, d_model), dtype=jnp.float32)

    out = rztx_decoder_layer(tgt, memory, params, nhead)
    out = jax.block_until_ready(out)

    ref = _ref_layer(tgt, memory, params, nhead)
    assert out.shape == (T, B, d_model)
    # approx=True reciprocal in the softmax -> slightly relaxed tolerance.
    assert jnp.allclose(out, ref, atol=2e-3, rtol=2e-3), float(jnp.max(jnp.abs(out - ref)))

    print("KERNEL_OK")
</pallas_src>

<mosaic_0001>
module attributes {stable_mosaic.version = 11 : i64} {
  func.func @_rztx_layer_kernel(%arg0: memref<2x8x32xf32, #tpu.memory_space<vmem>>, %arg1: memref<2x16x32xf32, #tpu.memory_space<vmem>>, %arg2: memref<32x96xf32, #tpu.memory_space<vmem>>, %arg3: memref<1x96xf32, #tpu.memory_space<vmem>>, %arg4: memref<32x32xf32, #tpu.memory_space<vmem>>, %arg5: memref<1x32xf32, #tpu.memory_space<vmem>>, %arg6: memref<32x32xf32, #tpu.memory_space<vmem>>, %arg7: memref<1x32xf32, #tpu.memory_space<vmem>>, %arg8: memref<32x64xf32, #tpu.memory_space<vmem>>, %arg9: memref<1x64xf32, #tpu.memory_space<vmem>>, %arg10: memref<32x32xf32, #tpu.memory_space<vmem>>, %arg11: memref<1x32xf32, #tpu.memory_space<vmem>>, %arg12: memref<32x64xf32, #tpu.memory_space<vmem>>, %arg13: memref<1x64xf32, #tpu.memory_space<vmem>>, %arg14: memref<64x32xf32, #tpu.memory_space<vmem>>, %arg15: memref<1x32xf32, #tpu.memory_space<vmem>>, %arg16: memref<1xf32, #tpu.memory_space<smem>>, %arg17: memref<2x8x32xf32, #tpu.memory_space<vmem>>) attributes {dimension_semantics = [], scalar_prefetch = 0 : i64, scratch_operands = 0 : i64, tpu.core_type = #tpu.core_type<tc>} {
    %c0 = arith.constant 0 : index
    %0 = memref.load %arg16[%c0] : memref<1xf32, #tpu.memory_space<smem>>
    %c0_0 = arith.constant 0 : index
    %c0_1 = arith.constant 0 : index
    %c0_2 = arith.constant 0 : index
    %1 = vector.load %arg0[%c0_0, %c0_1, %c0_2] : memref<2x8x32xf32, #tpu.memory_space<vmem>>, vector<2x8x32xf32>
    %2 = vector.shape_cast %1 : vector<2x8x32xf32> to vector<16x32xf32>
    %c0_3 = arith.constant 0 : index
    %c0_4 = arith.constant 0 : index
    %c0_5 = arith.constant 0 : index
    %3 = vector.load %arg1[%c0_3, %c0_4, %c0_5] : memref<2x16x32xf32, #tpu.memory_space<vmem>>, vector<2x16x32xf32>
    %4 = vector.shape_cast %3 : vector<2x16x32xf32> to vector<32x32xf32>
    %c0_6 = arith.constant 0 : index
    %c0_7 = arith.constant 0 : index
    %5 = vector.load %arg2[%c0_6, %c0_7] : memref<32x96xf32, #tpu.memory_space<vmem>>, vector<32x96xf32>
    %cst = arith.constant dense<0.000000e+00> : vector<16x96xf32>
    %6 = tpu.matmul %2, %5, %cst {dimension_numbers = #tpu.dot_dimension_numbers<[1], [0], [0], [1], [0, 0, 1, 1], [], []>} : vector<16x32xf32>, vector<32x96xf32>, vector<16x96xf32> -> vector<16x96xf32>
    %c0_8 = arith.constant 0 : index
    %c0_9 = arith.constant 0 : index
    %7 = vector.load %arg3[%c0_8, %c0_9] : memref<1x96xf32, #tpu.memory_space<vmem>>, vector<1x96xf32>
    %8 = vector.broadcast %7 : vector<1x96xf32> to vector<16x96xf32>
    %9 = arith.addf %6, %8 : vector<16x96xf32>
    %10 = vector.extract_strided_slice %9 {offsets = [0, 0], sizes = [16, 32], strides = [1, 1]} : vector<16x96xf32> to vector<16x32xf32>
    %cst_10 = arith.constant 0.353553385 : f32
    %11 = vector.broadcast %cst_10 : f32 to vector<16x32xf32>
    %12 = arith.mulf %10, %11 : vector<16x32xf32>
    %13 = vector.extract_strided_slice %9 {offsets = [0, 32], sizes = [16, 32], strides = [1, 1]} : vector<16x96xf32> to vector<16x32xf32>
    %14 = vector.extract_strided_slice %9 {offsets = [0, 64], sizes = [16, 32], strides = [1, 1]} : vector<16x96xf32> to vector<16x32xf32>
    %c0_11 = arith.constant 0 : index
    %c0_12 = arith.constant 0 : index
    %15 = vector.load %arg4[%c0_11, %c0_12] : memref<32x32xf32, #tpu.memory_space<vmem>>, vector<32x32xf32>
    %c0_13 = arith.constant 0 : index
    %c0_14 = arith.constant 0 : index
    %16 = vector.load %arg5[%c0_13, %c0_14] : memref<1x32xf32, #tpu.memory_space<vmem>>, vector<1x32xf32>
    %17 = vector.shape_cast %12 : vector<16x32xf32> to vector<2x8x32xf32>
    %18 = vector.shape_cast %13 : vector<16x32xf32> to vector<2x8x32xf32>
    %19 = vector.shape_cast %14 : vector<16x32xf32> to vector<2x8x32xf32>
    %20 = vector.extract_strided_slice %17 {offsets = [0, 0, 0], sizes = [2, 8, 8], strides = [1, 1, 1]} : vector<2x8x32xf32> to vector<2x8x8xf32>
    %21 = vector.extract_strided_slice %18 {offsets = [0, 0, 0], sizes = [2, 8, 8], strides = [1, 1, 1]} : vector<2x8x32xf32> to vector<2x8x8xf32>
    "tpu.trace_start"() <{level = 10 : i32, message = "bqd,bkd->bqk"}> : () -> ()
    %cst_15 = arith.constant dense<0.000000e+00> : vector<2x8x8xf32>
    %22 = tpu.matmul %20, %21, %cst_15 {dimension_numbers = #tpu.dot_dimension_numbers<[2], [2], [1], [1], [0, 0, 0, 1, 1, 1], [0], [0]>} : vector<2x8x8xf32>, vector<2x8x8xf32>, vector<2x8x8xf32> -> vector<2x8x8xf32>
    "tpu.trace_stop"() : () -> ()
    %cst_16 = arith.constant dense<0xFF800000> : vector<2x8xf32>
    %23 = vector.multi_reduction <maximumf>, %22, %cst_16 [2] : vector<2x8x8xf32> to vector<2x8xf32>
    %24 = vector.shape_cast %23 : vector<2x8xf32> to vector<2x8x1xf32>
    %25 = vector.broadcast %24 : vector<2x8x1xf32> to vector<2x8x8xf32>
    %26 = arith.subf %22, %25 : vector<2x8x8xf32>
    %27 = math.exp %26 : vector<2x8x8xf32>
    %cst_17 = arith.constant dense<0.000000e+00> : vector<2x8xf32>
    %28 = vector.multi_reduction <add>, %27, %cst_17 [2] : vector<2x8x8xf32> to vector<2x8xf32>
    %29 = vector.shape_cast %28 : vector<2x8xf32> to vector<2x8x1xf32>
    %30 = tpu.reciprocal %29 {approx = true} : vector<2x8x1xf32> -> vector<2x8x1xf32>
    %31 = vector.broadcast %30 : vector<2x8x1xf32> to vector<2x8x8xf32>
    %32 = arith.mulf %27, %31 : vector<2x8x8xf32>
    %33 = vector.extract_strided_slice %19 {offsets = [0, 0, 0], sizes = [2, 8, 8], strides = [1, 1, 1]} : vector<2x8x32xf32> to vector<2x8x8xf32>
    "tpu.trace_start"() <{level = 10 : i32, message = "bqk,bkd->bqd"}> : () -> ()
    %cst_18 = arith.constant dense<0.000000e+00> : vector<2x8x8xf32>
    %34 = tpu.matmul %32, %33, %cst_18 {dimension_numbers = #tpu.dot_dimension_numbers<[2], [1], [1], [2], [0, 0, 0, 1, 1, 2], [0], [0]>} : vector<2x8x8xf32>, vector<2x8x8xf32>, vector<2x8x8xf32> -> vector<2x8x8xf32>
    "tpu.trace_stop"() : () -> ()
    %35 = vector.extract_strided_slice %17 {offsets = [0, 0, 8], sizes = [2, 8, 8], strides = [1, 1, 1]} : vector<2x8x32xf32> to vector<2x8x8xf32>
    %36 = vector.extract_strided_slice %18 {offsets = [0, 0, 8], sizes = [2, 8, 8], strides = [1, 1, 1]} : vector<2x8x32xf32> to vector<2x8x8xf32>
    "tpu.trace_start"() <{level = 10 : i32, message = "bqd,bkd->bqk"}> : () -> ()
    %cst_19 = arith.constant dense<0.000000e+00> : vector<2x8x8xf32>
    %37 = tpu.matmul %35, %36, %cst_19 {dimension_numbers = #tpu.dot_dimension_numbers<[2], [2], [1], [1], [0, 0, 0, 1, 1, 1], [0], [0]>} : vector<2x8x8xf32>, vector<2x8x8xf32>, vector<2x8x8xf32> -> vector<2x8x8xf32>
    "tpu.trace_stop"() : () -> ()
    %cst_20 = arith.constant dense<0xFF800000> : vector<2x8xf32>
    %38 = vector.multi_reduction <maximumf>, %37, %cst_20 [2] : vector<2x8x8xf32> to vector<2x8xf32>
    %39 = vector.shape_cast %38 : vector<2x8xf32> to vector<2x8x1xf32>
    %40 = vector.broadcast %39 : vector<2x8x1xf32> to vector<2x8x8xf32>
    %41 = arith.subf %37, %40 : vector<2x8x8xf32>
    %42 = math.exp %41 : vector<2x8x8xf32>
    %cst_21 = arith.constant dense<0.000000e+00> : vector<2x8xf32>
    %43 = vector.multi_reduction <add>, %42, %cst_21 [2] : vector<2x8x8xf32> to vector<2x8xf32>
    %44 = vector.shape_cast %43 : vector<2x8xf32> to vector<2x8x1xf32>
    %45 = tpu.reciprocal %44 {approx = true} : vector<2x8x1xf32> -> vector<2x8x1xf32>
    %46 = vector.broadcast %45 : vector<2x8x1xf32> to vector<2x8x8xf32>
    %47 = arith.mulf %42, %46 : vector<2x8x8xf32>
    %48 = vector.extract_strided_slice %19 {offsets = [0, 0, 8], sizes = [2, 8, 8], strides = [1, 1, 1]} : vector<2x8x32xf32> to vector<2x8x8xf32>
    "tpu.trace_start"() <{level = 10 : i32, message = "bqk,bkd->bqd"}> : () -> ()
    %cst_22 = arith.constant dense<0.000000e+00> : vector<2x8x8xf32>
    %49 = tpu.matmul %47, %48, %cst_22 {dimension_numbers = #tpu.dot_dimension_numbers<[2], [1], [1], [2], [0, 0, 0, 1, 1, 2], [0], [0]>} : vector<2x8x8xf32>, vector<2x8x8xf32>, vector<2x8x8xf32> -> vector<2x8x8xf32>
    "tpu.trace_stop"() : () -> ()
    %50 = vector.extract_strided_slice %17 {offsets = [0, 0, 16], sizes = [2, 8, 8], strides = [1, 1, 1]} : vector<2x8x32xf32> to vector<2x8x8xf32>
    %51 = vector.extract_strided_slice %18 {offsets = [0, 0, 16], sizes = [2, 8, 8], strides = [1, 1, 1]} : vector<2x8x32xf32> to vector<2x8x8xf32>
    "tpu.trace_start"() <{level = 10 : i32, message = "bqd,bkd->bqk"}> : () -> ()
    %cst_23 = arith.constant dense<0.000000e+00> : vector<2x8x8xf32>
    %52 = tpu.matmul %50, %51, %cst_23 {dimension_numbers = #tpu.dot_dimension_numbers<[2], [2], [1], [1], [0, 0, 0, 1, 1, 1], [0], [0]>} : vector<2x8x8xf32>, vector<2x8x8xf32>, vector<2x8x8xf32> -> vector<2x8x8xf32>
    "tpu.trace_stop"() : () -> ()
    %cst_24 = arith.constant dense<0xFF800000> : vector<2x8xf32>
    %53 = vector.multi_reduction <maximumf>, %52, %cst_24 [2] : vector<2x8x8xf32> to vector<2x8xf32>
    %54 = vector.shape_cast %53 : vector<2x8xf32> to vector<2x8x1xf32>
    %55 = vector.broadcast %54 : vector<2x8x1xf32> to vector<2x8x8xf32>
    %56 = arith.subf %52, %55 : vector<2x8x8xf32>
    %57 = math.exp %56 : vector<2x8x8xf32>
    %cst_25 = arith.constant dense<0.000000e+00> : vector<2x8xf32>
    %58 = vector.multi_reduction <add>, %57, %cst_25 [2] : vector<2x8x8xf32> to vector<2x8xf32>
    %59 = vector.shape_cast %58 : vector<2x8xf32> to vector<2x8x1xf32>
    %60 = tpu.reciprocal %59 {approx = true} : vector<2x8x1xf32> -> vector<2x8x1xf32>
    %61 = vector.broadcast %60 : vector<2x8x1xf32> to vector<2x8x8xf32>
    %62 = arith.mulf %57, %61 : vector<2x8x8xf32>
    %63 = vector.extract_strided_slice %19 {offsets = [0, 0, 16], sizes = [2, 8, 8], strides = [1, 1, 1]} : vector<2x8x32xf32> to vector<2x8x8xf32>
    "tpu.trace_start"() <{level = 10 : i32, message = "bqk,bkd->bqd"}> : () -> ()
    %cst_26 = arith.constant dense<0.000000e+00> : vector<2x8x8xf32>
    %64 = tpu.matmul %62, %63, %cst_26 {dimension_numbers = #tpu.dot_dimension_numbers<[2], [1], [1], [2], [0, 0, 0, 1, 1, 2], [0], [0]>} : vector<2x8x8xf32>, vector<2x8x8xf32>, vector<2x8x8xf32> -> vector<2x8x8xf32>
    "tpu.trace_stop"() : () -> ()
    %65 = vector.extract_strided_slice %17 {offsets = [0, 0, 24], sizes = [2, 8, 8], strides = [1, 1, 1]} : vector<2x8x32xf32> to vector<2x8x8xf32>
    %66 = vector.extract_strided_slice %18 {offsets = [0, 0, 24], sizes = [2, 8, 8], strides = [1, 1, 1]} : vector<2x8x32xf32> to vector<2x8x8xf32>
    "tpu.trace_start"() <{level = 10 : i32, message = "bqd,bkd->bqk"}> : () -> ()
    %cst_27 = arith.constant dense<0.000000e+00> : vector<2x8x8xf32>
    %67 = tpu.matmul %65, %66, %cst_27 {dimension_numbers = #tpu.dot_dimension_numbers<[2], [2], [1], [1], [0, 0, 0, 1, 1, 1], [0], [0]>} : vector<2x8x8xf32>, vector<2x8x8xf32>, vector<2x8x8xf32> -> vector<2x8x8xf32>
    "tpu.trace_stop"() : () -> ()
    %cst_28 = arith.constant dense<0xFF800000> : vector<2x8xf32>
    %68 = vector.multi_reduction <maximumf>, %67, %cst_28 [2] : vector<2x8x8xf32> to vector<2x8xf32>
    %69 = vector.shape_cast %68 : vector<2x8xf32> to vector<2x8x1xf32>
    %70 = vector.broadcast %69 : vector<2x8x1xf32> to vector<2x8x8xf32>
    %71 = arith.subf %67, %70 : vector<2x8x8xf32>
    %72 = math.exp %71 : vector<2x8x8xf32>
    %cst_29 = arith.constant dense<0.000000e+00> : vector<2x8xf32>
    %73 = vector.multi_reduction <add>, %72, %cst_29 [2] : vector<2x8x8xf32> to vector<2x8xf32>
    %74 = vector.shape_cast %73 : vector<2x8xf32> to vector<2x8x1xf32>
    %75 = tpu.reciprocal %74 {approx = true} : vector<2x8x1xf32> -> vector<2x8x1xf32>
    %76 = vector.broadcast %75 : vector<2x8x1xf32> to vector<2x8x8xf32>
    %77 = arith.mulf %72, %76 : vector<2x8x8xf32>
    %78 = vector.extract_strided_slice %19 {offsets = [0, 0, 24], sizes = [2, 8, 8], strides = [1, 1, 1]} : vector<2x8x32xf32> to vector<2x8x8xf32>
    "tpu.trace_start"() <{level = 10 : i32, message = "bqk,bkd->bqd"}> : () -> ()
    %cst_30 = arith.constant dense<0.000000e+00> : vector<2x8x8xf32>
    %79 = tpu.matmul %77, %78, %cst_30 {dimension_numbers = #tpu.dot_dimension_numbers<[2], [1], [1], [2], [0, 0, 0, 1, 1, 2], [0], [0]>} : vector<2x8x8xf32>, vector<2x8x8xf32>, vector<2x8x8xf32> -> vector<2x8x8xf32>
    "tpu.trace_stop"() : () -> ()
    %80 = tpu.concatenate %34, %49, %64, %79 in 2 : vector<2x8x8xf32>, vector<2x8x8xf32>, vector<2x8x8xf32>, vector<2x8x8xf32> -> vector<2x8x32xf32>
    %81 = vector.shape_cast %80 : vector<2x8x32xf32> to vector<16x32xf32>
    %cst_31 = arith.constant dense<0.000000e+00> : vector<16x32xf32>
    %82 = tpu.matmul %81, %15, %cst_31 {dimension_numbers = #tpu.dot_dimension_numbers<[1], [0], [0], [1], [0, 0, 1, 1], [], []>} : vector<16x32xf32>, vector<32x32xf32>, vector<16x32xf32> -> vector<16x32xf32>
    %83 = vector.broadcast %16 : vector<1x32xf32> to vector<16x32xf32>
    %84 = arith.addf %82, %83 : vector<16x32xf32>
    %85 = vector.broadcast %0 : f32 to vector<16x32xf32>
    %86 = arith.mulf %85, %84 : vector<16x32xf32>
    %87 = arith.addf %2, %86 : vector<16x32xf32>
    %c0_32 = arith.constant 0 : index
    %c0_33 = arith.constant 0 : index
    %88 = vector.load %arg6[%c0_32, %c0_33] : memref<32x32xf32, #tpu.memory_space<vmem>>, vector<32x32xf32>
    %cst_34 = arith.constant dense<0.000000e+00> : vector<16x32xf32>
    %89 = tpu.matmul %87, %88, %cst_34 {dimension_numbers = #tpu.dot_dimension_numbers<[1], [0], [0], [1], [0, 0, 1, 1], [], []>} : vector<16x32xf32>, vector<32x32xf32>, vector<16x32xf32> -> vector<16x32xf32>
    %c0_35 = arith.constant 0 : index
    %c0_36 = arith.constant 0 : index
    %90 = vector.load %arg7[%c0_35, %c0_36] : memref<1x32xf32, #tpu.memory_space<vmem>>, vector<1x32xf32>
    %91 = vector.broadcast %90 : vector<1x32xf32> to vector<16x32xf32>
    %92 = arith.addf %89, %91 : vector<16x32xf32>
    %c0_37 = arith.constant 0 : index
    %c0_38 = arith.constant 0 : index
    %93 = vector.load %arg8[%c0_37, %c0_38] : memref<32x64xf32, #tpu.memory_space<vmem>>, vector<32x64xf32>
    %cst_39 = arith.constant dense<0.000000e+00> : vector<32x64xf32>
    %94 = tpu.matmul %4, %93, %cst_39 {dimension_numbers = #tpu.dot_dimension_numbers<[1], [0], [0], [1], [0, 0, 1, 1], [], []>} : vector<32x32xf32>, vector<32x64xf32>, vector<32x64xf32> -> vector<32x64xf32>
    %c0_40 = arith.constant 0 : index
    %c0_41 = arith.constant 0 : index
    %95 = vector.load %arg9[%c0_40, %c0_41] : memref<1x64xf32, #tpu.memory_space<vmem>>, vector<1x64xf32>
    %96 = vector.broadcast %95 : vector<1x64xf32> to vector<32x64xf32>
    %97 = arith.addf %94, %96 : vector<32x64xf32>
    %cst_42 = arith.constant 0.353553385 : f32
    %98 = vector.broadcast %cst_42 : f32 to vector<16x32xf32>
    %99 = arith.mulf %92, %98 : vector<16x32xf32>
    %100 = vector.extract_strided_slice %97 {offsets = [0, 0], sizes = [32, 32], strides = [1, 1]} : vector<32x64xf32> to vector<32x32xf32>
    %101 = vector.extract_strided_slice %97 {offsets = [0, 32], sizes = [32, 32], strides = [1, 1]} : vector<32x64xf32> to vector<32x32xf32>
    %c0_43 = arith.constant 0 : index
    %c0_44 = arith.constant 0 : index
    %102 = vector.load %arg10[%c0_43, %c0_44] : memref<32x32xf32, #tpu.memory_space<vmem>>, vector<32x32xf32>
    %c0_45 = arith.constant 0 : index
    %c0_46 = arith.constant 0 : index
    %103 = vector.load %arg11[%c0_45, %c0_46] : memref<1x32xf32, #tpu.memory_space<vmem>>, vector<1x32xf32>
    %104 = vector.shape_cast %99 : vector<16x32xf32> to vector<2x8x32xf32>
    %105 = vector.shape_cast %100 : vector<32x32xf32> to vector<2x16x32xf32>
    %106 = vector.shape_cast %101 : vector<32x32xf32> to vector<2x16x32xf32>
    %107 = vector.extract_strided_slice %104 {offsets = [0, 0, 0], sizes = [2, 8, 8], strides = [1, 1, 1]} : vector<2x8x32xf32> to vector<2x8x8xf32>
    %108 = vector.extract_strided_slice %105 {offsets = [0, 0, 0], sizes = [2, 16, 8], strides = [1, 1, 1]} : vector<2x16x32xf32> to vector<2x16x8xf32>
    "tpu.trace_start"() <{level = 10 : i32, message = "bqd,bkd->bqk"}> : () -> ()
    %cst_47 = arith.constant dense<0.000000e+00> : vector<2x8x16xf32>
    %109 = tpu.matmul %107, %108, %cst_47 {dimension_numbers = #tpu.dot_dimension_numbers<[2], [2], [1], [1], [0, 0, 0, 1, 1, 1], [0], [0]>} : vector<2x8x8xf32>, vector<2x16x8xf32>, vector<2x8x16xf32> -> vector<2x8x16xf32>
    "tpu.trace_stop"() : () -> ()
    %cst_48 = arith.constant dense<0xFF800000> : vector<2x8xf32>
    %110 = vector.multi_reduction <maximumf>, %109, %cst_48 [2] : vector<2x8x16xf32> to vector<2x8xf32>
    %111 = vector.shape_cast %110 : vector<2x8xf32> to vector<2x8x1xf32>
    %112 = vector.broadcast %111 : vector<2x8x1xf32> to vector<2x8x16xf32>
    %113 = arith.subf %109, %112 : vector<2x8x16xf32>
    %114 = math.exp %113 : vector<2x8x16xf32>
    %cst_49 = arith.constant dense<0.000000e+00> : vector<2x8xf32>
    %115 = vector.multi_reduction <add>, %114, %cst_49 [2] : vector<2x8x16xf32> to vector<2x8xf32>
    %116 = vector.shape_cast %115 : vector<2x8xf32> to vector<2x8x1xf32>
    %117 = tpu.reciprocal %116 {approx = true} : vector<2x8x1xf32> -> vector<2x8x1xf32>
    %118 = vector.broadcast %117 : vector<2x8x1xf32> to vector<2x8x16xf32>
    %119 = arith.mulf %114, %118 : vector<2x8x16xf32>
    %120 = vector.extract_strided_slice %106 {offsets = [0, 0, 0], sizes = [2, 16, 8], strides = [1, 1, 1]} : vector<2x16x32xf32> to vector<2x16x8xf32>
    "tpu.trace_start"() <{level = 10 : i32, message = "bqk,bkd->bqd"}> : () -> ()
    %cst_50 = arith.constant dense<0.000000e+00> : vector<2x8x8xf32>
    %121 = tpu.matmul %119, %120, %cst_50 {dimension_numbers = #tpu.dot_dimension_numbers<[2], [1], [1], [2], [0, 0, 0, 1, 1, 2], [0], [0]>} : vector<2x8x16xf32>, vector<2x16x8xf32>, vector<2x8x8xf32> -> vector<2x8x8xf32>
    "tpu.trace_stop"() : () -> ()
    %122 = vector.extract_strided_slice %104 {offsets = [0, 0, 8], sizes = [2, 8, 8], strides = [1, 1, 1]} : vector<2x8x32xf32> to vector<2x8x8xf32>
    %123 = vector.extract_strided_slice %105 {offsets = [0, 0, 8], sizes = [2, 16, 8], strides = [1, 1, 1]} : vector<2x16x32xf32> to vector<2x16x8xf32>
    "tpu.trace_start"() <{level = 10 : i32, message = "bqd,bkd->bqk"}> : () -> ()
    %cst_51 = arith.constant dense<0.000000e+00> : vector<2x8x16xf32>
    %124 = tpu.matmul %122, %123, %cst_51 {dimension_numbers = #tpu.dot_dimension_numbers<[2], [2], [1], [1], [0, 0, 0, 1, 1, 1], [0], [0]>} : vector<2x8x8xf32>, vector<2x16x8xf32>, vector<2x8x16xf32> -> vector<2x8x16xf32>
    "tpu.trace_stop"() : () -> ()
    %cst_52 = arith.constant dense<0xFF800000> : vector<2x8xf32>
    %125 = vector.multi_reduction <maximumf>, %124, %cst_52 [2] : vector<2x8x16xf32> to vector<2x8xf32>
    %126 = vector.shape_cast %125 : vector<2x8xf32> to vector<2x8x1xf32>
    %127 = vector.broadcast %126 : vector<2x8x1xf32> to vector<2x8x16xf32>
    %128 = arith.subf %124, %127 : vector<2x8x16xf32>
    %129 = math.exp %128 : vector<2x8x16xf32>
    %cst_53 = arith.constant dense<0.000000e+00> : vector<2x8xf32>
    %130 = vector.multi_reduction <add>, %129, %cst_53 [2] : vector<2x8x16xf32> to vector<2x8xf32>
    %131 = vector.shape_cast %130 : vector<2x8xf32> to vector<2x8x1xf32>
    %132 = tpu.reciprocal %131 {approx = true} : vector<2x8x1xf32> -> vector<2x8x1xf32>
    %133 = vector.broadcast %132 : vector<2x8x1xf32> to vector<2x8x16xf32>
    %134 = arith.mulf %129, %133 : vector<2x8x16xf32>
    %135 = vector.extract_strided_slice %106 {offsets = [0, 0, 8], sizes = [2, 16, 8], strides = [1, 1, 1]} : vector<2x16x32xf32> to vector<2x16x8xf32>
    "tpu.trace_start"() <{level = 10 : i32, message = "bqk,bkd->bqd"}> : () -> ()
    %cst_54 = arith.constant dense<0.000000e+00> : vector<2x8x8xf32>
    %136 = tpu.matmul %134, %135, %cst_54 {dimension_numbers = #tpu.dot_dimension_numbers<[2], [1], [1], [2], [0, 0, 0, 1, 1, 2], [0], [0]>} : vector<2x8x16xf32>, vector<2x16x8xf32>, vector<2x8x8xf32> -> vector<2x8x8xf32>
    "tpu.trace_stop"() : () -> ()
    %137 = vector.extract_strided_slice %104 {offsets = [0, 0, 16], sizes = [2, 8, 8], strides = [1, 1, 1]} : vector<2x8x32xf32> to vector<2x8x8xf32>
    %138 = vector.extract_strided_slice %105 {offsets = [0, 0, 16], sizes = [2, 16, 8], strides = [1, 1, 1]} : vector<2x16x32xf32> to vector<2x16x8xf32>
    "tpu.trace_start"() <{level = 10 : i32, message = "bqd,bkd->bqk"}> : () -> ()
    %cst_55 = arith.constant dense<0.000000e+00> : vector<2x8x16xf32>
    %139 = tpu.matmul %137, %138, %cst_55 {dimension_numbers = #tpu.dot_dimension_numbers<[2], [2], [1], [1], [0, 0, 0, 1, 1, 1], [0], [0]>} : vector<2x8x8xf32>, vector<2x16x8xf32>, vector<2x8x16xf32> -> vector<2x8x16xf32>
    "tpu.trace_stop"() : () -> ()
    %cst_56 = arith.constant dense<0xFF800000> : vector<2x8xf32>
    %140 = vector.multi_reduction <maximumf>, %139, %cst_56 [2] : vector<2x8x16xf32> to vector<2x8xf32>
    %141 = vector.shape_cast %140 : vector<2x8xf32> to vector<2x8x1xf32>
    %142 = vector.broadcast %141 : vector<2x8x1xf32> to vector<2x8x16xf32>
    %143 = arith.subf %139, %142 : vector<2x8x16xf32>
    %144 = math.exp %143 : vector<2x8x16xf32>
    %cst_57 = arith.constant dense<0.000000e+00> : vector<2x8xf32>
    %145 = vector.multi_reduction <add>, %144, %cst_57 [2] : vector<2x8x16xf32> to vector<2x8xf32>
    %146 = vector.shape_cast %145 : vector<2x8xf32> to vector<2x8x1xf32>
    %147 = tpu.reciprocal %146 {approx = true} : vector<2x8x1xf32> -> vector<2x8x1xf32>
    %148 = vector.broadcast %147 : vector<2x8x1xf32> to vector<2x8x16xf32>
    %149 = arith.mulf %144, %148 : vector<2x8x16xf32>
    %150 = vector.extract_strided_slice %106 {offsets = [0, 0, 16], sizes = [2, 16, 8], strides = [1, 1, 1]} : vector<2x16x32xf32> to vector<2x16x8xf32>
    "tpu.trace_start"() <{level = 10 : i32, message = "bqk,bkd->bqd"}> : () -> ()
    %cst_58 = arith.constant dense<0.000000e+00> : vector<2x8x8xf32>
    %151 = tpu.matmul %149, %150, %cst_58 {dimension_numbers = #tpu.dot_dimension_numbers<[2], [1], [1], [2], [0, 0, 0, 1, 1, 2], [0], [0]>} : vector<2x8x16xf32>, vector<2x16x8xf32>, vector<2x8x8xf32> -> vector<2x8x8xf32>
    "tpu.trace_stop"() : () -> ()
    %152 = vector.extract_strided_slice %104 {offsets = [0, 0, 24], sizes = [2, 8, 8], strides = [1, 1, 1]} : vector<2x8x32xf32> to vector<2x8x8xf32>
    %153 = vector.extract_strided_slice %105 {offsets = [0, 0, 24], sizes = [2, 16, 8], strides = [1, 1, 1]} : vector<2x16x32xf32> to vector<2x16x8xf32>
    "tpu.trace_start"() <{level = 10 : i32, message = "bqd,bkd->bqk"}> : () -> ()
    %cst_59 = arith.constant dense<0.000000e+00> : vector<2x8x16xf32>
    %154 = tpu.matmul %152, %153, %cst_59 {dimension_numbers = #tpu.dot_dimension_numbers<[2], [2], [1], [1], [0, 0, 0, 1, 1, 1], [0], [0]>} : vector<2x8x8xf32>, vector<2x16x8xf32>, vector<2x8x16xf32> -> vector<2x8x16xf32>
    "tpu.trace_stop"() : () -> ()
    %cst_60 = arith.constant dense<0xFF800000> : vector<2x8xf32>
    %155 = vector.multi_reduction <maximumf>, %154, %cst_60 [2] : vector<2x8x16xf32> to vector<2x8xf32>
    %156 = vector.shape_cast %155 : vector<2x8xf32> to vector<2x8x1xf32>
    %157 = vector.broadcast %156 : vector<2x8x1xf32> to vector<2x8x16xf32>
    %158 = arith.subf %154, %157 : vector<2x8x16xf32>
    %159 = math.exp %158 : vector<2x8x16xf32>
    %cst_61 = arith.constant dense<0.000000e+00> : vector<2x8xf32>
    %160 = vector.multi_reduction <add>, %159, %cst_61 [2] : vector<2x8x16xf32> to vector<2x8xf32>
    %161 = vector.shape_cast %160 : vector<2x8xf32> to vector<2x8x1xf32>
    %162 = tpu.reciprocal %161 {approx = true} : vector<2x8x1xf32> -> vector<2x8x1xf32>
    %163 = vector.broadcast %162 : vector<2x8x1xf32> to vector<2x8x16xf32>
    %164 = arith.mulf %159, %163 : vector<2x8x16xf32>
    %165 = vector.extract_strided_slice %106 {offsets = [0, 0, 24], sizes = [2, 16, 8], strides = [1, 1, 1]} : vector<2x16x32xf32> to vector<2x16x8xf32>
    "tpu.trace_start"() <{level = 10 : i32, message = "bqk,bkd->bqd"}> : () -> ()
    %cst_62 = arith.constant dense<0.000000e+00> : vector<2x8x8xf32>
    %166 = tpu.matmul %164, %165, %cst_62 {dimension_numbers = #tpu.dot_dimension_numbers<[2], [1], [1], [2], [0, 0, 0, 1, 1, 2], [0], [0]>} : vector<2x8x16xf32>, vector<2x16x8xf32>, vector<2x8x8xf32> -> vector<2x8x8xf32>
    "tpu.trace_stop"() : () -> ()
    %167 = tpu.concatenate %121, %136, %151, %166 in 2 : vector<2x8x8xf32>, vector<2x8x8xf32>, vector<2x8x8xf32>, vector<2x8x8xf32> -> vector<2x8x32xf32>
    %168 = vector.shape_cast %167 : vector<2x8x32xf32> to vector<16x32xf32>
    %cst_63 = arith.constant dense<0.000000e+00> : vector<16x32xf32>
    %169 = tpu.matmul %168, %102, %cst_63 {dimension_numbers = #tpu.dot_dimension_numbers<[1], [0], [0], [1], [0, 0, 1, 1], [], []>} : vector<16x32xf32>, vector<32x32xf32>, vector<16x32xf32> -> vector<16x32xf32>
    %170 = vector.broadcast %103 : vector<1x32xf32> to vector<16x32xf32>
    %171 = arith.addf %169, %170 : vector<16x32xf32>
    %172 = vector.broadcast %0 : f32 to vector<16x32xf32>
    %173 = arith.mulf %172, %171 : vector<16x32xf32>
    %174 = arith.addf %87, %173 : vector<16x32xf32>
    %c0_64 = arith.constant 0 : index
    %c0_65 = arith.constant 0 : index
    %175 = vector.load %arg12[%c0_64, %c0_65] : memref<32x64xf32, #tpu.memory_space<vmem>>, vector<32x64xf32>
    %cst_66 = arith.constant dense<0.000000e+00> : vector<16x64xf32>
    %176 = tpu.matmul %174, %175, %cst_66 {dimension_numbers = #tpu.dot_dimension_numbers<[1], [0], [0], [1], [0, 0, 1, 1], [], []>} : vector<16x32xf32>, vector<32x64xf32>, vector<16x64xf32> -> vector<16x64xf32>
    %c0_67 = arith.constant 0 : index
    %c0_68 = arith.constant 0 : index
    %177 = vector.load %arg13[%c0_67, %c0_68] : memref<1x64xf32, #tpu.memory_space<vmem>>, vector<1x64xf32>
    %178 = vector.broadcast %177 : vector<1x64xf32> to vector<16x64xf32>
    %179 = arith.addf %176, %178 : vector<16x64xf32>
    %cst_69 = arith.constant 0.000000e+00 : f32
    %180 = vector.broadcast %cst_69 : f32 to vector<16x64xf32>
    %181 = arith.maximumf %179, %180 : vector<16x64xf32>
    %c0_70 = arith.constant 0 : index
    %c0_71 = arith.constant 0 : index
    %182 = vector.load %arg14[%c0_70, %c0_71] : memref<64x32xf32, #tpu.memory_space<vmem>>, vector<64x32xf32>
    %cst_72 = arith.constant dense<0.000000e+00> : vector<16x32xf32>
    %183 = tpu.matmul %181, %182, %cst_72 {dimension_numbers = #tpu.dot_dimension_numbers<[1], [0], [0], [1], [0, 0, 1, 1], [], []>} : vector<16x64xf32>, vector<64x32xf32>, vector<16x32xf32> -> vector<16x32xf32>
    %c0_73 = arith.constant 0 : index
    %c0_74 = arith.constant 0 : index
    %184 = vector.load %arg15[%c0_73, %c0_74] : memref<1x32xf32, #tpu.memory_space<vmem>>, vector<1x32xf32>
    %185 = vector.broadcast %184 : vector<1x32xf32> to vector<16x32xf32>
    %186 = arith.addf %183, %185 : vector<16x32xf32>
    %187 = vector.broadcast %0 : f32 to vector<16x32xf32>
    %188 = arith.mulf %187, %186 : vector<16x32xf32>
    %189 = arith.addf %174, %188 : vector<16x32xf32>
    %190 = vector.shape_cast %189 : vector<16x32xf32> to vector<2x8x32xf32>
    %c0_75 = arith.constant 0 : index
    %c0_76 = arith.constant 0 : index
    %c0_77 = arith.constant 0 : index
    %191 = vector.load %arg17[%c0_75, %c0_76, %c0_77] : memref<2x8x32xf32, #tpu.memory_space<vmem>>, vector<2x8x32xf32>
    tpu.vector_store %arg17[%c0_75, %c0_76, %c0_77], %190 {strides = array<i32>} : memref<2x8x32xf32, #tpu.memory_space<vmem>>, vector<2x8x32xf32>,
    return
  }
}

</mosaic_0001>

<llo_original>
// kernel: rztx_decoder_layer.1
$region0: #{rztx_decoder_layer.1}
  #allocation0 [shape = 'u32[]', space=smem, size = 0x4, offset = 0x4, fixed_abs, tag = 'smem constant byte address 0x4 - core index']
  #allocation1 [shape = 'u32[144,128]{1,0:T(1,128)}', space=vmem, size = 0x12000, scoped, tag = 'internal scratch']
  #allocation2 [shape = 'f32[1]{0:T(128)S(6)}', space=smem, size = 0x200, scoped, tag = 'scoped memory for rztx_decoder_layer.1']
  %s0 = inlined_call_operand.vmem [shape: f32[2,8,32], index: 0, kind: input, shape index: {}, may-alias: {0,17}]
  %s1 = inlined_call_operand.vmem [shape: f32[2,16,32], index: 1, kind: input, shape index: {}]
  %s2 = inlined_call_operand.vmem [shape: f32[32,96], index: 2, kind: input, shape index: {}]
  %s3 = inlined_call_operand.vmem [shape: f32[1,96], index: 3, kind: input, shape index: {}]
  %s4 = inlined_call_operand.vmem [shape: f32[32,32], index: 4, kind: input, shape index: {}]
  %s5 = inlined_call_operand.vmem [shape: f32[1,32], index: 5, kind: input, shape index: {}]
  %s6 = inlined_call_operand.vmem [shape: f32[32,32], index: 6, kind: input, shape index: {}]
  %s7 = inlined_call_operand.vmem [shape: f32[1,32], index: 7, kind: input, shape index: {}]
  %s8 = inlined_call_operand.vmem [shape: f32[32,64], index: 8, kind: input, shape index: {}]
  %s9 = inlined_call_operand.vmem [shape: f32[1,64], index: 9, kind: input, shape index: {}]
  %s10 = inlined_call_operand.vmem [shape: f32[32,32], index: 10, kind: input, shape index: {}]
  %s11 = inlined_call_operand.vmem [shape: f32[1,32], index: 11, kind: input, shape index: {}]
  %s12 = inlined_call_operand.vmem [shape: f32[32,64], index: 12, kind: input, shape index: {}]
  %s13 = inlined_call_operand.vmem [shape: f32[1,64], index: 13, kind: input, shape index: {}]
  %s14 = inlined_call_operand.vmem [shape: f32[64,32], index: 14, kind: input, shape index: {}]
  %s15 = inlined_call_operand.vmem [shape: f32[1,32], index: 15, kind: input, shape index: {}]
  %s16 = inlined_call_operand.<no memory space> [shape: f32[1], index: 16, kind: input, shape index: {}]
  %s17 = inlined_call_operand.vmem [shape: f32[2,8,32], index: 17, kind: output, shape index: {}, may-alias: {0,17}]
  %s18 = sld [smem:[#allocation0]]
  $region78: #{rztx_decoder_layer.1} parent=0
    _
  %s20 = ssub.s32 1, %s18
  %s21 = scalar_select 0, %s20, %s18
  %22 = sst [smem:[#allocation2]] %s16
  // Predicated region
  $region2: #{rztx_decoder_layer.1} parent=0 // pred_check
    _
  $region3: #{rztx_decoder_layer.1} parent=0 // pred_check_branch
    %24 = sbr.rel (0) target = $region5
  $region4: #{rztx_decoder_layer.1} parent=0 // pred_region
    _
  $region5: #{rztx_decoder_layer.1} parent=0 // pred_fallthru
    _
  // Predicated region
  $region6: #{rztx_decoder_layer.1} parent=0 // pred_check
    _
  $region7: #{rztx_decoder_layer.1} parent=0 // pred_check_branch
    %26 = sbr.rel (0) target = $region9
  $region8: #{rztx_decoder_layer.1} parent=0 // pred_region
    _
  $region9: #{rztx_decoder_layer.1} parent=0 // pred_fallthru
    _
  // Predicated region
  $region10: #{rztx_decoder_layer.1} parent=0 // pred_check
    _
  $region11: #{rztx_decoder_layer.1} parent=0 // pred_check_branch
    %28 = sbr.rel (0) target = $region13
  $region12: #{rztx_decoder_layer.1} parent=0 // pred_region
    _
  $region13: #{rztx_decoder_layer.1} parent=0 // pred_fallthru
    _
  // Predicated region
  $region14: #{rztx_decoder_layer.1} parent=0 // pred_check
    _
  $region15: #{rztx_decoder_layer.1} parent=0 // pred_check_branch
    %30 = sbr.rel (0) target = $region17
  $region16: #{rztx_decoder_layer.1} parent=0 // pred_region
    _
  $region17: #{rztx_decoder_layer.1} parent=0 // pred_fallthru
    _
  // Predicated region
  $region18: #{rztx_decoder_layer.1} parent=0 // pred_check
    _
  $region19: #{rztx_decoder_layer.1} parent=0 // pred_check_branch
    %32 = sbr.rel (0) target = $region21
  $region20: #{rztx_decoder_layer.1} parent=0 // pred_region
    _
  $region21: #{rztx_decoder_layer.1} parent=0 // pred_fallthru
    _
  // Predicated region
  $region22: #{rztx_decoder_layer.1} parent=0 // pred_check
    _
  $region23: #{rztx_decoder_layer.1} parent=0 // pred_check_branch
    %34 = sbr.rel (0) target = $region25
  $region24: #{rztx_decoder_layer.1} parent=0 // pred_region
    _
  $region25: #{rztx_decoder_layer.1} parent=0 // pred_fallthru
    _
  // Predicated region
  $region26: #{rztx_decoder_layer.1} parent=0 // pred_check
    _
  $region27: #{rztx_decoder_layer.1} parent=0 // pred_check_branch
    %36 = sbr.rel (0) target = $region29
  $region28: #{rztx_decoder_layer.1} parent=0 // pred_region
    _
  $region29: #{rztx_decoder_layer.1} parent=0 // pred_fallthru
    _
  // Predicated region
  $region30: #{rztx_decoder_layer.1} parent=0 // pred_check
    _
  $region31: #{rztx_decoder_layer.1} parent=0 // pred_check_branch
    %38 = sbr.rel (0) target = $region33
  $region32: #{rztx_decoder_layer.1} parent=0 // pred_region
    _
  $region33: #{rztx_decoder_layer.1} parent=0 // pred_fallthru
    _
  // Predicated region
  $region34: #{rztx_decoder_layer.1} parent=0 // pred_check
    _
  $region35: #{rztx_decoder_layer.1} parent=0 // pred_check_branch
    %40 = sbr.rel (0) target = $region37
  $region36: #{rztx_decoder_layer.1} parent=0 // pred_region
    _
  $region37: #{rztx_decoder_layer.1} parent=0 // pred_fallthru
    _
  // Predicated region
  $region38: #{rztx_decoder_layer.1} parent=0 // pred_check
    _
  $region39: #{rztx_decoder_layer.1} parent=0 // pred_check_branch
    %42 = sbr.rel (0) target = $region41
  $region40: #{rztx_decoder_layer.1} parent=0 // pred_region
    _
  $region41: #{rztx_decoder_layer.1} parent=0 // pred_fallthru
    _
  // Predicated region
  $region42: #{rztx_decoder_layer.1} parent=0 // pred_check
    _
  $region43: #{rztx_decoder_layer.1} parent=0 // pred_check_branch
    %44 = sbr.rel (0) target = $region45
  $region44: #{rztx_decoder_layer.1} parent=0 // pred_region
    _
  $region45: #{rztx_decoder_layer.1} parent=0 // pred_fallthru
    _
  // Predicated region
  $region46: #{rztx_decoder_layer.1} parent=0 // pred_check
    _
  $region47: #{rztx_decoder_layer.1} parent=0 // pred_check_branch
    %46 = sbr.rel (0) target = $region49
  $region48: #{rztx_decoder_layer.1} parent=0 // pred_region
    _
  $region49: #{rztx_decoder_layer.1} parent=0 // pred_fallthru
    _
  // Predicated region
  $region50: #{rztx_decoder_layer.1} parent=0 // pred_check
    _
  $region51: #{rztx_decoder_layer.1} parent=0 // pred_check_branch
    %48 = sbr.rel (0) target = $region53
  $region52: #{rztx_decoder_layer.1} parent=0 // pred_region
    _
  $region53: #{rztx_decoder_layer.1} parent=0 // pred_fallthru
    _
  // Predicated region
  $region54: #{rztx_decoder_layer.1} parent=0 // pred_check
    _
  $region55: #{rztx_decoder_layer.1} parent=0 // pred_check_branch
    %50 = sbr.rel (0) target = $region57
  $region56: #{rztx_decoder_layer.1} parent=0 // pred_region
    _
  $region57: #{rztx_decoder_layer.1} parent=0 // pred_fallthru
    _
  // Predicated region
  $region58: #{rztx_decoder_layer.1} parent=0 // pred_check
    _
  $region59: #{rztx_decoder_layer.1} parent=0 // pred_check_branch
    %52 = sbr.rel (0) target = $region61
  $region60: #{rztx_decoder_layer.1} parent=0 // pred_region
    _
  $region61: #{rztx_decoder_layer.1} parent=0 // pred_fallthru
    _
  // Predicated region
  $region62: #{rztx_decoder_layer.1} parent=0 // pred_check
    _
  $region63: #{rztx_decoder_layer.1} parent=0 // pred_check_branch
    %54 = sbr.rel (0) target = $region65
  $region64: #{rztx_decoder_layer.1} parent=0 // pred_region
    _
  $region65: #{rztx_decoder_layer.1} parent=0 // pred_fallthru
    _
  // Predicated region
  $region66: #{rztx_decoder_layer.1} parent=0 // pred_check
    _
  $region67: #{rztx_decoder_layer.1} parent=0 // pred_check_branch
    %56 = sbr.rel (0) target = $region69
  $region68: #{rztx_decoder_layer.1} parent=0 // pred_region
    _
  $region69: #{rztx_decoder_layer.1} parent=0 // pred_fallthru
    _
  %s57 = sld [smem:[#allocation2]]
  %v58 = vld [vmem:[%s0] sm:$0xff]
  %v59 = vld [vmem:[%s0 + $0x8] sm:$0xff]
  %v60 = vld [vmem:[%s1] sm:$0xff]
  %v61 = vld [vmem:[%s1 + $0x8] sm:$0xff]
  %v62 = vld [vmem:[%s1 + $0x10] sm:$0xff]
  %v63 = vld [vmem:[%s1 + $0x18] sm:$0xff]
  %v64 = vld [vmem:[%s2] sm:$0xff]
  %v65 = vld [vmem:[%s2 + $0x8] sm:$0xff]
  %v66 = vld [vmem:[%s2 + $0x10] sm:$0xff]
  %v67 = vld [vmem:[%s2 + $0x18] sm:$0xff]
  %v68 = vld [vmem:[%s3] sm:$0x1]
  %v70 = vlaneseq
  %v71 = vshrl.u32 %v70, 7
  %v72 = vsub.s32 0, %v71
  %v73 = vrot.slane %v68, %v72
  %vm75 = vcmask 261120
  %v77 = vsel %vm75, %v58, 0
  %v80 = vsel %vm75, %v59, 0
  %82 = vmatprep.subr.mxu0 0.0
  %83 = vmatpush1.msra.mxu0 %v64
  %84 = vmatprep.subr.mxu0 0.0
  %85 = vmatpush1.msra.mxu0 %v65
  %86 = vmatprep.subr.mxu0 0.0
  %87 = vmatpush1.msra.mxu0 %v66
  %88 = vmatprep.subr.mxu0 0.0
  %89 = vmatpush1.msra.mxu0 %v67
  %90 = vmatprep.subr.mxu0 0.0
  %91 = vmatpush1.msra.mxu0 0.0
  %92 = vmatprep.subr.mxu0 0.0
  %93 = vmatpush1.msra.mxu0 0.0
  %94 = vmatprep.subr.mxu0 0.0
  %95 = vmatpush1.msra.mxu0 0.0
  %96 = vmatprep.subr.mxu0 0.0
  %97 = vmatpush1.msra.mxu0 0.0
  %98 = vmatprep.subr.mxu0 0.0
  %99 = vmatpush1.msra.mxu0 0.0
  %100 = vmatprep.subr.mxu0 0.0
  %101 = vmatpush1.msra.mxu0 0.0
  %102 = vmatprep.subr.mxu0 0.0
  %103 = vmatpush1.msra.mxu0 0.0
  %104 = vmatprep.subr.mxu0 0.0
  %105 = vmatpush1.msra.mxu0 0.0
  %106 = vmatprep.subr.mxu0 0.0
  %107 = vmatpush1.msra.mxu0 0.0
  %108 = vmatprep.subr.mxu0 0.0
  %109 = vmatpush1.msra.mxu0 0.0
  %110 = vmatprep.subr.mxu0 0.0
  %111 = vmatpush1.msra.mxu0 0.0
  %112 = vmatprep.subr.mxu0 0.0
  %113 = vmatpush1.msra.mxu0 0.0
  %114 = vmatprep.subr.mxu0 0.0
  %115 = vmatpush1.msra.mxu0 0.0
  %116 = vmatprep.subr.mxu0 0.0
  %117 = vmatpush1.msra.mxu0 0.0
  %118 = vmatprep.subr.mxu0 0.0
  %119 = vmatpush1.msra.mxu0 0.0
  %120 = vmatprep.subr.mxu0 0.0
  %121 = vmatpush1.msra.mxu0 0.0
  %122 = vmatprep.subr.mxu0 0.0
  %123 = vmatpush1.msra.mxu0 0.0
  %124 = vmatprep.subr.mxu0 0.0
  %125 = vmatpush1.msra.mxu0 0.0
  %126 = vmatprep.subr.mxu0 0.0
  %127 = vmatpush1.msra.mxu0 0.0
  %128 = vmatprep.subr.mxu0 0.0
  %129 = vmatpush1.msra.mxu0 0.0
  %130 = vmatprep.subr.mxu0 0.0
  %131 = vmatpush1.msra.mxu0 0.0
  %132 = vmatprep.subr.mxu0 0.0
  %133 = vmatpush1.msra.mxu0 0.0
  %134 = vmatprep.subr.mxu0 0.0
  %135 = vmatpush1.msra.mxu0 0.0
  %136 = vmatprep.subr.mxu0 0.0
  %137 = vmatpush1.msra.mxu0 0.0
  %138 = vmatprep.subr.mxu0 0.0
  %139 = vmatpush1.msra.mxu0 0.0
  %140 = vmatprep.subr.mxu0 0.0
  %141 = vmatpush1.msra.mxu0 0.0
  %142 = vmatprep.subr.mxu0 0.0
  %143 = vmatpush1.msra.mxu0 0.0
  %144 = vmatprep.subr.mxu0 0.0
  %145 = vmatpush1.msra.mxu0 0.0
  %146 = vmatprep.mubr.f32.mxu0 0.0
  %147 = vmatmul.mubr.f32.gmra.mrb[0].mxu0 %v77
  %v148 = vpop.f32.mrb[0].mxu0
  %v149 = vadd.f32 %v73, %v148
  %v150 = vpop.f32.mrb[0].mxu0
  %151 = vmatprep.mubr.f32.mxu0 0.0
  %152 = vmatmul.mubr.f32.gmra.mrb[0].mxu0 %v80
  %v153 = vpop.f32.mrb[0].mxu0
  %v154 = vadd.f32 %v73, %v153
  %v155 = vpop.f32.mrb[0].mxu0
  %156 = vdwg.mxu0
  %v157 = vmul.f32 %v149, 0.35355338
  %v158 = vmul.f32 %v154, 0.35355338
  %v159 = vld [vmem:[%s4] sm:$0xff]
  %v160 = vld [vmem:[%s4 + $0x8] sm:$0xff]
  %v161 = vld [vmem:[%s4 + $0x10] sm:$0xff]
  %v162 = vld [vmem:[%s4 + $0x18] sm:$0xff]
  %v163 = vld [vmem:[%s5] sm:$0x1]
  %165 = vrot.lane.b32.xlu0 %v149, 96
  %v166 = vpop.permute.xlu0 %165
  %vm167 = vcmask 64512
  %v169 = vsel %vm167, %v157, 0
  %v171 = vsel %vm167, %v166, 0
  %173 = vmatprep.subr.mxu0 0.0
  %174 = vmatpush1.xpose.msra.mxu0 %v171
  %175 = vmatprep.subr.mxu0 0.0
  %176 = vmatpush1.xpose.msra.mxu0 0.0
  %177 = vmatprep.subr.mxu0 0.0
  %178 = vmatpush1.xpose.msra.mxu0 0.0
  %179 = vmatprep.subr.mxu0 0.0
  %180 = vmatpush1.xpose.msra.mxu0 0.0
  %181 = vmatprep.subr.mxu0 0.0
  %182 = vmatpush1.xpose.msra.mxu0 0.0
  %183 = vmatprep.subr.mxu0 0.0
  %184 = vmatpush1.xpose.msra.mxu0 0.0
  %185 = vmatprep.subr.mxu0 0.0
  %186 = vmatpush1.xpose.msra.mxu0 0.0
  %187 = vmatprep.subr.mxu0 0.0
  %188 = vmatpush1.xpose.msra.mxu0 0.0
  %189 = vmatprep.subr.mxu0 0.0
  %190 = vmatpush1.xpose.msra.mxu0 0.0
  %191 = vmatprep.subr.mxu0 0.0
  %192 = vmatpush1.xpose.msra.mxu0 0.0
  %193 = vmatprep.subr.mxu0 0.0
  %194 = vmatpush1.xpose.msra.mxu0 0.0
  %195 = vmatprep.subr.mxu0 0.0
  %196 = vmatpush1.xpose.msra.mxu0 0.0
  %197 = vmatprep.subr.mxu0 0.0
  %198 = vmatpush1.xpose.msra.mxu0 0.0
  %199 = vmatprep.subr.mxu0 0.0
  %200 = vmatpush1.xpose.msra.mxu0 0.0
  %201 = vmatprep.subr.mxu0 0.0
  %202 = vmatpush1.xpose.msra.mxu0 0.0
  %203 = vmatprep.subr.mxu0 0.0
  %204 = vmatpush1.xpose.msra.mxu0 0.0
  %205 = vmatprep.subr.mxu0 0.0
  %206 = vmatpush1.xpose.msra.mxu0 0.0
  %207 = vmatprep.subr.mxu0 0.0
  %208 = vmatpush1.xpose.msra.mxu0 0.0
  %209 = vmatprep.subr.mxu0 0.0
  %210 = vmatpush1.xpose.msra.mxu0 0.0
  %211 = vmatprep.subr.mxu0 0.0
  %212 = vmatpush1.xpose.msra.mxu0 0.0
  %213 = vmatprep.subr.mxu0 0.0
  %214 = vmatpush1.xpose.msra.mxu0 0.0
  %215 = vmatprep.subr.mxu0 0.0
  %216 = vmatpush1.xpose.msra.mxu0 0.0
  %217 = vmatprep.subr.mxu0 0.0
  %218 = vmatpush1.xpose.msra.mxu0 0.0
  %219 = vmatprep.subr.mxu0 0.0
  %220 = vmatpush1.xpose.msra.mxu0 0.0
  %221 = vmatprep.subr.mxu0 0.0
  %222 = vmatpush1.xpose.msra.mxu0 0.0
  %223 = vmatprep.subr.mxu0 0.0
  %224 = vmatpush1.xpose.msra.mxu0 0.0
  %225 = vmatprep.subr.mxu0 0.0
  %226 = vmatpush1.xpose.msra.mxu0 0.0
  %227 = vmatprep.subr.mxu0 0.0
  %228 = vmatpush1.xpose.msra.mxu0 0.0
  %229 = vmatprep.subr.mxu0 0.0
  %230 = vmatpush1.xpose.msra.mxu0 0.0
  %231 = vmatprep.subr.mxu0 0.0
  %232 = vmatpush1.xpose.msra.mxu0 0.0
  %233 = vmatprep.subr.mxu0 0.0
  %234 = vmatpush1.xpose.msra.mxu0 0.0
  %235 = vmatprep.subr.mxu0 0.0
  %236 = vmatpush1.xpose.msra.mxu0 0.0
  %237 = vmatprep.mubr.f32.mxu0 0.0
  %238 = vmatmul.mubr.f32.gmra.mrb[0].mxu0 %v169
  %v239 = vpop.f32.mrb[0].mxu0
  %v240 = vadd.f32 0.0, %v239
  %v241 = vpop.f32.mrb[0].mxu0
  %242 = vdwg.mxu0
  %244 = vrot.lane.b32.xlu0 %v154, 96
  %v245 = vpop.permute.xlu0 %244
  %v247 = vsel %vm167, %v158, 0
  %v249 = vsel %vm167, %v245, 0
  %251 = vmatprep.subr.mxu0 0.0
  %252 = vmatpush1.xpose.msra.mxu0 %v249
  %253 = vmatprep.subr.mxu0 0.0
  %254 = vmatpush1.xpose.msra.mxu0 0.0
  %255 = vmatprep.subr.mxu0 0.0
  %256 = vmatpush1.xpose.msra.mxu0 0.0
  %257 = vmatprep.subr.mxu0 0.0
  %258 = vmatpush1.xpose.msra.mxu0 0.0
  %259 = vmatprep.subr.mxu0 0.0
  %260 = vmatpush1.xpose.msra.mxu0 0.0
  %261 = vmatprep.subr.mxu0 0.0
  %262 = vmatpush1.xpose.msra.mxu0 0.0
  %263 = vmatprep.subr.mxu0 0.0
  %264 = vmatpush1.xpose.msra.mxu0 0.0
  %265 = vmatprep.subr.mxu0 0.0
  %266 = vmatpush1.xpose.msra.mxu0 0.0
  %267 = vmatprep.subr.mxu0 0.0
  %268 = vmatpush1.xpose.msra.mxu0 0.0
  %269 = vmatprep.subr.mxu0 0.0
  %270 = vmatpush1.xpose.msra.mxu0 0.0
  %271 = vmatprep.subr.mxu0 0.0
  %272 = vmatpush1.xpose.msra.mxu0 0.0
  %273 = vmatprep.subr.mxu0 0.0
  %274 = vmatpush1.xpose.msra.mxu0 0.0
  %275 = vmatprep.subr.mxu0 0.0
  %276 = vmatpush1.xpose.msra.mxu0 0.0
  %277 = vmatprep.subr.mxu0 0.0
  %278 = vmatpush1.xpose.msra.mxu0 0.0
  %279 = vmatprep.subr.mxu0 0.0
  %280 = vmatpush1.xpose.msra.mxu0 0.0
  %281 = vmatprep.subr.mxu0 0.0
  %282 = vmatpush1.xpose.msra.mxu0 0.0
  %283 = vmatprep.subr.mxu0 0.0
  %284 = vmatpush1.xpose.msra.mxu0 0.0
  %285 = vmatprep.subr.mxu0 0.0
  %286 = vmatpush1.xpose.msra.mxu0 0.0
  %287 = vmatprep.subr.mxu0 0.0
  %288 = vmatpush1.xpose.msra.mxu0 0.0
  %289 = vmatprep.subr.mxu0 0.0
  %290 = vmatpush1.xpose.msra.mxu0 0.0
  %291 = vmatprep.subr.mxu0 0.0
  %292 = vmatpush1.xpose.msra.mxu0 0.0
  %293 = vmatprep.subr.mxu0 0.0
  %294 = vmatpush1.xpose.msra.mxu0 0.0
  %295 = vmatprep.subr.mxu0 0.0
  %296 = vmatpush1.xpose.msra.mxu0 0.0
  %297 = vmatprep.subr.mxu0 0.0
  %298 = vmatpush1.xpose.msra.mxu0 0.0
  %299 = vmatprep.subr.mxu0 0.0
  %300 = vmatpush1.xpose.msra.mxu0 0.0
  %301 = vmatprep.subr.mxu0 0.0
  %302 = vmatpush1.xpose.msra.mxu0 0.0
  %303 = vmatprep.subr.mxu0 0.0
  %304 = vmatpush1.xpose.msra.mxu0 0.0
  %305 = vmatprep.subr.mxu0 0.0
  %306 = vmatpush1.xpose.msra.mxu0 0.0
  %307 = vmatprep.subr.mxu0 0.0
  %308 = vmatpush1.xpose.msra.mxu0 0.0
  %309 = vmatprep.subr.mxu0 0.0
  %310 = vmatpush1.xpose.msra.mxu0 0.0
  %311 = vmatprep.subr.mxu0 0.0
  %312 = vmatpush1.xpose.msra.mxu0 0.0
  %313 = vmatprep.subr.mxu0 0.0
  %314 = vmatpush1.xpose.msra.mxu0 0.0
  %315 = vmatprep.mubr.f32.mxu0 0.0
  %316 = vmatmul.mubr.f32.gmra.mrb[0].mxu0 %v247
  %v317 = vpop.f32.mrb[0].mxu0
  %v318 = vadd.f32 0.0, %v317
  %v319 = vpop.f32.mrb[0].mxu0
  %320 = vdwg.mxu0
  %v321 = vsel %vm167, %v240, -inf
  %322 = vmax.xlane.f32.xlu0 %v321
  %v323 = vpop.xlane.xlu0 %322
  %v324 = vsel %vm167, %v318, -inf
  %325 = vmax.xlane.f32.xlu0 %v324
  %v326 = vpop.xlane.xlu0 %325
  %v327 = vsub.f32 %v240, %v323
  %v328 = vsub.f32 %v318, %v326
  %v329 = vmul.f32 %v327, 1.442695
  %v330 = vpow.pop %v329
  %v331 = vmul.f32 %v328, 1.442695
  %v332 = vpow.pop %v331
  %v333 = vsel %vm167, %v330, 0.0
  %334 = vadd.xlane.f32.xlu0 %v333
  %v335 = vpop.xlane.xlu0 %334
  %v336 = vsel %vm167, %v332, 0.0
  %337 = vadd.xlane.f32.xlu0 %v336
  %v338 = vpop.xlane.xlu0 %337
  %v339 = vrcp.pop %v335
  %v340 = vrcp.pop %v338
  %v341 = vmul.f32 %v330, %v339
  %v342 = vmul.f32 %v332, %v340
  %343 = vrot.lane.b32.xlu0 %v149, 64
  %v344 = vpop.permute.xlu0 %343
  %v347 = vsel %vm167, %v341, 0
  %349 = vmatprep.subr.mxu0 0.0
  %350 = vmatpush1.msra.mxu0 %v344
  %351 = vmatprep.subr.mxu0 0.0
  %352 = vmatpush1.msra.mxu0 0.0
  %353 = vmatprep.subr.mxu0 0.0
  %354 = vmatpush1.msra.mxu0 0.0
  %355 = vmatprep.subr.mxu0 0.0
  %356 = vmatpush1.msra.mxu0 0.0
  %357 = vmatprep.subr.mxu0 0.0
  %358 = vmatpush1.msra.mxu0 0.0
  %359 = vmatprep.subr.mxu0 0.0
  %360 = vmatpush1.msra.mxu0 0.0
  %361 = vmatprep.subr.mxu0 0.0
  %362 = vmatpush1.msra.mxu0 0.0
  %363 = vmatprep.subr.mxu0 0.0
  %364 = vmatpush1.msra.mxu0 0.0
  %365 = vmatprep.subr.mxu0 0.0
  %366 = vmatpush1.msra.mxu0 0.0
  %367 = vmatprep.subr.mxu0 0.0
  %368 = vmatpush1.msra.mxu0 0.0
  %369 = vmatprep.subr.mxu0 0.0
  %370 = vmatpush1.msra.mxu0 0.0
  %371 = vmatprep.subr.mxu0 0.0
  %372 = vmatpush1.msra.mxu0 0.0
  %373 = vmatprep.subr.mxu0 0.0
  %374 = vmatpush1.msra.mxu0 0.0
  %375 = vmatprep.subr.mxu0 0.0
  %376 = vmatpush1.msra.mxu0 0.0
  %377 = vmatprep.subr.mxu0 0.0
  %378 = vmatpush1.msra.mxu0 0.0
  %379 = vmatprep.subr.mxu0 0.0
  %380 = vmatpush1.msra.mxu0 0.0
  %381 = vmatprep.subr.mxu0 0.0
  %382 = vmatpush1.msra.mxu0 0.0
  %383 = vmatprep.subr.mxu0 0.0
  %384 = vmatpush1.msra.mxu0 0.0
  %385 = vmatprep.subr.mxu0 0.0
  %386 = vmatpush1.msra.mxu0 0.0
  %387 = vmatprep.subr.mxu0 0.0
  %388 = vmatpush1.msra.mxu0 0.0
  %389 = vmatprep.subr.mxu0 0.0
  %390 = vmatpush1.msra.mxu0 0.0
  %391 = vmatprep.subr.mxu0 0.0
  %392 = vmatpush1.msra.mxu0 0.0
  %393 = vmatprep.subr.mxu0 0.0
  %394 = vmatpush1.msra.mxu0 0.0
  %395 = vmatprep.subr.mxu0 0.0
  %396 = vmatpush1.msra.mxu0 0.0
  %397 = vmatprep.subr.mxu0 0.0
  %398 = vmatpush1.msra.mxu0 0.0
  %399 = vmatprep.subr.mxu0 0.0
  %400 = vmatpush1.msra.mxu0 0.0
  %401 = vmatprep.subr.mxu0 0.0
  %402 = vmatpush1.msra.mxu0 0.0
  %403 = vmatprep.subr.mxu0 0.0
  %404 = vmatpush1.msra.mxu0 0.0
  %405 = vmatprep.subr.mxu0 0.0
  %406 = vmatpush1.msra.mxu0 0.0
  %407 = vmatprep.subr.mxu0 0.0
  %408 = vmatpush1.msra.mxu0 0.0
  %409 = vmatprep.subr.mxu0 0.0
  %410 = vmatpush1.msra.mxu0 0.0
  %411 = vmatprep.subr.mxu0 0.0
  %412 = vmatpush1.msra.mxu0 0.0
  %413 = vmatprep.mubr.f32.mxu0 0.0
  %414 = vmatmul.mubr.f32.gmra.mrb[0].mxu0 %v347
  %v415 = vpop.f32.mrb[0].mxu0
  %v416 = vadd.f32 0.0, %v415
  %v417 = vpop.f32.mrb[0].mxu0
  %418 = vdwg.mxu0
  %419 = vrot.lane.b32.xlu0 %v154, 64
  %v420 = vpop.permute.xlu0 %419
  %v423 = vsel %vm167, %v342, 0
  %425 = vmatprep.subr.mxu0 0.0
  %426 = vmatpush1.msra.mxu0 %v420
  %427 = vmatprep.subr.mxu0 0.0
  %428 = vmatpush1.msra.mxu0 0.0
  %429 = vmatprep.subr.mxu0 0.0
  %430 = vmatpush1.msra.mxu0 0.0
  %431 = vmatprep.subr.mxu0 0.0
  %432 = vmatpush1.msra.mxu0 0.0
  %433 = vmatprep.subr.mxu0 0.0
  %434 = vmatpush1.msra.mxu0 0.0
  %435 = vmatprep.subr.mxu0 0.0
  %436 = vmatpush1.msra.mxu0 0.0
  %437 = vmatprep.subr.mxu0 0.0
  %438 = vmatpush1.msra.mxu0 0.0
  %439 = vmatprep.subr.mxu0 0.0
  %440 = vmatpush1.msra.mxu0 0.0
  %441 = vmatprep.subr.mxu0 0.0
  %442 = vmatpush1.msra.mxu0 0.0
  %443 = vmatprep.subr.mxu0 0.0
  %444 = vmatpush1.msra.mxu0 0.0
  %445 = vmatprep.subr.mxu0 0.0
  %446 = vmatpush1.msra.mxu0 0.0
  %447 = vmatprep.subr.mxu0 0.0
  %448 = vmatpush1.msra.mxu0 0.0
  %449 = vmatprep.subr.mxu0 0.0
  %450 = vmatpush1.msra.mxu0 0.0
  %451 = vmatprep.subr.mxu0 0.0
  %452 = vmatpush1.msra.mxu0 0.0
  %453 = vmatprep.subr.mxu0 0.0
  %454 = vmatpush1.msra.mxu0 0.0
  %455 = vmatprep.subr.mxu0 0.0
  %456 = vmatpush1.msra.mxu0 0.0
  %457 = vmatprep.subr.mxu0 0.0
  %458 = vmatpush1.msra.mxu0 0.0
  %459 = vmatprep.subr.mxu0 0.0
  %460 = vmatpush1.msra.mxu0 0.0
  %461 = vmatprep.subr.mxu0 0.0
  %462 = vmatpush1.msra.mxu0 0.0
  %463 = vmatprep.subr.mxu0 0.0
  %464 = vmatpush1.msra.mxu0 0.0
  %465 = vmatprep.subr.mxu0 0.0
  %466 = vmatpush1.msra.mxu0 0.0
  %467 = vmatprep.subr.mxu0 0.0
  %468 = vmatpush1.msra.mxu0 0.0
  %469 = vmatprep.subr.mxu0 0.0
  %470 = vmatpush1.msra.mxu0 0.0
  %471 = vmatprep.subr.mxu0 0.0
  %472 = vmatpush1.msra.mxu0 0.0
  %473 = vmatprep.subr.mxu0 0.0
  %474 = vmatpush1.msra.mxu0 0.0
  %475 = vmatprep.subr.mxu0 0.0
  %476 = vmatpush1.msra.mxu0 0.0
  %477 = vmatprep.subr.mxu0 0.0
  %478 = vmatpush1.msra.mxu0 0.0
  %479 = vmatprep.subr.mxu0 0.0
  %480 = vmatpush1.msra.mxu0 0.0
  %481 = vmatprep.subr.mxu0 0.0
  %482 = vmatpush1.msra.mxu0 0.0
  %483 = vmatprep.subr.mxu0 0.0
  %484 = vmatpush1.msra.mxu0 0.0
  %485 = vmatprep.subr.mxu0 0.0
  %486 = vmatpush1.msra.mxu0 0.0
  %487 = vmatprep.subr.mxu0 0.0
  %488 = vmatpush1.msra.mxu0 0.0
  %489 = vmatprep.mubr.f32.mxu0 0.0
  %490 = vmatmul.mubr.f32.gmra.mrb[0].mxu0 %v423
  %v491 = vpop.f32.mrb[0].mxu0
  %v492 = vadd.f32 0.0, %v491
  %v493 = vpop.f32.mrb[0].mxu0
  %494 = vdwg.mxu0
  %495 = vrot.lane.b32.xlu0 %v157, 120
  %v496 = vpop.permute.xlu0 %495
  %497 = vrot.lane.b32.xlu0 %v149, 88
  %v498 = vpop.permute.xlu0 %497
  %v499 = vsel %vm167, %v496, 0
  %v501 = vsel %vm167, %v498, 0
  %503 = vmatprep.subr.mxu0 0.0
  %504 = vmatpush1.xpose.msra.mxu0 %v501
  %505 = vmatprep.subr.mxu0 0.0
  %506 = vmatpush1.xpose.msra.mxu0 0.0
  %507 = vmatprep.subr.mxu0 0.0
  %508 = vmatpush1.xpose.msra.mxu0 0.0
  %509 = vmatprep.subr.mxu0 0.0
  %510 = vmatpush1.xpose.msra.mxu0 0.0
  %511 = vmatprep.subr.mxu0 0.0
  %512 = vmatpush1.xpose.msra.mxu0 0.0
  %513 = vmatprep.subr.mxu0 0.0
  %514 = vmatpush1.xpose.msra.mxu0 0.0
  %515 = vmatprep.subr.mxu0 0.0
  %516 = vmatpush1.xpose.msra.mxu0 0.0
  %517 = vmatprep.subr.mxu0 0.0
  %518 = vmatpush1.xpose.msra.mxu0 0.0
  %519 = vmatprep.subr.mxu0 0.0
  %520 = vmatpush1.xpose.msra.mxu0 0.0
  %521 = vmatprep.subr.mxu0 0.0
  %522 = vmatpush1.xpose.msra.mxu0 0.0
  %523 = vmatprep.subr.mxu0 0.0
  %524 = vmatpush1.xpose.msra.mxu0 0.0
  %525 = vmatprep.subr.mxu0 0.0
  %526 = vmatpush1.xpose.msra.mxu0 0.0
  %527 = vmatprep.subr.mxu0 0.0
  %528 = vmatpush1.xpose.msra.mxu0 0.0
  %529 = vmatprep.subr.mxu0 0.0
  %530 = vmatpush1.xpose.msra.mxu0 0.0
  %531 = vmatprep.subr.mxu0 0.0
  %532 = vmatpush1.xpose.msra.mxu0 0.0
  %533 = vmatprep.subr.mxu0 0.0
  %534 = vmatpush1.xpose.msra.mxu0 0.0
  %535 = vmatprep.subr.mxu0 0.0
  %536 = vmatpush1.xpose.msra.mxu0 0.0
  %537 = vmatprep.subr.mxu0 0.0
  %538 = vmatpush1.xpose.msra.mxu0 0.0
  %539 = vmatprep.subr.mxu0 0.0
  %540 = vmatpush1.xpose.msra.mxu0 0.0
  %541 = vmatprep.subr.mxu0 0.0
  %542 = vmatpush1.xpose.msra.mxu0 0.0
  %543 = vmatprep.subr.mxu0 0.0
  %544 = vmatpush1.xpose.msra.mxu0 0.0
  %545 = vmatprep.subr.mxu0 0.0
  %546 = vmatpush1.xpose.msra.mxu0 0.0
  %547 = vmatprep.subr.mxu0 0.0
  %548 = vmatpush1.xpose.msra.mxu0 0.0
  %549 = vmatprep.subr.mxu0 0.0
  %550 = vmatpush1.xpose.msra.mxu0 0.0
  %551 = vmatprep.subr.mxu0 0.0
  %552 = vmatpush1.xpose.msra.mxu0 0.0
  %553 = vmatprep.subr.mxu0 0.0
  %554 = vmatpush1.xpose.msra.mxu0 0.0
  %555 = vmatprep.subr.mxu0 0.0
  %556 = vmatpush1.xpose.msra.mxu0 0.0
  %557 = vmatprep.subr.mxu0 0.0
  %558 = vmatpush1.xpose.msra.mxu0 0.0
  %559 = vmatprep.subr.mxu0 0.0
  %560 = vmatpush1.xpose.msra.mxu0 0.0
  %561 = vmatprep.subr.mxu0 0.0
  %562 = vmatpush1.xpose.msra.mxu0 0.0
  %563 = vmatprep.subr.mxu0 0.0
  %564 = vmatpush1.xpose.msra.mxu0 0.0
  %565 = vmatprep.subr.mxu0 0.0
  %566 = vmatpush1.xpose.msra.mxu0 0.0
  %567 = vmatprep.mubr.f32.mxu0 0.0
  %568 = vmatmul.mubr.f32.gmra.mrb[0].mxu0 %v499
  %v569 = vpop.f32.mrb[0].mxu0
  %v570 = vadd.f32 0.0, %v569
  %v571 = vpop.f32.mrb[0].mxu0
  %572 = vdwg.mxu0
  %573 = vrot.lane.b32.xlu0 %v158, 120
  %v574 = vpop.permute.xlu0 %573
  %575 = vrot.lane.b32.xlu0 %v154, 88
  %v576 = vpop.permute.xlu0 %575
  %v577 = vsel %vm167, %v574, 0
  %v579 = vsel %vm167, %v576, 0
  %581 = vmatprep.subr.mxu0 0.0
  %582 = vmatpush1.xpose.msra.mxu0 %v579
  %583 = vmatprep.subr.mxu0 0.0
  %584 = vmatpush1.xpose.msra.mxu0 0.0
  %585 = vmatprep.subr.mxu0 0.0
  %586 = vmatpush1.xpose.msra.mxu0 0.0
  %587 = vmatprep.subr.mxu0 0.0
  %588 = vmatpush1.xpose.msra.mxu0 0.0
  %589 = vmatprep.subr.mxu0 0.0
  %590 = vmatpush1.xpose.msra.mxu0 0.0
  %591 = vmatprep.subr.mxu0 0.0
  %592 = vmatpush1.xpose.msra.mxu0 0.0
  %593 = vmatprep.subr.mxu0 0.0
  %594 = vmatpush1.xpose.msra.mxu0 0.0
  %595 = vmatprep.subr.mxu0 0.0
  %596 = vmatpush1.xpose.msra.mxu0 0.0
  %597 = vmatprep.subr.mxu0 0.0
  %598 = vmatpush1.xpose.msra.mxu0 0.0
  %599 = vmatprep.subr.mxu0 0.0
  %600 = vmatpush1.xpose.msra.mxu0 0.0
  %601 = vmatprep.subr.mxu0 0.0
  %602 = vmatpush1.xpose.msra.mxu0 0.0
  %603 = vmatprep.subr.mxu0 0.0
  %604 = vmatpush1.xpose.msra.mxu0 0.0
  %605 = vmatprep.subr.mxu0 0.0
  %606 = vmatpush1.xpose.msra.mxu0 0.0
  %607 = vmatprep.subr.mxu0 0.0
  %608 = vmatpush1.xpose.msra.mxu0 0.0
  %609 = vmatprep.subr.mxu0 0.0
  %610 = vmatpush1.xpose.msra.mxu0 0.0
  %611 = vmatprep.subr.mxu0 0.0
  %612 = vmatpush1.xpose.msra.mxu0 0.0
  %613 = vmatprep.subr.mxu0 0.0
  %614 = vmatpush1.xpose.msra.mxu0 0.0
  %615 = vmatprep.subr.mxu0 0.0
  %616 = vmatpush1.xpose.msra.mxu0 0.0
  %617 = vmatprep.subr.mxu0 0.0
  %618 = vmatpush1.xpose.msra.mxu0 0.0
  %619 = vmatprep.subr.mxu0 0.0
  %620 = vmatpush1.xpose.msra.mxu0 0.0
  %621 = vmatprep.subr.mxu0 0.0
  %622 = vmatpush1.xpose.msra.mxu0 0.0
  %623 = vmatprep.subr.mxu0 0.0
  %624 = vmatpush1.xpose.msra.mxu0 0.0
  %625 = vmatprep.subr.mxu0 0.0
  %626 = vmatpush1.xpose.msra.mxu0 0.0
  %627 = vmatprep.subr.mxu0 0.0
  %628 = vmatpush1.xpose.msra.mxu0 0.0
  %629 = vmatprep.subr.mxu0 0.0
  %630 = vmatpush1.xpose.msra.mxu0 0.0
  %631 = vmatprep.subr.mxu0 0.0
  %632 = vmatpush1.xpose.msra.mxu0 0.0
  %633 = vmatprep.subr.mxu0 0.0
  %634 = vmatpush1.xpose.msra.mxu0 0.0
  %635 = vmatprep.subr.mxu0 0.0
  %636 = vmatpush1.xpose.msra.mxu0 0.0
  %637 = vmatprep.subr.mxu0 0.0
  %638 = vmatpush1.xpose.msra.mxu0 0.0
  %639 = vmatprep.subr.mxu0 0.0
  %640 = vmatpush1.xpose.msra.mxu0 0.0
  %641 = vmatprep.subr.mxu0 0.0
  %642 = vmatpush1.xpose.msra.mxu0 0.0
  %643 = vmatprep.subr.mxu0 0.0
  %644 = vmatpush1.xpose.msra.mxu0 0.0
  %645 = vmatprep.mubr.f32.mxu0 0.0
  %646 = vmatmul.mubr.f32.gmra.mrb[0].mxu0 %v577
  %v647 = vpop.f32.mrb[0].mxu0
  %v648 = vadd.f32 0.0, %v647
  %v649 = vpop.f32.mrb[0].mxu0
  %650 = vdwg.mxu0
  %v651 = vsel %vm167, %v570, -inf
  %652 = vmax.xlane.f32.xlu0 %v651
  %v653 = vpop.xlane.xlu0 %652
  %v654 = vsel %vm167, %v648, -inf
  %655 = vmax.xlane.f32.xlu0 %v654
  %v656 = vpop.xlane.xlu0 %655
  %v657 = vsub.f32 %v570, %v653
  %v658 = vsub.f32 %v648, %v656
  %v659 = vmul.f32 %v657, 1.442695
  %v660 = vpow.pop %v659
  %v661 = vmul.f32 %v658, 1.442695
  %v662 = vpow.pop %v661
  %v663 = vsel %vm167, %v660, 0.0
  %664 = vadd.xlane.f32.xlu0 %v663
  %v665 = vpop.xlane.xlu0 %664
  %v666 = vsel %vm167, %v662, 0.0
  %667 = vadd.xlane.f32.xlu0 %v666
  %v668 = vpop.xlane.xlu0 %667
  %v669 = vrcp.pop %v665
  %v670 = vrcp.pop %v668
  %v671 = vmul.f32 %v660, %v669
  %v672 = vmul.f32 %v662, %v670
  %673 = vrot.lane.b32.xlu0 %v149, 56
  %v674 = vpop.permute.xlu0 %673
  %v677 = vsel %vm167, %v671, 0
  %679 = vmatprep.subr.mxu0 0.0
  %680 = vmatpush1.msra.mxu0 %v674
  %681 = vmatprep.subr.mxu0 0.0
  %682 = vmatpush1.msra.mxu0 0.0
  %683 = vmatprep.subr.mxu0 0.0
  %684 = vmatpush1.msra.mxu0 0.0
  %685 = vmatprep.subr.mxu0 0.0
  %686 = vmatpush1.msra.mxu0 0.0
  %687 = vmatprep.subr.mxu0 0.0
  %688 = vmatpush1.msra.mxu0 0.0
  %689 = vmatprep.subr.mxu0 0.0
  %690 = vmatpush1.msra.mxu0 0.0
  %691 = vmatprep.subr.mxu0 0.0
  %692 = vmatpush1.msra.mxu0 0.0
  %693 = vmatprep.subr.mxu0 0.0
  %694 = vmatpush1.msra.mxu0 0.0
  %695 = vmatprep.subr.mxu0 0.0
  %696 = vmatpush1.msra.mxu0 0.0
  %697 = vmatprep.subr.mxu0 0.0
  %698 = vmatpush1.msra.mxu0 0.0
  %699 = vmatprep.subr.mxu0 0.0
  %700 = vmatpush1.msra.mxu0 0.0
  %701 = vmatprep.subr.mxu0 0.0
  %702 = vmatpush1.msra.mxu0 0.0
  %703 = vmatprep.subr.mxu0 0.0
  %704 = vmatpush1.msra.mxu0 0.0
  %705 = vmatprep.subr.mxu0 0.0
  %706 = vmatpush1.msra.mxu0 0.0
  %707 = vmatprep.subr.mxu0 0.0
  %708 = vmatpush1.msra.mxu0 0.0
  %709 = vmatprep.subr.mxu0 0.0
  %710 = vmatpush1.msra.mxu0 0.0
  %711 = vmatprep.subr.mxu0 0.0
  %712 = vmatpush1.msra.mxu0 0.0
  %713 = vmatprep.subr.mxu0 0.0
  %714 = vmatpush1.msra.mxu0 0.0
  %715 = vmatprep.subr.mxu0 0.0
  %716 = vmatpush1.msra.mxu0 0.0
  %717 = vmatprep.subr.mxu0 0.0
  %718 = vmatpush1.msra.mxu0 0.0
  %719 = vmatprep.subr.mxu0 0.0
  %720 = vmatpush1.msra.mxu0 0.0
  %721 = vmatprep.subr.mxu0 0.0
  %722 = vmatpush1.msra.mxu0 0.0
  %723 = vmatprep.subr.mxu0 0.0
  %724 = vmatpush1.msra.mxu0 0.0
  %725 = vmatprep.subr.mxu0 0.0
  %726 = vmatpush1.msra.mxu0 0.0
  %727 = vmatprep.subr.mxu0 0.0
  %728 = vmatpush1.msra.mxu0 0.0
  %729 = vmatprep.subr.mxu0 0.0
  %730 = vmatpush1.msra.mxu0 0.0
  %731 = vmatprep.subr.mxu0 0.0
  %732 = vmatpush1.msra.mxu0 0.0
  %733 = vmatprep.subr.mxu0 0.0
  %734 = vmatpush1.msra.mxu0 0.0
  %735 = vmatprep.subr.mxu0 0.0
  %736 = vmatpush1.msra.mxu0 0.0
  %737 = vmatprep.subr.mxu0 0.0
  %738 = vmatpush1.msra.mxu0 0.0
  %739 = vmatprep.subr.mxu0 0.0
  %740 = vmatpush1.msra.mxu0 0.0
  %741 = vmatprep.subr.mxu0 0.0
  %742 = vmatpush1.msra.mxu0 0.0
  %743 = vmatprep.mubr.f32.mxu0 0.0
  %744 = vmatmul.mubr.f32.gmra.mrb[0].mxu0 %v677
  %v745 = vpop.f32.mrb[0].mxu0
  %v746 = vadd.f32 0.0, %v745
  %v747 = vpop.f32.mrb[0].mxu0
  %748 = vdwg.mxu0
  %749 = vrot.lane.b32.xlu0 %v154, 56
  %v750 = vpop.permute.xlu0 %749
  %v753 = vsel %vm167, %v672, 0
  %755 = vmatprep.subr.mxu0 0.0
  %756 = vmatpush1.msra.mxu0 %v750
  %757 = vmatprep.subr.mxu0 0.0
  %758 = vmatpush1.msra.mxu0 0.0
  %759 = vmatprep.subr.mxu0 0.0
  %760 = vmatpush1.msra.mxu0 0.0
  %761 = vmatprep.subr.mxu0 0.0
  %762 = vmatpush1.msra.mxu0 0.0
  %763 = vmatprep.subr.mxu0 0.0
  %764 = vmatpush1.msra.mxu0 0.0
  %765 = vmatprep.subr.mxu0 0.0
  %766 = vmatpush1.msra.mxu0 0.0
  %767 = vmatprep.subr.mxu0 0.0
  %768 = vmatpush1.msra.mxu0 0.0
  %769 = vmatprep.subr.mxu0 0.0
  %770 = vmatpush1.msra.mxu0 0.0
  %771 = vmatprep.subr.mxu0 0.0
  %772 = vmatpush1.msra.mxu0 0.0
  %773 = vmatprep.subr.mxu0 0.0
  %774 = vmatpush1.msra.mxu0 0.0
  %775 = vmatprep.subr.mxu0 0.0
  %776 = vmatpush1.msra.mxu0 0.0
  %777 = vmatprep.subr.mxu0 0.0
  %778 = vmatpush1.msra.mxu0 0.0
  %779 = vmatprep.subr.mxu0 0.0
  %780 = vmatpush1.msra.mxu0 0.0
  %781 = vmatprep.subr.mxu0 0.0
  %782 = vmatpush1.msra.mxu0 0.0
  %783 = vmatprep.subr.mxu0 0.0
  %784 = vmatpush1.msra.mxu0 0.0
  %785 = vmatprep.subr.mxu0 0.0
  %786 = vmatpush1.msra.mxu0 0.0
  %787 = vmatprep.subr.mxu0 0.0
  %788 = vmatpush1.msra.mxu0 0.0
  %789 = vmatprep.subr.mxu0 0.0
  %790 = vmatpush1.msra.mxu0 0.0
  %791 = vmatprep.subr.mxu0 0.0
  %792 = vmatpush1.msra.mxu0 0.0
  %793 = vmatprep.subr.mxu0 0.0
  %794 = vmatpush1.msra.mxu0 0.0
  %795 = vmatprep.subr.mxu0 0.0
  %796 = vmatpush1.msra.mxu0 0.0
  %797 = vmatprep.subr.mxu0 0.0
  %798 = vmatpush1.msra.mxu0 0.0
  %799 = vmatprep.subr.mxu0 0.0
  %800 = vmatpush1.msra.mxu0 0.0
  %801 = vmatprep.subr.mxu0 0.0
  %802 = vmatpush1.msra.mxu0 0.0
  %803 = vmatprep.subr.mxu0 0.0
  %804 = vmatpush1.msra.mxu0 0.0
  %805 = vmatprep.subr.mxu0 0.0
  %806 = vmatpush1.msra.mxu0 0.0
  %807 = vmatprep.subr.mxu0 0.0
  %808 = vmatpush1.msra.mxu0 0.0
  %809 = vmatprep.subr.mxu0 0.0
  %810 = vmatpush1.msra.mxu0 0.0
  %811 = vmatprep.subr.mxu0 0.0
  %812 = vmatpush1.msra.mxu0 0.0
  %813 = vmatprep.subr.mxu0 0.0
  %814 = vmatpush1.msra.mxu0 0.0
  %815 = vmatprep.subr.mxu0 0.0
  %816 = vmatpush1.msra.mxu0 0.0
  %817 = vmatprep.subr.mxu0 0.0
  %818 = vmatpush1.msra.mxu0 0.0
  %819 = vmatprep.mubr.f32.mxu0 0.0
  %820 = vmatmul.mubr.f32.gmra.mrb[0].mxu0 %v753
  %v821 = vpop.f32.mrb[0].mxu0
  %v822 = vadd.f32 0.0, %v821
  %v823 = vpop.f32.mrb[0].mxu0
  %824 = vdwg.mxu0
  %825 = vrot.lane.b32.xlu0 %v157, 112
  %v826 = vpop.permute.xlu0 %825
  %827 = vrot.lane.b32.xlu0 %v149, 80
  %v828 = vpop.permute.xlu0 %827
  %v829 = vsel %vm167, %v826, 0
  %v831 = vsel %vm167, %v828, 0
  %833 = vmatprep.subr.mxu0 0.0
  %834 = vmatpush1.xpose.msra.mxu0 %v831
  %835 = vmatprep.subr.mxu0 0.0
  %836 = vmatpush1.xpose.msra.mxu0 0.0
  %837 = vmatprep.subr.mxu0 0.0
  %838 = vmatpush1.xpose.msra.mxu0 0.0
  %839 = vmatprep.subr.mxu0 0.0
  %840 = vmatpush1.xpose.msra.mxu0 0.0
  %841 = vmatprep.subr.mxu0 0.0
  %842 = vmatpush1.xpose.msra.mxu0 0.0
  %843 = vmatprep.subr.mxu0 0.0
  %844 = vmatpush1.xpose.msra.mxu0 0.0
  %845 = vmatprep.subr.mxu0 0.0
  %846 = vmatpush1.xpose.msra.mxu0 0.0
  %847 = vmatprep.subr.mxu0 0.0
  %848 = vmatpush1.xpose.msra.mxu0 0.0
  %849 = vmatprep.subr.mxu0 0.0
  %850 = vmatpush1.xpose.msra.mxu0 0.0
  %851 = vmatprep.subr.mxu0 0.0
  %852 = vmatpush1.xpose.msra.mxu0 0.0
  %853 = vmatprep.subr.mxu0 0.0
  %854 = vmatpush1.xpose.msra.mxu0 0.0
  %855 = vmatprep.subr.mxu0 0.0
  %856 = vmatpush1.xpose.msra.mxu0 0.0
  %857 = vmatprep.subr.mxu0 0.0
  %858 = vmatpush1.xpose.msra.mxu0 0.0
  %859 = vmatprep.subr.mxu0 0.0
  %860 = vmatpush1.xpose.msra.mxu0 0.0
  %861 = vmatprep.subr.mxu0 0.0
  %862 = vmatpush1.xpose.msra.mxu0 0.0
  %863 = vmatprep.subr.mxu0 0.0
  %864 = vmatpush1.xpose.msra.mxu0 0.0
  %865 = vmatprep.subr.mxu0 0.0
  %866 = vmatpush1.xpose.msra.mxu0 0.0
  %867 = vmatprep.subr.mxu0 0.0
  %868 = vmatpush1.xpose.msra.mxu0 0.0
  %869 = vmatprep.subr.mxu0 0.0
  %870 = vmatpush1.xpose.msra.mxu0 0.0
  %871 = vmatprep.subr.mxu0 0.0
  %872 = vmatpush1.xpose.msra.mxu0 0.0
  %873 = vmatprep.subr.mxu0 0.0
  %874 = vmatpush1.xpose.msra.mxu0 0.0
  %875 = vmatprep.subr.mxu0 0.0
  %876 = vmatpush1.xpose.msra.mxu0 0.0
  %877 = vmatprep.subr.mxu0 0.0
  %878 = vmatpush1.xpose.msra.mxu0 0.0
  %879 = vmatprep.subr.mxu0 0.0
  %880 = vmatpush1.xpose.msra.mxu0 0.0
  %881 = vmatprep.subr.mxu0 0.0
  %882 = vmatpush1.xpose.msra.mxu0 0.0
  %883 = vmatprep.subr.mxu0 0.0
  %884 = vmatpush1.xpose.msra.mxu0 0.0
  %885 = vmatprep.subr.mxu0 0.0
  %886 = vmatpush1.xpose.msra.mxu0 0.0
  %887 = vmatprep.subr.mxu0 0.0
  %888 = vmatpush1.xpose.msra.mxu0 0.0
  %889 = vmatprep.subr.mxu0 0.0
  %890 = vmatpush1.xpose.msra.mxu0 0.0
  %891 = vmatprep.subr.mxu0 0.0
  %892 = vmatpush1.xpose.msra.mxu0 0.0
  %893 = vmatprep.subr.mxu0 0.0
  %894 = vmatpush1.xpose.msra.mxu0 0.0
  %895 = vmatprep.subr.mxu0 0.0
  %896 = vmatpush1.xpose.msra.mxu0 0.0
  %897 = vmatprep.mubr.f32.mxu0 0.0
  %898 = vmatmul.mubr.f32.gmra.mrb[0].mxu0 %v829
  %v899 = vpop.f32.mrb[0].mxu0
  %v900 = vadd.f32 0.0, %v899
  %v901 = vpop.f32.mrb[0].mxu0
  %902 = vdwg.mxu0
  %903 = vrot.lane.b32.xlu0 %v158, 112
  %v904 = vpop.permute.xlu0 %903
  %905 = vrot.lane.b32.xlu0 %v154, 80
  %v906 = vpop.permute.xlu0 %905
  %v907 = vsel %vm167, %v904, 0
  %v909 = vsel %vm167, %v906, 0
  %911 = vmatprep.subr.mxu0 0.0
  %912 = vmatpush1.xpose.msra.mxu0 %v909
  %913 = vmatprep.subr.mxu0 0.0
  %914 = vmatpush1.xpose.msra.mxu0 0.0
  %915 = vmatprep.subr.mxu0 0.0
  %916 = vmatpush1.xpose.msra.mxu0 0.0
  %917 = vmatprep.subr.mxu0 0.0
  %918 = vmatpush1.xpose.msra.mxu0 0.0
  %919 = vmatprep.subr.mxu0 0.0
  %920 = vmatpush1.xpose.msra.mxu0 0.0
  %921 = vmatprep.subr.mxu0 0.0
  %922 = vmatpush1.xpose.msra.mxu0 0.0
  %923 = vmatprep.subr.mxu0 0.0
  %924 = vmatpush1.xpose.msra.mxu0 0.0
  %925 = vmatprep.subr.mxu0 0.0
  %926 = vmatpush1.xpose.msra.mxu0 0.0
  %927 = vmatprep.subr.mxu0 0.0
  %928 = vmatpush1.xpose.msra.mxu0 0.0
  %929 = vmatprep.subr.mxu0 0.0
  %930 = vmatpush1.xpose.msra.mxu0 0.0
  %931 = vmatprep.subr.mxu0 0.0
  %932 = vmatpush1.xpose.msra.mxu0 0.0
  %933 = vmatprep.subr.mxu0 0.0
  %934 = vmatpush1.xpose.msra.mxu0 0.0
  %935 = vmatprep.subr.mxu0 0.0
  %936 = vmatpush1.xpose.msra.mxu0 0.0
  %937 = vmatprep.subr.mxu0 0.0
  %938 = vmatpush1.xpose.msra.mxu0 0.0
  %939 = vmatprep.subr.mxu0 0.0
  %940 = vmatpush1.xpose.msra.mxu0 0.0
  %941 = vmatprep.subr.mxu0 0.0
  %942 = vmatpush1.xpose.msra.mxu0 0.0
  %943 = vmatprep.subr.mxu0 0.0
  %944 = vmatpush1.xpose.msra.mxu0 0.0
  %945 = vmatprep.subr.mxu0 0.0
  %946 = vmatpush1.xpose.msra.mxu0 0.0
  %947 = vmatprep.subr.mxu0 0.0
  %948 = vmatpush1.xpose.msra.mxu0 0.0
  %949 = vmatprep.subr.mxu0 0.0
  %950 = vmatpush1.xpose.msra.mxu0 0.0
  %951 = vmatprep.subr.mxu0 0.0
  %952 = vmatpush1.xpose.msra.mxu0 0.0
  %953 = vmatprep.subr.mxu0 0.0
  %954 = vmatpush1.xpose.msra.mxu0 0.0
  %955 = vmatprep.subr.mxu0 0.0
  %956 = vmatpush1.xpose.msra.mxu0 0.0
  %957 = vmatprep.subr.mxu0 0.0
  %958 = vmatpush1.xpose.msra.mxu0 0.0
  %959 = vmatprep.subr.mxu0 0.0
  %960 = vmatpush1.xpose.msra.mxu0 0.0
  %961 = vmatprep.subr.mxu0 0.0
  %962 = vmatpush1.xpose.msra.mxu0 0.0
  %963 = vmatprep.subr.mxu0 0.0
  %964 = vmatpush1.xpose.msra.mxu0 0.0
  %965 = vmatprep.subr.mxu0 0.0
  %966 = vmatpush1.xpose.msra.mxu0 0.0
  %967 = vmatprep.subr.mxu0 0.0
  %968 = vmatpush1.xpose.msra.mxu0 0.0
  %969 = vmatprep.subr.mxu0 0.0
  %970 = vmatpush1.xpose.msra.mxu0 0.0
  %971 = vmatprep.subr.mxu0 0.0
  %972 = vmatpush1.xpose.msra.mxu0 0.0
  %973 = vmatprep.subr.mxu0 0.0
  %974 = vmatpush1.xpose.msra.mxu0 0.0
  %975 = vmatprep.mubr.f32.mxu0 0.0
  %976 = vmatmul.mubr.f32.gmra.mrb[0].mxu0 %v907
  %v977 = vpop.f32.mrb[0].mxu0
  %v978 = vadd.f32 0.0, %v977
  %v979 = vpop.f32.mrb[0].mxu0
  %980 = vdwg.mxu0
  %v981 = vsel %vm167, %v900, -inf
  %982 = vmax.xlane.f32.xlu0 %v981
  %v983 = vpop.xlane.xlu0 %982
  %v984 = vsel %vm167, %v978, -inf
  %985 = vmax.xlane.f32.xlu0 %v984
  %v986 = vpop.xlane.xlu0 %985
  %v987 = vsub.f32 %v900, %v983
  %v988 = vsub.f32 %v978, %v986
  %v989 = vmul.f32 %v987, 1.442695
  %v990 = vpow.pop %v989
  %v991 = vmul.f32 %v988, 1.442695
  %v992 = vpow.pop %v991
  %v993 = vsel %vm167, %v990, 0.0
  %994 = vadd.xlane.f32.xlu0 %v993
  %v995 = vpop.xlane.xlu0 %994
  %v996 = vsel %vm167, %v992, 0.0
  %997 = vadd.xlane.f32.xlu0 %v996
  %v998 = vpop.xlane.xlu0 %997
  %v999 = vrcp.pop %v995
  %v1000 = vrcp.pop %v998
  %v1001 = vmul.f32 %v990, %v999
  %v1002 = vmul.f32 %v992, %v1000
  %1003 = vrot.lane.b32.xlu0 %v149, 48
  %v1004 = vpop.permute.xlu0 %1003
  %v1007 = vsel %vm167, %v1001, 0
  %1009 = vmatprep.subr.mxu0 0.0
  %1010 = vmatpush1.msra.mxu0 %v1004
  %1011 = vmatprep.subr.mxu0 0.0
  %1012 = vmatpush1.msra.mxu0 0.0
  %1013 = vmatprep.subr.mxu0 0.0
  %1014 = vmatpush1.msra.mxu0 0.0
  %1015 = vmatprep.subr.mxu0 0.0
  %1016 = vmatpush1.msra.mxu0 0.0
  %1017 = vmatprep.subr.mxu0 0.0
  %1018 = vmatpush1.msra.mxu0 0.0
  %1019 = vmatprep.subr.mxu0 0.0
  %1020 = vmatpush1.msra.mxu0 0.0
  %1021 = vmatprep.subr.mxu0 0.0
  %1022 = vmatpush1.msra.mxu0 0.0
  %1023 = vmatprep.subr.mxu0 0.0
  %1024 = vmatpush1.msra.mxu0 0.0
  %1025 = vmatprep.subr.mxu0 0.0
  %1026 = vmatpush1.msra.mxu0 0.0
  %1027 = vmatprep.subr.mxu0 0.0
  %1028 = vmatpush1.msra.mxu0 0.0
  %1029 = vmatprep.subr.mxu0 0.0
  %1030 = vmatpush1.msra.mxu0 0.0
  %1031 = vmatprep.subr.mxu0 0.0
  %1032 = vmatpush1.msra.mxu0 0.0
  %1033 = vmatprep.subr.mxu0 0.0
  %1034 = vmatpush1.msra.mxu0 0.0
  %1035 = vmatprep.subr.mxu0 0.0
  %1036 = vmatpush1.msra.mxu0 0.0
  %1037 = vmatprep.subr.mxu0 0.0
  %1038 = vmatpush1.msra.mxu0 0.0
  %1039 = vmatprep.subr.mxu0 0.0
  %1040 = vmatpush1.msra.mxu0 0.0
  %1041 = vmatprep.subr.mxu0 0.0
  %1042 = vmatpush1.msra.mxu0 0.0
  %1043 = vmatprep.subr.mxu0 0.0
  %1044 = vmatpush1.msra.mxu0 0.0
  %1045 = vmatprep.subr.mxu0 0.0
  %1046 = vmatpush1.msra.mxu0 0.0
  %1047 = vmatprep.subr.mxu0 0.0
  %1048 = vmatpush1.msra.mxu0 0.0
  %1049 = vmatprep.subr.mxu0 0.0
  %1050 = vmatpush1.msra.mxu0 0.0
  %1051 = vmatprep.subr.mxu0 0.0
  %1052 = vmatpush1.msra.mxu0 0.0
  %1053 = vmatprep.subr.mxu0 0.0
  %1054 = vmatpush1.msra.mxu0 0.0
  %1055 = vmatprep.subr.mxu0 0.0
  %1056 = vmatpush1.msra.mxu0 0.0
  %1057 = vmatprep.subr.mxu0 0.0
  %1058 = vmatpush1.msra.mxu0 0.0
  %1059 = vmatprep.subr.mxu0 0.0
  %1060 = vmatpush1.msra.mxu0 0.0
  %1061 = vmatprep.subr.mxu0 0.0
  %1062 = vmatpush1.msra.mxu0 0.0
  %1063 = vmatprep.subr.mxu0 0.0
  %1064 = vmatpush1.msra.mxu0 0.0
  %1065 = vmatprep.subr.mxu0 0.0
  %1066 = vmatpush1.msra.mxu0 0.0
  %1067 = vmatprep.subr.mxu0 0.0
  %1068 = vmatpush1.msra.mxu0 0.0
  %1069 = vmatprep.subr.mxu0 0.0
  %1070 = vmatpush1.msra.mxu0 0.0
  %1071 = vmatprep.subr.mxu0 0.0
  %1072 = vmatpush1.msra.mxu0 0.0
  %1073 = vmatprep.mubr.f32.mxu0 0.0
  %1074 = vmatmul.mubr.f32.gmra.mrb[0].mxu0 %v1007
  %v1075 = vpop.f32.mrb[0].mxu0
  %v1076 = vadd.f32 0.0, %v1075
  %v1077 = vpop.f32.mrb[0].mxu0
  %1078 = vdwg.mxu0
  %1079 = vrot.lane.b32.xlu0 %v154, 48
  %v1080 = vpop.permute.xlu0 %1079
  %v1083 = vsel %vm167, %v1002, 0
  %1085 = vmatprep.subr.mxu0 0.0
  %1086 = vmatpush1.msra.mxu0 %v1080
  %1087 = vmatprep.subr.mxu0 0.0
  %1088 = vmatpush1.msra.mxu0 0.0
  %1089 = vmatprep.subr.mxu0 0.0
  %1090 = vmatpush1.msra.mxu0 0.0
  %1091 = vmatprep.subr.mxu0 0.0
  %1092 = vmatpush1.msra.mxu0 0.0
  %1093 = vmatprep.subr.mxu0 0.0
  %1094 = vmatpush1.msra.mxu0 0.0
  %1095 = vmatprep.subr.mxu0 0.0
  %1096 = vmatpush1.msra.mxu0 0.0
  %1097 = vmatprep.subr.mxu0 0.0
  %1098 = vmatpush1.msra.mxu0 0.0
  %1099 = vmatprep.subr.mxu0 0.0
  %1100 = vmatpush1.msra.mxu0 0.0
  %1101 = vmatprep.subr.mxu0 0.0
  %1102 = vmatpush1.msra.mxu0 0.0
  %1103 = vmatprep.subr.mxu0 0.0
  %1104 = vmatpush1.msra.mxu0 0.0
  %1105 = vmatprep.subr.mxu0 0.0
  %1106 = vmatpush1.msra.mxu0 0.0
  %1107 = vmatprep.subr.mxu0 0.0
  %1108 = vmatpush1.msra.mxu0 0.0
  %1109 = vmatprep.subr.mxu0 0.0
  %1110 = vmatpush1.msra.mxu0 0.0
  %1111 = vmatprep.subr.mxu0 0.0
  %1112 = vmatpush1.msra.mxu0 0.0
  %1113 = vmatprep.subr.mxu0 0.0
  %1114 = vmatpush1.msra.mxu0 0.0
  %1115 = vmatprep.subr.mxu0 0.0
  %1116 = vmatpush1.msra.mxu0 0.0
  %1117 = vmatprep.subr.mxu0 0.0
  %1118 = vmatpush1.msra.mxu0 0.0
  %1119 = vmatprep.subr.mxu0 0.0
  %1120 = vmatpush1.msra.mxu0 0.0
  %1121 = vmatprep.subr.mxu0 0.0
  %1122 = vmatpush1.msra.mxu0 0.0
  %1123 = vmatprep.subr.mxu0 0.0
  %1124 = vmatpush1.msra.mxu0 0.0
  %1125 = vmatprep.subr.mxu0 0.0
  %1126 = vmatpush1.msra.mxu0 0.0
  %1127 = vmatprep.subr.mxu0 0.0
  %1128 = vmatpush1.msra.mxu0 0.0
  %1129 = vmatprep.subr.mxu0 0.0
  %1130 = vmatpush1.msra.mxu0 0.0
  %1131 = vmatprep.subr.mxu0 0.0
  %1132 = vmatpush1.msra.mxu0 0.0
  %1133 = vmatprep.subr.mxu0 0.0
  %1134 = vmatpush1.msra.mxu0 0.0
  %1135 = vmatprep.subr.mxu0 0.0
  %1136 = vmatpush1.msra.mxu0 0.0
  %1137 = vmatprep.subr.mxu0 0.0
  %1138 = vmatpush1.msra.mxu0 0.0
  %1139 = vmatprep.subr.mxu0 0.0
  %1140 = vmatpush1.msra.mxu0 0.0
  %1141 = vmatprep.subr.mxu0 0.0
  %1142 = vmatpush1.msra.mxu0 0.0
  %1143 = vmatprep.subr.mxu0 0.0
  %1144 = vmatpush1.msra.mxu0 0.0
  %1145 = vmatprep.subr.mxu0 0.0
  %1146 = vmatpush1.msra.mxu0 0.0
  %1147 = vmatprep.subr.mxu0 0.0
  %1148 = vmatpush1.msra.mxu0 0.0
  %1149 = vmatprep.mubr.f32.mxu0 0.0
  %1150 = vmatmul.mubr.f32.gmra.mrb[0].mxu0 %v1083
  %v1151 = vpop.f32.mrb[0].mxu0
  %v1152 = vadd.f32 0.0, %v1151
  %v1153 = vpop.f32.mrb[0].mxu0
  %1154 = vdwg.mxu0
  %1155 = vrot.lane.b32.xlu0 %v157, 104
  %v1156 = vpop.permute.xlu0 %1155
  %1157 = vrot.lane.b32.xlu0 %v149, 72
  %v1158 = vpop.permute.xlu0 %1157
  %v1159 = vsel %vm167, %v1156, 0
  %v1161 = vsel %vm167, %v1158, 0
  %1163 = vmatprep.subr.mxu0 0.0
  %1164 = vmatpush1.xpose.msra.mxu0 %v1161
  %1165 = vmatprep.subr.mxu0 0.0
  %1166 = vmatpush1.xpose.msra.mxu0 0.0
  %1167 = vmatprep.subr.mxu0 0.0
  %1168 = vmatpush1.xpose.msra.mxu0 0.0
  %1169 = vmatprep.subr.mxu0 0.0
  %1170 = vmatpush1.xpose.msra.mxu0 0.0
  %1171 = vmatprep.subr.mxu0 0.0
  %1172 = vmatpush1.xpose.msra.mxu0 0.0
  %1173 = vmatprep.subr.mxu0 0.0
  %1174 = vmatpush1.xpose.msra.mxu0 0.0
  %1175 = vmatprep.subr.mxu0 0.0
  %1176 = vmatpush1.xpose.msra.mxu0 0.0
  %1177 = vmatprep.subr.mxu0 0.0
  %1178 = vmatpush1.xpose.msra.mxu0 0.0
  %1179 = vmatprep.subr.mxu0 0.0
  %1180 = vmatpush1.xpose.msra.mxu0 0.0
  %1181 = vmatprep.subr.mxu0 0.0
  %1182 = vmatpush1.xpose.msra.mxu0 0.0
  %1183 = vmatprep.subr.mxu0 0.0
  %1184 = vmatpush1.xpose.msra.mxu0 0.0
  %1185 = vmatprep.subr.mxu0 0.0
  %1186 = vmatpush1.xpose.msra.mxu0 0.0
  %1187 = vmatprep.subr.mxu0 0.0
  %1188 = vmatpush1.xpose.msra.mxu0 0.0
  %1189 = vmatprep.subr.mxu0 0.0
  %1190 = vmatpush1.xpose.msra.mxu0 0.0
  %1191 = vmatprep.subr.mxu0 0.0
  %1192 = vmatpush1.xpose.msra.mxu0 0.0
  %1193 = vmatprep.subr.mxu0 0.0
  %1194 = vmatpush1.xpose.msra.mxu0 0.0
  %1195 = vmatprep.subr.mxu0 0.0
  %1196 = vmatpush1.xpose.msra.mxu0 0.0
  %1197 = vmatprep.subr.mxu0 0.0
  %1198 = vmatpush1.xpose.msra.mxu0 0.0
  %1199 = vmatprep.subr.mxu0 0.0
  %1200 = vmatpush1.xpose.msra.mxu0 0.0
  %1201 = vmatprep.subr.mxu0 0.0
  %1202 = vmatpush1.xpose.msra.mxu0 0.0
  %1203 = vmatprep.subr.mxu0 0.0
  %1204 = vmatpush1.xpose.msra.mxu0 0.0
  %1205 = vmatprep.subr.mxu0 0.0
  %1206 = vmatpush1.xpose.msra.mxu0 0.0
  %1207 = vmatprep.subr.mxu0 0.0
  %1208 = vmatpush1.xpose.msra.mxu0 0.0
  %1209 = vmatprep.subr.mxu0 0.0
  %1210 = vmatpush1.xpose.msra.mxu0 0.0
  %1211 = vmatprep.subr.mxu0 0.0
  %1212 = vmatpush1.xpose.msra.mxu0 0.0
  %1213 = vmatprep.subr.mxu0 0.0
  %1214 = vmatpush1.xpose.msra.mxu0 0.0
  %1215 = vmatprep.subr.mxu0 0.0
  %1216 = vmatpush1.xpose.msra.mxu0 0.0
  %1217 = vmatprep.subr.mxu0 0.0
  %1218 = vmatpush1.xpose.msra.mxu0 0.0
  %1219 = vmatprep.subr.mxu0 0.0
  %1220 = vmatpush1.xpose.msra.mxu0 0.0
  %1221 = vmatprep.subr.mxu0 0.0
  %1222 = vmatpush1.xpose.msra.mxu0 0.0
  %1223 = vmatprep.subr.mxu0 0.0
  %1224 = vmatpush1.xpose.msra.mxu0 0.0
  %1225 = vmatprep.subr.mxu0 0.0
  %1226 = vmatpush1.xpose.msra.mxu0 0.0
  %1227 = vmatprep.mubr.f32.mxu0 0.0
  %1228 = vmatmul.mubr.f32.gmra.mrb[0].mxu0 %v1159
  %v1229 = vpop.f32.mrb[0].mxu0
  %v1230 = vadd.f32 0.0, %v1229
  %v1231 = vpop.f32.mrb[0].mxu0
  %1232 = vdwg.mxu0
  %1233 = vrot.lane.b32.xlu0 %v158, 104
  %v1234 = vpop.permute.xlu0 %1233
  %1235 = vrot.lane.b32.xlu0 %v154, 72
  %v1236 = vpop.permute.xlu0 %1235
  %v1237 = vsel %vm167, %v1234, 0
  %v1239 = vsel %vm167, %v1236, 0
  %1241 = vmatprep.subr.mxu0 0.0
  %1242 = vmatpush1.xpose.msra.mxu0 %v1239
  %1243 = vmatprep.subr.mxu0 0.0
  %1244 = vmatpush1.xpose.msra.mxu0 0.0
  %1245 = vmatprep.subr.mxu0 0.0
  %1246 = vmatpush1.xpose.msra.mxu0 0.0
  %1247 = vmatprep.subr.mxu0 0.0
  %1248 = vmatpush1.xpose.msra.mxu0 0.0
  %1249 = vmatprep.subr.mxu0 0.0
  %1250 = vmatpush1.xpose.msra.mxu0 0.0
  %1251 = vmatprep.subr.mxu0 0.0
  %1252 = vmatpush1.xpose.msra.mxu0 0.0
  %1253 = vmatprep.subr.mxu0 0.0
  %1254 = vmatpush1.xpose.msra.mxu0 0.0
  %1255 = vmatprep.subr.mxu0 0.0
  %1256 = vmatpush1.xpose.msra.mxu0 0.0
  %1257 = vmatprep.subr.mxu0 0.0
  %1258 = vmatpush1.xpose.msra.mxu0 0.0
  %1259 = vmatprep.subr.mxu0 0.0
  %1260 = vmatpush1.xpose.msra.mxu0 0.0
  %1261 = vmatprep.subr.mxu0 0.0
  %1262 = vmatpush1.xpose.msra.mxu0 0.0
  %1263 = vmatprep.subr.mxu0 0.0
  %1264 = vmatpush1.xpose.msra.mxu0 0.0
  %1265 = vmatprep.subr.mxu0 0.0
  %1266 = vmatpush1.xpose.msra.mxu0 0.0
  %1267 = vmatprep.subr.mxu0 0.0
  %1268 = vmatpush1.xpose.msra.mxu0 0.0
  %1269 = vmatprep.subr.mxu0 0.0
  %1270 = vmatpush1.xpose.msra.mxu0 0.0
  %1271 = vmatprep.subr.mxu0 0.0
  %1272 = vmatpush1.xpose.msra.mxu0 0.0
  %1273 = vmatprep.subr.mxu0 0.0
  %1274 = vmatpush1.xpose.msra.mxu0 0.0
  %1275 = vmatprep.subr.mxu0 0.0
  %1276 = vmatpush1.xpose.msra.mxu0 0.0
  %1277 = vmatprep.subr.mxu0 0.0
  %1278 = vmatpush1.xpose.msra.mxu0 0.0
  %1279 = vmatprep.subr.mxu0 0.0
  %1280 = vmatpush1.xpose.msra.mxu0 0.0
  %1281 = vmatprep.subr.mxu0 0.0
  %1282 = vmatpush1.xpose.msra.mxu0 0.0
  %1283 = vmatprep.subr.mxu0 0.0
  %1284 = vmatpush1.xpose.msra.mxu0 0.0
  %1285 = vmatprep.subr.mxu0 0.0
  %1286 = vmatpush1.xpose.msra.mxu0 0.0
  %1287 = vmatprep.subr.mxu0 0.0
  %1288 = vmatpush1.xpose.msra.mxu0 0.0
  %1289 = vmatprep.subr.mxu0 0.0
  %1290 = vmatpush1.xpose.msra.mxu0 0.0
  %1291 = vmatprep.subr.mxu0 0.0
  %1292 = vmatpush1.xpose.msra.mxu0 0.0
  %1293 = vmatprep.subr.mxu0 0.0
  %1294 = vmatpush1.xpose.msra.mxu0 0.0
  %1295 = vmatprep.subr.mxu0 0.0
  %1296 = vmatpush1.xpose.msra.mxu0 0.0
  %1297 = vmatprep.subr.mxu0 0.0
  %1298 = vmatpush1.xpose.msra.mxu0 0.0
  %1299 = vmatprep.subr.mxu0 0.0
  %1300 = vmatpush1.xpose.msra.mxu0 0.0
  %1301 = vmatprep.subr.mxu0 0.0
  %1302 = vmatpush1.xpose.msra.mxu0 0.0
  %1303 = vmatprep.subr.mxu0 0.0
  %1304 = vmatpush1.xpose.msra.mxu0 0.0
  %1305 = vmatprep.mubr.f32.mxu0 0.0
  %1306 = vmatmul.mubr.f32.gmra.mrb[0].mxu0 %v1237
  %v1307 = vpop.f32.mrb[0].mxu0
  %v1308 = vadd.f32 0.0, %v1307
  %v1309 = vpop.f32.mrb[0].mxu0
  %1310 = vdwg.mxu0
  %v1311 = vsel %vm167, %v1230, -inf
  %1312 = vmax.xlane.f32.xlu0 %v1311
  %v1313 = vpop.xlane.xlu0 %1312
  %v1314 = vsel %vm167, %v1308, -inf
  %1315 = vmax.xlane.f32.xlu0 %v1314
  %v1316 = vpop.xlane.xlu0 %1315
  %v1317 = vsub.f32 %v1230, %v1313
  %v1318 = vsub.f32 %v1308, %v1316
  %v1319 = vmul.f32 %v1317, 1.442695
  %v1320 = vpow.pop %v1319
  %v1321 = vmul.f32 %v1318, 1.442695
  %v1322 = vpow.pop %v1321
  %v1323 = vsel %vm167, %v1320, 0.0
  %1324 = vadd.xlane.f32.xlu0 %v1323
  %v1325 = vpop.xlane.xlu0 %1324
  %v1326 = vsel %vm167, %v1322, 0.0
  %1327 = vadd.xlane.f32.xlu0 %v1326
  %v1328 = vpop.xlane.xlu0 %1327
  %v1329 = vrcp.pop %v1325
  %v1330 = vrcp.pop %v1328
  %v1331 = vmul.f32 %v1320, %v1329
  %v1332 = vmul.f32 %v1322, %v1330
  %1333 = vrot.lane.b32.xlu0 %v149, 40
  %v1334 = vpop.permute.xlu0 %1333
  %v1337 = vsel %vm167, %v1331, 0
  %1339 = vmatprep.subr.mxu0 0.0
  %1340 = vmatpush1.msra.mxu0 %v1334
  %1341 = vmatprep.subr.mxu0 0.0
  %1342 = vmatpush1.msra.mxu0 0.0
  %1343 = vmatprep.subr.mxu0 0.0
  %1344 = vmatpush1.msra.mxu0 0.0
  %1345 = vmatprep.subr.mxu0 0.0
  %1346 = vmatpush1.msra.mxu0 0.0
  %1347 = vmatprep.subr.mxu0 0.0
  %1348 = vmatpush1.msra.mxu0 0.0
  %1349 = vmatprep.subr.mxu0 0.0
  %1350 = vmatpush1.msra.mxu0 0.0
  %1351 = vmatprep.subr.mxu0 0.0
  %1352 = vmatpush1.msra.mxu0 0.0
  %1353 = vmatprep.subr.mxu0 0.0
  %1354 = vmatpush1.msra.mxu0 0.0
  %1355 = vmatprep.subr.mxu0 0.0
  %1356 = vmatpush1.msra.mxu0 0.0
  %1357 = vmatprep.subr.mxu0 0.0
  %1358 = vmatpush1.msra.mxu0 0.0
  %1359 = vmatprep.subr.mxu0 0.0
  %1360 = vmatpush1.msra.mxu0 0.0
  %1361 = vmatprep.subr.mxu0 0.0
  %1362 = vmatpush1.msra.mxu0 0.0
  %1363 = vmatprep.subr.mxu0 0.0
  %1364 = vmatpush1.msra.mxu0 0.0
  %1365 = vmatprep.subr.mxu0 0.0
  %1366 = vmatpush1.msra.mxu0 0.0
  %1367 = vmatprep.subr.mxu0 0.0
  %1368 = vmatpush1.msra.mxu0 0.0
  %1369 = vmatprep.subr.mxu0 0.0
  %1370 = vmatpush1.msra.mxu0 0.0
  %1371 = vmatprep.subr.mxu0 0.0
  %1372 = vmatpush1.msra.mxu0 0.0
  %1373 = vmatprep.subr.mxu0 0.0
  %1374 = vmatpush1.msra.mxu0 0.0
  %1375 = vmatprep.subr.mxu0 0.0
  %1376 = vmatpush1.msra.mxu0 0.0
  %1377 = vmatprep.subr.mxu0 0.0
  %1378 = vmatpush1.msra.mxu0 0.0
  %1379 = vmatprep.subr.mxu0 0.0
  %1380 = vmatpush1.msra.mxu0 0.0
  %1381 = vmatprep.subr.mxu0 0.0
  %1382 = vmatpush1.msra.mxu0 0.0
  %1383 = vmatprep.subr.mxu0 0.0
  %1384 = vmatpush1.msra.mxu0 0.0
  %1385 = vmatprep.subr.mxu0 0.0
  %1386 = vmatpush1.msra.mxu0 0.0
  %1387 = vmatprep.subr.mxu0 0.0
  %1388 = vmatpush1.msra.mxu0 0.0
  %1389 = vmatprep.subr.mxu0 0.0
  %1390 = vmatpush1.msra.mxu0 0.0
  %1391 = vmatprep.subr.mxu0 0.0
  %1392 = vmatpush1.msra.mxu0 0.0
  %1393 = vmatprep.subr.mxu0 0.0
  %1394 = vmatpush1.msra.mxu0 0.0
  %1395 = vmatprep.subr.mxu0 0.0
  %1396 = vmatpush1.msra.mxu0 0.0
  %1397 = vmatprep.subr.mxu0 0.0
  %1398 = vmatpush1.msra.mxu0 0.0
  %1399 = vmatprep.subr.mxu0 0.0
  %1400 = vmatpush1.msra.mxu0 0.0
  %1401 = vmatprep.subr.mxu0 0.0
  %1402 = vmatpush1.msra.mxu0 0.0
  %1403 = vmatprep.mubr.f32.mxu0 0.0
  %1404 = vmatmul.mubr.f32.gmra.mrb[0].mxu0 %v1337
  %v1405 = vpop.f32.mrb[0].mxu0
  %v1406 = vadd.f32 0.0, %v1405
  %v1407 = vpop.f32.mrb[0].mxu0
  %1408 = vdwg.mxu0
  %1409 = vrot.lane.b32.xlu0 %v154, 40
  %v1410 = vpop.permute.xlu0 %1409
  %v1413 = vsel %vm167, %v1332, 0
  %1415 = vmatprep.subr.mxu0 0.0
  %1416 = vmatpush1.msra.mxu0 %v1410
  %1417 = vmatprep.subr.mxu0 0.0
  %1418 = vmatpush1.msra.mxu0 0.0
  %1419 = vmatprep.subr.mxu0 0.0
  %1420 = vmatpush1.msra.mxu0 0.0
  %1421 = vmatprep.subr.mxu0 0.0
  %1422 = vmatpush1.msra.mxu0 0.0
  %1423 = vmatprep.subr.mxu0 0.0
  %1424 = vmatpush1.msra.mxu0 0.0
  %1425 = vmatprep.subr.mxu0 0.0
  %1426 = vmatpush1.msra.mxu0 0.0
  %1427 = vmatprep.subr.mxu0 0.0
  %1428 = vmatpush1.msra.mxu0 0.0
  %1429 = vmatprep.subr.mxu0 0.0
  %1430 = vmatpush1.msra.mxu0 0.0
  %1431 = vmatprep.subr.mxu0 0.0
  %1432 = vmatpush1.msra.mxu0 0.0
  %1433 = vmatprep.subr.mxu0 0.0
  %1434 = vmatpush1.msra.mxu0 0.0
  %1435 = vmatprep.subr.mxu0 0.0
  %1436 = vmatpush1.msra.mxu0 0.0
  %1437 = vmatprep.subr.mxu0 0.0
  %1438 = vmatpush1.msra.mxu0 0.0
  %1439 = vmatprep.subr.mxu0 0.0
  %1440 = vmatpush1.msra.mxu0 0.0
  %1441 = vmatprep.subr.mxu0 0.0
  %1442 = vmatpush1.msra.mxu0 0.0
  %1443 = vmatprep.subr.mxu0 0.0
  %1444 = vmatpush1.msra.mxu0 0.0
  %1445 = vmatprep.subr.mxu0 0.0
  %1446 = vmatpush1.msra.mxu0 0.0
  %1447 = vmatprep.subr.mxu0 0.0
  %1448 = vmatpush1.msra.mxu0 0.0
  %1449 = vmatprep.subr.mxu0 0.0
  %1450 = vmatpush1.msra.mxu0 0.0
  %1451 = vmatprep.subr.mxu0 0.0
  %1452 = vmatpush1.msra.mxu0 0.0
  %1453 = vmatprep.subr.mxu0 0.0
  %1454 = vmatpush1.msra.mxu0 0.0
  %1455 = vmatprep.subr.mxu0 0.0
  %1456 = vmatpush1.msra.mxu0 0.0
  %1457 = vmatprep.subr.mxu0 0.0
  %1458 = vmatpush1.msra.mxu0 0.0
  %1459 = vmatprep.subr.mxu0 0.0
  %1460 = vmatpush1.msra.mxu0 0.0
  %1461 = vmatprep.subr.mxu0 0.0
  %1462 = vmatpush1.msra.mxu0 0.0
  %1463 = vmatprep.subr.mxu0 0.0
  %1464 = vmatpush1.msra.mxu0 0.0
  %1465 = vmatprep.subr.mxu0 0.0
  %1466 = vmatpush1.msra.mxu0 0.0
  %1467 = vmatprep.subr.mxu0 0.0
  %1468 = vmatpush1.msra.mxu0 0.0
  %1469 = vmatprep.subr.mxu0 0.0
  %1470 = vmatpush1.msra.mxu0 0.0
  %1471 = vmatprep.subr.mxu0 0.0
  %1472 = vmatpush1.msra.mxu0 0.0
  %1473 = vmatprep.subr.mxu0 0.0
  %1474 = vmatpush1.msra.mxu0 0.0
  %1475 = vmatprep.subr.mxu0 0.0
  %1476 = vmatpush1.msra.mxu0 0.0
  %1477 = vmatprep.subr.mxu0 0.0
  %1478 = vmatpush1.msra.mxu0 0.0
  %1479 = vmatprep.mubr.f32.mxu0 0.0
  %1480 = vmatmul.mubr.f32.gmra.mrb[0].mxu0 %v1413
  %v1481 = vpop.f32.mrb[0].mxu0
  %v1482 = vadd.f32 0.0, %v1481
  %v1483 = vpop.f32.mrb[0].mxu0
  %1484 = vdwg.mxu0
  %1487 = vrot.lane.b32.xlu0 %v746, 8
  %v1488 = vpop.permute.xlu0 %1487
  %1489 = vrot.lane.b32.xlu0 %v822, 8
  %v1490 = vpop.permute.xlu0 %1489
  %1495 = vrot.lane.b32.xlu0 %v1076, 16
  %v1496 = vpop.permute.xlu0 %1495
  %1497 = vrot.lane.b32.xlu0 %v1152, 16
  %v1498 = vpop.permute.xlu0 %1497
  %1503 = vrot.lane.b32.xlu0 %v1406, 24
  %v1504 = vpop.permute.xlu0 %1503
  %1505 = vrot.lane.b32.xlu0 %v1482, 24
  %v1506 = vpop.permute.xlu0 %1505
  %v1509 = vsel %vm167, %v416, %v1488
  %v1510 = vsel %vm167, %v492, %v1490
  %vm1511 = vcmask 130048
  %v1512 = vsel %vm1511, %v1509, %v1496
  %v1513 = vsel %vm1511, %v1510, %v1498
  %vm1514 = vcmask 195584
  %v1515 = vsel %vm1514, %v1512, %v1504
  %v1516 = vsel %vm1514, %v1513, %v1506
  %v1518 = vlaneseq
  %v1519 = vshrl.u32 %v1518, 7
  %v1520 = vsub.s32 0, %v1519
  %v1521 = vrot.slane %v163, %v1520
  %v1524 = vsel %vm75, %v1515, 0
  %v1527 = vsel %vm75, %v1516, 0
  %1529 = vmatprep.subr.mxu0 0.0
  %1530 = vmatpush1.msra.mxu0 %v159
  %1531 = vmatprep.subr.mxu0 0.0
  %1532 = vmatpush1.msra.mxu0 %v160
  %1533 = vmatprep.subr.mxu0 0.0
  %1534 = vmatpush1.msra.mxu0 %v161
  %1535 = vmatprep.subr.mxu0 0.0
  %1536 = vmatpush1.msra.mxu0 %v162
  %1537 = vmatprep.subr.mxu0 0.0
  %1538 = vmatpush1.msra.mxu0 0.0
  %1539 = vmatprep.subr.mxu0 0.0
  %1540 = vmatpush1.msra.mxu0 0.0
  %1541 = vmatprep.subr.mxu0 0.0
  %1542 = vmatpush1.msra.mxu0 0.0
  %1543 = vmatprep.subr.mxu0 0.0
  %1544 = vmatpush1.msra.mxu0 0.0
  %1545 = vmatprep.subr.mxu0 0.0
  %1546 = vmatpush1.msra.mxu0 0.0
  %1547 = vmatprep.subr.mxu0 0.0
  %1548 = vmatpush1.msra.mxu0 0.0
  %1549 = vmatprep.subr.mxu0 0.0
  %1550 = vmatpush1.msra.mxu0 0.0
  %1551 = vmatprep.subr.mxu0 0.0
  %1552 = vmatpush1.msra.mxu0 0.0
  %1553 = vmatprep.subr.mxu0 0.0
  %1554 = vmatpush1.msra.mxu0 0.0
  %1555 = vmatprep.subr.mxu0 0.0
  %1556 = vmatpush1.msra.mxu0 0.0
  %1557 = vmatprep.subr.mxu0 0.0
  %1558 = vmatpush1.msra.mxu0 0.0
  %1559 = vmatprep.subr.mxu0 0.0
  %1560 = vmatpush1.msra.mxu0 0.0
  %1561 = vmatprep.subr.mxu0 0.0
  %1562 = vmatpush1.msra.mxu0 0.0
  %1563 = vmatprep.subr.mxu0 0.0
  %1564 = vmatpush1.msra.mxu0 0.0
  %1565 = vmatprep.subr.mxu0 0.0
  %1566 = vmatpush1.msra.mxu0 0.0
  %1567 = vmatprep.subr.mxu0 0.0
  %1568 = vmatpush1.msra.mxu0 0.0
  %1569 = vmatprep.subr.mxu0 0.0
  %1570 = vmatpush1.msra.mxu0 0.0
  %1571 = vmatprep.subr.mxu0 0.0
  %1572 = vmatpush1.msra.mxu0 0.0
  %1573 = vmatprep.subr.mxu0 0.0
  %1574 = vmatpush1.msra.mxu0 0.0
  %1575 = vmatprep.subr.mxu0 0.0
  %1576 = vmatpush1.msra.mxu0 0.0
  %1577 = vmatprep.subr.mxu0 0.0
  %1578 = vmatpush1.msra.mxu0 0.0
  %1579 = vmatprep.subr.mxu0 0.0
  %1580 = vmatpush1.msra.mxu0 0.0
  %1581 = vmatprep.subr.mxu0 0.0
  %1582 = vmatpush1.msra.mxu0 0.0
  %1583 = vmatprep.subr.mxu0 0.0
  %1584 = vmatpush1.msra.mxu0 0.0
  %1585 = vmatprep.subr.mxu0 0.0
  %1586 = vmatpush1.msra.mxu0 0.0
  %1587 = vmatprep.subr.mxu0 0.0
  %1588 = vmatpush1.msra.mxu0 0.0
  %1589 = vmatprep.subr.mxu0 0.0
  %1590 = vmatpush1.msra.mxu0 0.0
  %1591 = vmatprep.subr.mxu0 0.0
  %1592 = vmatpush1.msra.mxu0 0.0
  %1593 = vmatprep.mubr.f32.mxu0 0.0
  %1594 = vmatmul.mubr.f32.gmra.mrb[0].mxu0 %v1524
  %v1595 = vpop.f32.mrb[0].mxu0
  %v1596 = vadd.f32 %v1521, %v1595
  %v1597 = vpop.f32.mrb[0].mxu0
  %1598 = vmatprep.mubr.f32.mxu0 0.0
  %1599 = vmatmul.mubr.f32.gmra.mrb[0].mxu0 %v1527
  %v1600 = vpop.f32.mrb[0].mxu0
  %v1601 = vadd.f32 %v1521, %v1600
  %v1602 = vpop.f32.mrb[0].mxu0
  %1603 = vdwg.mxu0
  %v1604 = vstv %s57
  %v1605 = vmul.f32 %v1604, %v1596
  %v1606 = vmul.f32 %v1604, %v1601
  %v1607 = vadd.f32 %v58, %v1605
  %v1608 = vadd.f32 %v59, %v1606
  %v1609 = vld [vmem:[%s6] sm:$0xff]
  %v1610 = vld [vmem:[%s6 + $0x8] sm:$0xff]
  %v1611 = vld [vmem:[%s6 + $0x10] sm:$0xff]
  %v1612 = vld [vmem:[%s6 + $0x18] sm:$0xff]
  %v1613 = vld [vmem:[%s7] sm:$0x1]
  %v1615 = vlaneseq
  %v1616 = vshrl.u32 %v1615, 7
  %v1617 = vsub.s32 0, %v1616
  %v1618 = vrot.slane %v1613, %v1617
  %v1621 = vsel %vm75, %v1607, 0
  %v1624 = vsel %vm75, %v1608, 0
  %1626 = vmatprep.subr.mxu0 0.0
  %1627 = vmatpush1.msra.mxu0 %v1609
  %1628 = vmatprep.subr.mxu0 0.0
  %1629 = vmatpush1.msra.mxu0 %v1610
  %1630 = vmatprep.subr.mxu0 0.0
  %1631 = vmatpush1.msra.mxu0 %v1611
  %1632 = vmatprep.subr.mxu0 0.0
  %1633 = vmatpush1.msra.mxu0 %v1612
  %1634 = vmatprep.subr.mxu0 0.0
  %1635 = vmatpush1.msra.mxu0 0.0
  %1636 = vmatprep.subr.mxu0 0.0
  %1637 = vmatpush1.msra.mxu0 0.0
  %1638 = vmatprep.subr.mxu0 0.0
  %1639 = vmatpush1.msra.mxu0 0.0
  %1640 = vmatprep.subr.mxu0 0.0
  %1641 = vmatpush1.msra.mxu0 0.0
  %1642 = vmatprep.subr.mxu0 0.0
  %1643 = vmatpush1.msra.mxu0 0.0
  %1644 = vmatprep.subr.mxu0 0.0
  %1645 = vmatpush1.msra.mxu0 0.0
  %1646 = vmatprep.subr.mxu0 0.0
  %1647 = vmatpush1.msra.mxu0 0.0
  %1648 = vmatprep.subr.mxu0 0.0
  %1649 = vmatpush1.msra.mxu0 0.0
  %1650 = vmatprep.subr.mxu0 0.0
  %1651 = vmatpush1.msra.mxu0 0.0
  %1652 = vmatprep.subr.mxu0 0.0
  %1653 = vmatpush1.msra.mxu0 0.0
  %1654 = vmatprep.subr.mxu0 0.0
  %1655 = vmatpush1.msra.mxu0 0.0
  %1656 = vmatprep.subr.mxu0 0.0
  %1657 = vmatpush1.msra.mxu0 0.0
  %1658 = vmatprep.subr.mxu0 0.0
  %1659 = vmatpush1.msra.mxu0 0.0
  %1660 = vmatprep.subr.mxu0 0.0
  %1661 = vmatpush1.msra.mxu0 0.0
  %1662 = vmatprep.subr.mxu0 0.0
  %1663 = vmatpush1.msra.mxu0 0.0
  %1664 = vmatprep.subr.mxu0 0.0
  %1665 = vmatpush1.msra.mxu0 0.0
  %1666 = vmatprep.subr.mxu0 0.0
  %1667 = vmatpush1.msra.mxu0 0.0
  %1668 = vmatprep.subr.mxu0 0.0
  %1669 = vmatpush1.msra.mxu0 0.0
  %1670 = vmatprep.subr.mxu0 0.0
  %1671 = vmatpush1.msra.mxu0 0.0
  %1672 = vmatprep.subr.mxu0 0.0
  %1673 = vmatpush1.msra.mxu0 0.0
  %1674 = vmatprep.subr.mxu0 0.0
  %1675 = vmatpush1.msra.mxu0 0.0
  %1676 = vmatprep.subr.mxu0 0.0
  %1677 = vmatpush1.msra.mxu0 0.0
  %1678 = vmatprep.subr.mxu0 0.0
  %1679 = vmatpush1.msra.mxu0 0.0
  %1680 = vmatprep.subr.mxu0 0.0
  %1681 = vmatpush1.msra.mxu0 0.0
  %1682 = vmatprep.subr.mxu0 0.0
  %1683 = vmatpush1.msra.mxu0 0.0
  %1684 = vmatprep.subr.mxu0 0.0
  %1685 = vmatpush1.msra.mxu0 0.0
  %1686 = vmatprep.subr.mxu0 0.0
  %1687 = vmatpush1.msra.mxu0 0.0
  %1688 = vmatprep.subr.mxu0 0.0
  %1689 = vmatpush1.msra.mxu0 0.0
  %1690 = vmatprep.mubr.f32.mxu0 0.0
  %1691 = vmatmul.mubr.f32.gmra.mrb[0].mxu0 %v1621
  %v1692 = vpop.f32.mrb[0].mxu0
  %v1693 = vadd.f32 %v1618, %v1692
  %v1694 = vpop.f32.mrb[0].mxu0
  %1695 = vmatprep.mubr.f32.mxu0 0.0
  %1696 = vmatmul.mubr.f32.gmra.mrb[0].mxu0 %v1624
  %v1697 = vpop.f32.mrb[0].mxu0
  %v1698 = vadd.f32 %v1618, %v1697
  %v1699 = vpop.f32.mrb[0].mxu0
  %1700 = vdwg.mxu0
  %v1701 = vld [vmem:[%s8] sm:$0xff]
  %v1702 = vld [vmem:[%s8 + $0x8] sm:$0xff]
  %v1703 = vld [vmem:[%s8 + $0x10] sm:$0xff]
  %v1704 = vld [vmem:[%s8 + $0x18] sm:$0xff]
  %v1705 = vld [vmem:[%s9] sm:$0x1]
  %v1707 = vlaneseq
  %v1708 = vshrl.u32 %v1707, 7
  %v1709 = vsub.s32 0, %v1708
  %v1710 = vrot.slane %v1705, %v1709
  %v1713 = vsel %vm75, %v60, 0
  %v1716 = vsel %vm75, %v61, 0
  %v1719 = vsel %vm75, %v62, 0
  %v1722 = vsel %vm75, %v63, 0
  %1724 = vmatprep.subr.mxu0 0.0
  %1725 = vmatpush1.msra.mxu0 %v1701
  %1726 = vmatprep.subr.mxu0 0.0
  %1727 = vmatpush1.msra.mxu0 %v1702
  %1728 = vmatprep.subr.mxu0 0.0
  %1729 = vmatpush1.msra.mxu0 %v1703
  %1730 = vmatprep.subr.mxu0 0.0
  %1731 = vmatpush1.msra.mxu0 %v1704
  %1732 = vmatprep.subr.mxu0 0.0
  %1733 = vmatpush1.msra.mxu0 0.0
  %1734 = vmatprep.subr.mxu0 0.0
  %1735 = vmatpush1.msra.mxu0 0.0
  %1736 = vmatprep.subr.mxu0 0.0
  %1737 = vmatpush1.msra.mxu0 0.0
  %1738 = vmatprep.subr.mxu0 0.0
  %1739 = vmatpush1.msra.mxu0 0.0
  %1740 = vmatprep.subr.mxu0 0.0
  %1741 = vmatpush1.msra.mxu0 0.0
  %1742 = vmatprep.subr.mxu0 0.0
  %1743 = vmatpush1.msra.mxu0 0.0
  %1744 = vmatprep.subr.mxu0 0.0
  %1745 = vmatpush1.msra.mxu0 0.0
  %1746 = vmatprep.subr.mxu0 0.0
  %1747 = vmatpush1.msra.mxu0 0.0
  %1748 = vmatprep.subr.mxu0 0.0
  %1749 = vmatpush1.msra.mxu0 0.0
  %1750 = vmatprep.subr.mxu0 0.0
  %1751 = vmatpush1.msra.mxu0 0.0
  %1752 = vmatprep.subr.mxu0 0.0
  %1753 = vmatpush1.msra.mxu0 0.0
  %1754 = vmatprep.subr.mxu0 0.0
  %1755 = vmatpush1.msra.mxu0 0.0
  %1756 = vmatprep.subr.mxu0 0.0
  %1757 = vmatpush1.msra.mxu0 0.0
  %1758 = vmatprep.subr.mxu0 0.0
  %1759 = vmatpush1.msra.mxu0 0.0
  %1760 = vmatprep.subr.mxu0 0.0
  %1761 = vmatpush1.msra.mxu0 0.0
  %1762 = vmatprep.subr.mxu0 0.0
  %1763 = vmatpush1.msra.mxu0 0.0
  %1764 = vmatprep.subr.mxu0 0.0
  %1765 = vmatpush1.msra.mxu0 0.0
  %1766 = vmatprep.subr.mxu0 0.0
  %1767 = vmatpush1.msra.mxu0 0.0
  %1768 = vmatprep.subr.mxu0 0.0
  %1769 = vmatpush1.msra.mxu0 0.0
  %1770 = vmatprep.subr.mxu0 0.0
  %1771 = vmatpush1.msra.mxu0 0.0
  %1772 = vmatprep.subr.mxu0 0.0
  %1773 = vmatpush1.msra.mxu0 0.0
  %1774 = vmatprep.subr.mxu0 0.0
  %1775 = vmatpush1.msra.mxu0 0.0
  %1776 = vmatprep.subr.mxu0 0.0
  %1777 = vmatpush1.msra.mxu0 0.0
  %1778 = vmatprep.subr.mxu0 0.0
  %1779 = vmatpush1.msra.mxu0 0.0
  %1780 = vmatprep.subr.mxu0 0.0
  %1781 = vmatpush1.msra.mxu0 0.0
  %1782 = vmatprep.subr.mxu0 0.0
  %1783 = vmatpush1.msra.mxu0 0.0
  %1784 = vmatprep.subr.mxu0 0.0
  %1785 = vmatpush1.msra.mxu0 0.0
  %1786 = vmatprep.subr.mxu0 0.0
  %1787 = vmatpush1.msra.mxu0 0.0
  %1788 = vmatprep.mubr.f32.mxu0 0.0
  %1789 = vmatmul.mubr.f32.gmra.mrb[0].mxu0 %v1713
  %v1790 = vpop.f32.mrb[0].mxu0
  %v1791 = vadd.f32 %v1710, %v1790
  %v1792 = vpop.f32.mrb[0].mxu0
  %1793 = vmatprep.mubr.f32.mxu0 0.0
  %1794 = vmatmul.mubr.f32.gmra.mrb[0].mxu0 %v1716
  %v1795 = vpop.f32.mrb[0].mxu0
  %v1796 = vadd.f32 %v1710, %v1795
  %v1797 = vpop.f32.mrb[0].mxu0
  %1798 = vmatprep.mubr.f32.mxu0 0.0
  %1799 = vmatmul.mubr.f32.gmra.mrb[0].mxu0 %v1719
  %v1800 = vpop.f32.mrb[0].mxu0
  %v1801 = vadd.f32 %v1710, %v1800
  %v1802 = vpop.f32.mrb[0].mxu0
  %1803 = vmatprep.mubr.f32.mxu0 0.0
  %1804 = vmatmul.mubr.f32.gmra.mrb[0].mxu0 %v1722
  %v1805 = vpop.f32.mrb[0].mxu0
  %v1806 = vadd.f32 %v1710, %v1805
  %v1807 = vpop.f32.mrb[0].mxu0
  %1808 = vdwg.mxu0
  %v1809 = vmul.f32 %v1693, 0.35355338
  %v1810 = vmul.f32 %v1698, 0.35355338
  %v1811 = vld [vmem:[%s10] sm:$0xff]
  %v1812 = vld [vmem:[%s10 + $0x8] sm:$0xff]
  %v1813 = vld [vmem:[%s10 + $0x10] sm:$0xff]
  %v1814 = vld [vmem:[%s10 + $0x18] sm:$0xff]
  %v1815 = vld [vmem:[%s11] sm:$0x1]
  %v1817 = vsel %vm167, %v1809, 0
  %v1820 = vsel %vm167, %v1791, 0
  %v1823 = vsel %vm167, %v1796, 0
  %1825 = vmatprep.subr.mxu0 0.0
  %1826 = vmatpush1.xpose.msra.mxu0 %v1820
  %1827 = vmatprep.subr.mxu0 0.0
  %1828 = vmatpush1.xpose.msra.mxu0 %v1823
  %1829 = vmatprep.subr.mxu0 0.0
  %1830 = vmatpush1.xpose.msra.mxu0 0.0
  %1831 = vmatprep.subr.mxu0 0.0
  %1832 = vmatpush1.xpose.msra.mxu0 0.0
  %1833 = vmatprep.subr.mxu0 0.0
  %1834 = vmatpush1.xpose.msra.mxu0 0.0
  %1835 = vmatprep.subr.mxu0 0.0
  %1836 = vmatpush1.xpose.msra.mxu0 0.0
  %1837 = vmatprep.subr.mxu0 0.0
  %1838 = vmatpush1.xpose.msra.mxu0 0.0
  %1839 = vmatprep.subr.mxu0 0.0
  %1840 = vmatpush1.xpose.msra.mxu0 0.0
  %1841 = vmatprep.subr.mxu0 0.0
  %1842 = vmatpush1.xpose.msra.mxu0 0.0
  %1843 = vmatprep.subr.mxu0 0.0
  %1844 = vmatpush1.xpose.msra.mxu0 0.0
  %1845 = vmatprep.subr.mxu0 0.0
  %1846 = vmatpush1.xpose.msra.mxu0 0.0
  %1847 = vmatprep.subr.mxu0 0.0
  %1848 = vmatpush1.xpose.msra.mxu0 0.0
  %1849 = vmatprep.subr.mxu0 0.0
  %1850 = vmatpush1.xpose.msra.mxu0 0.0
  %1851 = vmatprep.subr.mxu0 0.0
  %1852 = vmatpush1.xpose.msra.mxu0 0.0
  %1853 = vmatprep.subr.mxu0 0.0
  %1854 = vmatpush1.xpose.msra.mxu0 0.0
  %1855 = vmatprep.subr.mxu0 0.0
  %1856 = vmatpush1.xpose.msra.mxu0 0.0
  %1857 = vmatprep.subr.mxu0 0.0
  %1858 = vmatpush1.xpose.msra.mxu0 0.0
  %1859 = vmatprep.subr.mxu0 0.0
  %1860 = vmatpush1.xpose.msra.mxu0 0.0
  %1861 = vmatprep.subr.mxu0 0.0
  %1862 = vmatpush1.xpose.msra.mxu0 0.0
  %1863 = vmatprep.subr.mxu0 0.0
  %1864 = vmatpush1.xpose.msra.mxu0 0.0
  %1865 = vmatprep.subr.mxu0 0.0
  %1866 = vmatpush1.xpose.msra.mxu0 0.0
  %1867 = vmatprep.subr.mxu0 0.0
  %1868 = vmatpush1.xpose.msra.mxu0 0.0
  %1869 = vmatprep.subr.mxu0 0.0
  %1870 = vmatpush1.xpose.msra.mxu0 0.0
  %1871 = vmatprep.subr.mxu0 0.0
  %1872 = vmatpush1.xpose.msra.mxu0 0.0
  %1873 = vmatprep.subr.mxu0 0.0
  %1874 = vmatpush1.xpose.msra.mxu0 0.0
  %1875 = vmatprep.subr.mxu0 0.0
  %1876 = vmatpush1.xpose.msra.mxu0 0.0
  %1877 = vmatprep.subr.mxu0 0.0
  %1878 = vmatpush1.xpose.msra.mxu0 0.0
  %1879 = vmatprep.subr.mxu0 0.0
  %1880 = vmatpush1.xpose.msra.mxu0 0.0
  %1881 = vmatprep.subr.mxu0 0.0
  %1882 = vmatpush1.xpose.msra.mxu0 0.0
  %1883 = vmatprep.subr.mxu0 0.0
  %1884 = vmatpush1.xpose.msra.mxu0 0.0
  %1885 = vmatprep.subr.mxu0 0.0
  %1886 = vmatpush1.xpose.msra.mxu0 0.0
  %1887 = vmatprep.subr.mxu0 0.0
  %1888 = vmatpush1.xpose.msra.mxu0 0.0
  %1889 = vmatprep.mubr.f32.mxu0 0.0
  %1890 = vmatmul.mubr.f32.gmra.mrb[0].mxu0 %v1817
  %v1891 = vpop.f32.mrb[0].mxu0
  %v1892 = vadd.f32 0.0, %v1891
  %v1893 = vpop.f32.mrb[0].mxu0
  %1894 = vdwg.mxu0
  %v1896 = vsel %vm167, %v1810, 0
  %v1899 = vsel %vm167, %v1801, 0
  %v1902 = vsel %vm167, %v1806, 0
  %1904 = vmatprep.subr.mxu0 0.0
  %1905 = vmatpush1.xpose.msra.mxu0 %v1899
  %1906 = vmatprep.subr.mxu0 0.0
  %1907 = vmatpush1.xpose.msra.mxu0 %v1902
  %1908 = vmatprep.subr.mxu0 0.0
  %1909 = vmatpush1.xpose.msra.mxu0 0.0
  %1910 = vmatprep.subr.mxu0 0.0
  %1911 = vmatpush1.xpose.msra.mxu0 0.0
  %1912 = vmatprep.subr.mxu0 0.0
  %1913 = vmatpush1.xpose.msra.mxu0 0.0
  %1914 = vmatprep.subr.mxu0 0.0
  %1915 = vmatpush1.xpose.msra.mxu0 0.0
  %1916 = vmatprep.subr.mxu0 0.0
  %1917 = vmatpush1.xpose.msra.mxu0 0.0
  %1918 = vmatprep.subr.mxu0 0.0
  %1919 = vmatpush1.xpose.msra.mxu0 0.0
  %1920 = vmatprep.subr.mxu0 0.0
  %1921 = vmatpush1.xpose.msra.mxu0 0.0
  %1922 = vmatprep.subr.mxu0 0.0
  %1923 = vmatpush1.xpose.msra.mxu0 0.0
  %1924 = vmatprep.subr.mxu0 0.0
  %1925 = vmatpush1.xpose.msra.mxu0 0.0
  %1926 = vmatprep.subr.mxu0 0.0
  %1927 = vmatpush1.xpose.msra.mxu0 0.0
  %1928 = vmatprep.subr.mxu0 0.0
  %1929 = vmatpush1.xpose.msra.mxu0 0.0
  %1930 = vmatprep.subr.mxu0 0.0
  %1931 = vmatpush1.xpose.msra.mxu0 0.0
  %1932 = vmatprep.subr.mxu0 0.0
  %1933 = vmatpush1.xpose.msra.mxu0 0.0
  %1934 = vmatprep.subr.mxu0 0.0
  %1935 = vmatpush1.xpose.msra.mxu0 0.0
  %1936 = vmatprep.subr.mxu0 0.0
  %1937 = vmatpush1.xpose.msra.mxu0 0.0
  %1938 = vmatprep.subr.mxu0 0.0
  %1939 = vmatpush1.xpose.msra.mxu0 0.0
  %1940 = vmatprep.subr.mxu0 0.0
  %1941 = vmatpush1.xpose.msra.mxu0 0.0
  %1942 = vmatprep.subr.mxu0 0.0
  %1943 = vmatpush1.xpose.msra.mxu0 0.0
  %1944 = vmatprep.subr.mxu0 0.0
  %1945 = vmatpush1.xpose.msra.mxu0 0.0
  %1946 = vmatprep.subr.mxu0 0.0
  %1947 = vmatpush1.xpose.msra.mxu0 0.0
  %1948 = vmatprep.subr.mxu0 0.0
  %1949 = vmatpush1.xpose.msra.mxu0 0.0
  %1950 = vmatprep.subr.mxu0 0.0
  %1951 = vmatpush1.xpose.msra.mxu0 0.0
  %1952 = vmatprep.subr.mxu0 0.0
  %1953 = vmatpush1.xpose.msra.mxu0 0.0
  %1954 = vmatprep.subr.mxu0 0.0
  %1955 = vmatpush1.xpose.msra.mxu0 0.0
  %1956 = vmatprep.subr.mxu0 0.0
  %1957 = vmatpush1.xpose.msra.mxu0 0.0
  %1958 = vmatprep.subr.mxu0 0.0
  %1959 = vmatpush1.xpose.msra.mxu0 0.0
  %1960 = vmatprep.subr.mxu0 0.0
  %1961 = vmatpush1.xpose.msra.mxu0 0.0
  %1962 = vmatprep.subr.mxu0 0.0
  %1963 = vmatpush1.xpose.msra.mxu0 0.0
  %1964 = vmatprep.subr.mxu0 0.0
  %1965 = vmatpush1.xpose.msra.mxu0 0.0
  %1966 = vmatprep.subr.mxu0 0.0
  %1967 = vmatpush1.xpose.msra.mxu0 0.0
  %1968 = vmatprep.mubr.f32.mxu0 0.0
  %1969 = vmatmul.mubr.f32.gmra.mrb[0].mxu0 %v1896
  %v1970 = vpop.f32.mrb[0].mxu0
  %v1971 = vadd.f32 0.0, %v1970
  %v1972 = vpop.f32.mrb[0].mxu0
  %1973 = vdwg.mxu0
  %v1974 = vsel %vm1511, %v1892, -inf
  %1975 = vmax.xlane.f32.xlu0 %v1974
  %v1976 = vpop.xlane.xlu0 %1975
  %v1977 = vsel %vm1511, %v1971, -inf
  %1978 = vmax.xlane.f32.xlu0 %v1977
  %v1979 = vpop.xlane.xlu0 %1978
  %v1980 = vsub.f32 %v1892, %v1976
  %v1981 = vsub.f32 %v1971, %v1979
  %v1982 = vmul.f32 %v1980, 1.442695
  %v1983 = vpow.pop %v1982
  %v1984 = vmul.f32 %v1981, 1.442695
  %v1985 = vpow.pop %v1984
  %v1986 = vsel %vm1511, %v1983, 0.0
  %1987 = vadd.xlane.f32.xlu0 %v1986
  %v1988 = vpop.xlane.xlu0 %1987
  %v1989 = vsel %vm1511, %v1985, 0.0
  %1990 = vadd.xlane.f32.xlu0 %v1989
  %v1991 = vpop.xlane.xlu0 %1990
  %v1992 = vrcp.pop %v1988
  %v1993 = vrcp.pop %v1991
  %v1994 = vmul.f32 %v1983, %v1992
  %v1995 = vmul.f32 %v1985, %v1993
  %1996 = vrot.lane.b32.xlu0 %v1791, 96
  %v1997 = vpop.permute.xlu0 %1996
  %1998 = vrot.lane.b32.xlu0 %v1796, 96
  %v1999 = vpop.permute.xlu0 %1998
  %v2003 = vsel %vm1511, %v1994, 0
  %2005 = vmatprep.subr.mxu0 0.0
  %2006 = vmatpush1.msra.mxu0 %v1997
  %2007 = vmatprep.subr.mxu0 0.0
  %2008 = vmatpush1.msra.mxu0 %v1999
  %2009 = vmatprep.subr.mxu0 0.0
  %2010 = vmatpush1.msra.mxu0 0.0
  %2011 = vmatprep.subr.mxu0 0.0
  %2012 = vmatpush1.msra.mxu0 0.0
  %2013 = vmatprep.subr.mxu0 0.0
  %2014 = vmatpush1.msra.mxu0 0.0
  %2015 = vmatprep.subr.mxu0 0.0
  %2016 = vmatpush1.msra.mxu0 0.0
  %2017 = vmatprep.subr.mxu0 0.0
  %2018 = vmatpush1.msra.mxu0 0.0
  %2019 = vmatprep.subr.mxu0 0.0
  %2020 = vmatpush1.msra.mxu0 0.0
  %2021 = vmatprep.subr.mxu0 0.0
  %2022 = vmatpush1.msra.mxu0 0.0
  %2023 = vmatprep.subr.mxu0 0.0
  %2024 = vmatpush1.msra.mxu0 0.0
  %2025 = vmatprep.subr.mxu0 0.0
  %2026 = vmatpush1.msra.mxu0 0.0
  %2027 = vmatprep.subr.mxu0 0.0
  %2028 = vmatpush1.msra.mxu0 0.0
  %2029 = vmatprep.subr.mxu0 0.0
  %2030 = vmatpush1.msra.mxu0 0.0
  %2031 = vmatprep.subr.mxu0 0.0
  %2032 = vmatpush1.msra.mxu0 0.0
  %2033 = vmatprep.subr.mxu0 0.0
  %2034 = vmatpush1.msra.mxu0 0.0
  %2035 = vmatprep.subr.mxu0 0.0
  %2036 = vmatpush1.msra.mxu0 0.0
  %2037 = vmatprep.subr.mxu0 0.0
  %2038 = vmatpush1.msra.mxu0 0.0
  %2039 = vmatprep.subr.mxu0 0.0
  %2040 = vmatpush1.msra.mxu0 0.0
  %2041 = vmatprep.subr.mxu0 0.0
  %2042 = vmatpush1.msra.mxu0 0.0
  %2043 = vmatprep.subr.mxu0 0.0
  %2044 = vmatpush1.msra.mxu0 0.0
  %2045 = vmatprep.subr.mxu0 0.0
  %2046 = vmatpush1.msra.mxu0 0.0
  %2047 = vmatprep.subr.mxu0 0.0
  %2048 = vmatpush1.msra.mxu0 0.0
  %2049 = vmatprep.subr.mxu0 0.0
  %2050 = vmatpush1.msra.mxu0 0.0
  %2051 = vmatprep.subr.mxu0 0.0
  %2052 = vmatpush1.msra.mxu0 0.0
  %2053 = vmatprep.subr.mxu0 0.0
  %2054 = vmatpush1.msra.mxu0 0.0
  %2055 = vmatprep.subr.mxu0 0.0
  %2056 = vmatpush1.msra.mxu0 0.0
  %2057 = vmatprep.subr.mxu0 0.0
  %2058 = vmatpush1.msra.mxu0 0.0
  %2059 = vmatprep.subr.mxu0 0.0
  %2060 = vmatpush1.msra.mxu0 0.0
  %2061 = vmatprep.subr.mxu0 0.0
  %2062 = vmatpush1.msra.mxu0 0.0
  %2063 = vmatprep.subr.mxu0 0.0
  %2064 = vmatpush1.msra.mxu0 0.0
  %2065 = vmatprep.subr.mxu0 0.0
  %2066 = vmatpush1.msra.mxu0 0.0
  %2067 = vmatprep.subr.mxu0 0.0
  %2068 = vmatpush1.msra.mxu0 0.0
  %2069 = vmatprep.mubr.f32.mxu0 0.0
  %2070 = vmatmul.mubr.f32.gmra.mrb[0].mxu0 %v2003
  %v2071 = vpop.f32.mrb[0].mxu0
  %v2072 = vadd.f32 0.0, %v2071
  %v2073 = vpop.f32.mrb[0].mxu0
  %2074 = vdwg.mxu0
  %2075 = vrot.lane.b32.xlu0 %v1801, 96
  %v2076 = vpop.permute.xlu0 %2075
  %2077 = vrot.lane.b32.xlu0 %v1806, 96
  %v2078 = vpop.permute.xlu0 %2077
  %v2082 = vsel %vm1511, %v1995, 0
  %2084 = vmatprep.subr.mxu0 0.0
  %2085 = vmatpush1.msra.mxu0 %v2076
  %2086 = vmatprep.subr.mxu0 0.0
  %2087 = vmatpush1.msra.mxu0 %v2078
  %2088 = vmatprep.subr.mxu0 0.0
  %2089 = vmatpush1.msra.mxu0 0.0
  %2090 = vmatprep.subr.mxu0 0.0
  %2091 = vmatpush1.msra.mxu0 0.0
  %2092 = vmatprep.subr.mxu0 0.0
  %2093 = vmatpush1.msra.mxu0 0.0
  %2094 = vmatprep.subr.mxu0 0.0
  %2095 = vmatpush1.msra.mxu0 0.0
  %2096 = vmatprep.subr.mxu0 0.0
  %2097 = vmatpush1.msra.mxu0 0.0
  %2098 = vmatprep.subr.mxu0 0.0
  %2099 = vmatpush1.msra.mxu0 0.0
  %2100 = vmatprep.subr.mxu0 0.0
  %2101 = vmatpush1.msra.mxu0 0.0
  %2102 = vmatprep.subr.mxu0 0.0
  %2103 = vmatpush1.msra.mxu0 0.0
  %2104 = vmatprep.subr.mxu0 0.0
  %2105 = vmatpush1.msra.mxu0 0.0
  %2106 = vmatprep.subr.mxu0 0.0
  %2107 = vmatpush1.msra.mxu0 0.0
  %2108 = vmatprep.subr.mxu0 0.0
  %2109 = vmatpush1.msra.mxu0 0.0
  %2110 = vmatprep.subr.mxu0 0.0
  %2111 = vmatpush1.msra.mxu0 0.0
  %2112 = vmatprep.subr.mxu0 0.0
  %2113 = vmatpush1.msra.mxu0 0.0
  %2114 = vmatprep.subr.mxu0 0.0
  %2115 = vmatpush1.msra.mxu0 0.0
  %2116 = vmatprep.subr.mxu0 0.0
  %2117 = vmatpush1.msra.mxu0 0.0
  %2118 = vmatprep.subr.mxu0 0.0
  %2119 = vmatpush1.msra.mxu0 0.0
  %2120 = vmatprep.subr.mxu0 0.0
  %2121 = vmatpush1.msra.mxu0 0.0
  %2122 = vmatprep.subr.mxu0 0.0
  %2123 = vmatpush1.msra.mxu0 0.0
  %2124 = vmatprep.subr.mxu0 0.0
  %2125 = vmatpush1.msra.mxu0 0.0
  %2126 = vmatprep.subr.mxu0 0.0
  %2127 = vmatpush1.msra.mxu0 0.0
  %2128 = vmatprep.subr.mxu0 0.0
  %2129 = vmatpush1.msra.mxu0 0.0
  %2130 = vmatprep.subr.mxu0 0.0
  %2131 = vmatpush1.msra.mxu0 0.0
  %2132 = vmatprep.subr.mxu0 0.0
  %2133 = vmatpush1.msra.mxu0 0.0
  %2134 = vmatprep.subr.mxu0 0.0
  %2135 = vmatpush1.msra.mxu0 0.0
  %2136 = vmatprep.subr.mxu0 0.0
  %2137 = vmatpush1.msra.mxu0 0.0
  %2138 = vmatprep.subr.mxu0 0.0
  %2139 = vmatpush1.msra.mxu0 0.0
  %2140 = vmatprep.subr.mxu0 0.0
  %2141 = vmatpush1.msra.mxu0 0.0
  %2142 = vmatprep.subr.mxu0 0.0
  %2143 = vmatpush1.msra.mxu0 0.0
  %2144 = vmatprep.subr.mxu0 0.0
  %2145 = vmatpush1.msra.mxu0 0.0
  %2146 = vmatprep.subr.mxu0 0.0
  %2147 = vmatpush1.msra.mxu0 0.0
  %2148 = vmatprep.mubr.f32.mxu0 0.0
  %2149 = vmatmul.mubr.f32.gmra.mrb[0].mxu0 %v2082
  %v2150 = vpop.f32.mrb[0].mxu0
  %v2151 = vadd.f32 0.0, %v2150
  %v2152 = vpop.f32.mrb[0].mxu0
  %2153 = vdwg.mxu0
  %2154 = vrot.lane.b32.xlu0 %v1809, 120
  %v2155 = vpop.permute.xlu0 %2154
  %2156 = vrot.lane.b32.xlu0 %v1791, 120
  %v2157 = vpop.permute.xlu0 %2156
  %2158 = vrot.lane.b32.xlu0 %v1796, 120
  %v2159 = vpop.permute.xlu0 %2158
  %v2160 = vsel %vm167, %v2155, 0
  %v2162 = vsel %vm167, %v2157, 0
  %v2164 = vsel %vm167, %v2159, 0
  %2166 = vmatprep.subr.mxu0 0.0
  %2167 = vmatpush1.xpose.msra.mxu0 %v2162
  %2168 = vmatprep.subr.mxu0 0.0
  %2169 = vmatpush1.xpose.msra.mxu0 %v2164
  %2170 = vmatprep.subr.mxu0 0.0
  %2171 = vmatpush1.xpose.msra.mxu0 0.0
  %2172 = vmatprep.subr.mxu0 0.0
  %2173 = vmatpush1.xpose.msra.mxu0 0.0
  %2174 = vmatprep.subr.mxu0 0.0
  %2175 = vmatpush1.xpose.msra.mxu0 0.0
  %2176 = vmatprep.subr.mxu0 0.0
  %2177 = vmatpush1.xpose.msra.mxu0 0.0
  %2178 = vmatprep.subr.mxu0 0.0
  %2179 = vmatpush1.xpose.msra.mxu0 0.0
  %2180 = vmatprep.subr.mxu0 0.0
  %2181 = vmatpush1.xpose.msra.mxu0 0.0
  %2182 = vmatprep.subr.mxu0 0.0
  %2183 = vmatpush1.xpose.msra.mxu0 0.0
  %2184 = vmatprep.subr.mxu0 0.0
  %2185 = vmatpush1.xpose.msra.mxu0 0.0
  %2186 = vmatprep.subr.mxu0 0.0
  %2187 = vmatpush1.xpose.msra.mxu0 0.0
  %2188 = vmatprep.subr.mxu0 0.0
  %2189 = vmatpush1.xpose.msra.mxu0 0.0
  %2190 = vmatprep.subr.mxu0 0.0
  %2191 = vmatpush1.xpose.msra.mxu0 0.0
  %2192 = vmatprep.subr.mxu0 0.0
  %2193 = vmatpush1.xpose.msra.mxu0 0.0
  %2194 = vmatprep.subr.mxu0 0.0
  %2195 = vmatpush1.xpose.msra.mxu0 0.0
  %2196 = vmatprep.subr.mxu0 0.0
  %2197 = vmatpush1.xpose.msra.mxu0 0.0
  %2198 = vmatprep.subr.mxu0 0.0
  %2199 = vmatpush1.xpose.msra.mxu0 0.0
  %2200 = vmatprep.subr.mxu0 0.0
  %2201 = vmatpush1.xpose.msra.mxu0 0.0
  %2202 = vmatprep.subr.mxu0 0.0
  %2203 = vmatpush1.xpose.msra.mxu0 0.0
  %2204 = vmatprep.subr.mxu0 0.0
  %2205 = vmatpush1.xpose.msra.mxu0 0.0
  %2206 = vmatprep.subr.mxu0 0.0
  %2207 = vmatpush1.xpose.msra.mxu0 0.0
  %2208 = vmatprep.subr.mxu0 0.0
  %2209 = vmatpush1.xpose.msra.mxu0 0.0
  %2210 = vmatprep.subr.mxu0 0.0
  %2211 = vmatpush1.xpose.msra.mxu0 0.0
  %2212 = vmatprep.subr.mxu0 0.0
  %2213 = vmatpush1.xpose.msra.mxu0 0.0
  %2214 = vmatprep.subr.mxu0 0.0
  %2215 = vmatpush1.xpose.msra.mxu0 0.0
  %2216 = vmatprep.subr.mxu0 0.0
  %2217 = vmatpush1.xpose.msra.mxu0 0.0
  %2218 = vmatprep.subr.mxu0 0.0
  %2219 = vmatpush1.xpose.msra.mxu0 0.0
  %2220 = vmatprep.subr.mxu0 0.0
  %2221 = vmatpush1.xpose.msra.mxu0 0.0
  %2222 = vmatprep.subr.mxu0 0.0
  %2223 = vmatpush1.xpose.msra.mxu0 0.0
  %2224 = vmatprep.subr.mxu0 0.0
  %2225 = vmatpush1.xpose.msra.mxu0 0.0
  %2226 = vmatprep.subr.mxu0 0.0
  %2227 = vmatpush1.xpose.msra.mxu0 0.0
  %2228 = vmatprep.subr.mxu0 0.0
  %2229 = vmatpush1.xpose.msra.mxu0 0.0
  %2230 = vmatprep.mubr.f32.mxu0 0.0
  %2231 = vmatmul.mubr.f32.gmra.mrb[0].mxu0 %v2160
  %v2232 = vpop.f32.mrb[0].mxu0
  %v2233 = vadd.f32 0.0, %v2232
  %v2234 = vpop.f32.mrb[0].mxu0
  %2235 = vdwg.mxu0
  %2236 = vrot.lane.b32.xlu0 %v1810, 120
  %v2237 = vpop.permute.xlu0 %2236
  %2238 = vrot.lane.b32.xlu0 %v1801, 120
  %v2239 = vpop.permute.xlu0 %2238
  %2240 = vrot.lane.b32.xlu0 %v1806, 120
  %v2241 = vpop.permute.xlu0 %2240
  %v2242 = vsel %vm167, %v2237, 0
  %v2244 = vsel %vm167, %v2239, 0
  %v2246 = vsel %vm167, %v2241, 0
  %2248 = vmatprep.subr.mxu0 0.0
  %2249 = vmatpush1.xpose.msra.mxu0 %v2244
  %2250 = vmatprep.subr.mxu0 0.0
  %2251 = vmatpush1.xpose.msra.mxu0 %v2246
  %2252 = vmatprep.subr.mxu0 0.0
  %2253 = vmatpush1.xpose.msra.mxu0 0.0
  %2254 = vmatprep.subr.mxu0 0.0
  %2255 = vmatpush1.xpose.msra.mxu0 0.0
  %2256 = vmatprep.subr.mxu0 0.0
  %2257 = vmatpush1.xpose.msra.mxu0 0.0
  %2258 = vmatprep.subr.mxu0 0.0
  %2259 = vmatpush1.xpose.msra.mxu0 0.0
  %2260 = vmatprep.subr.mxu0 0.0
  %2261 = vmatpush1.xpose.msra.mxu0 0.0
  %2262 = vmatprep.subr.mxu0 0.0
  %2263 = vmatpush1.xpose.msra.mxu0 0.0
  %2264 = vmatprep.subr.mxu0 0.0
  %2265 = vmatpush1.xpose.msra.mxu0 0.0
  %2266 = vmatprep.subr.mxu0 0.0
  %2267 = vmatpush1.xpose.msra.mxu0 0.0
  %2268 = vmatprep.subr.mxu0 0.0
  %2269 = vmatpush1.xpose.msra.mxu0 0.0
  %2270 = vmatprep.subr.mxu0 0.0
  %2271 = vmatpush1.xpose.msra.mxu0 0.0
  %2272 = vmatprep.subr.mxu0 0.0
  %2273 = vmatpush1.xpose.msra.mxu0 0.0
  %2274 = vmatprep.subr.mxu0 0.0
  %2275 = vmatpush1.xpose.msra.mxu0 0.0
  %2276 = vmatprep.subr.mxu0 0.0
  %2277 = vmatpush1.xpose.msra.mxu0 0.0
  %2278 = vmatprep.subr.mxu0 0.0
  %2279 = vmatpush1.xpose.msra.mxu0 0.0
  %2280 = vmatprep.subr.mxu0 0.0
  %2281 = vmatpush1.xpose.msra.mxu0 0.0
  %2282 = vmatprep.subr.mxu0 0.0
  %2283 = vmatpush1.xpose.msra.mxu0 0.0
  %2284 = vmatprep.subr.mxu0 0.0
  %2285 = vmatpush1.xpose.msra.mxu0 0.0
  %2286 = vmatprep.subr.mxu0 0.0
  %2287 = vmatpush1.xpose.msra.mxu0 0.0
  %2288 = vmatprep.subr.mxu0 0.0
  %2289 = vmatpush1.xpose.msra.mxu0 0.0
  %2290 = vmatprep.subr.mxu0 0.0
  %2291 = vmatpush1.xpose.msra.mxu0 0.0
  %2292 = vmatprep.subr.mxu0 0.0
  %2293 = vmatpush1.xpose.msra.mxu0 0.0
  %2294 = vmatprep.subr.mxu0 0.0
  %2295 = vmatpush1.xpose.msra.mxu0 0.0
  %2296 = vmatprep.subr.mxu0 0.0
  %2297 = vmatpush1.xpose.msra.mxu0 0.0
  %2298 = vmatprep.subr.mxu0 0.0
  %2299 = vmatpush1.xpose.msra.mxu0 0.0
  %2300 = vmatprep.subr.mxu0 0.0
  %2301 = vmatpush1.xpose.msra.mxu0 0.0
  %2302 = vmatprep.subr.mxu0 0.0
  %2303 = vmatpush1.xpose.msra.mxu0 0.0
  %2304 = vmatprep.subr.mxu0 0.0
  %2305 = vmatpush1.xpose.msra.mxu0 0.0
  %2306 = vmatprep.subr.mxu0 0.0
  %2307 = vmatpush1.xpose.msra.mxu0 0.0
  %2308 = vmatprep.subr.mxu0 0.0
  %2309 = vmatpush1.xpose.msra.mxu0 0.0
  %2310 = vmatprep.subr.mxu0 0.0
  %2311 = vmatpush1.xpose.msra.mxu0 0.0
  %2312 = vmatprep.mubr.f32.mxu0 0.0
  %2313 = vmatmul.mubr.f32.gmra.mrb[0].mxu0 %v2242
  %v2314 = vpop.f32.mrb[0].mxu0
  %v2315 = vadd.f32 0.0, %v2314
  %v2316 = vpop.f32.mrb[0].mxu0
  %2317 = vdwg.mxu0
  %v2318 = vsel %vm1511, %v2233, -inf
  %2319 = vmax.xlane.f32.xlu0 %v2318
  %v2320 = vpop.xlane.xlu0 %2319
  %v2321 = vsel %vm1511, %v2315, -inf
  %2322 = vmax.xlane.f32.xlu0 %v2321
  %v2323 = vpop.xlane.xlu0 %2322
  %v2324 = vsub.f32 %v2233, %v2320
  %v2325 = vsub.f32 %v2315, %v2323
  %v2326 = vmul.f32 %v2324, 1.442695
  %v2327 = vpow.pop %v2326
  %v2328 = vmul.f32 %v2325, 1.442695
  %v2329 = vpow.pop %v2328
  %v2330 = vsel %vm1511, %v2327, 0.0
  %2331 = vadd.xlane.f32.xlu0 %v2330
  %v2332 = vpop.xlane.xlu0 %2331
  %v2333 = vsel %vm1511, %v2329, 0.0
  %2334 = vadd.xlane.f32.xlu0 %v2333
  %v2335 = vpop.xlane.xlu0 %2334
  %v2336 = vrcp.pop %v2332
  %v2337 = vrcp.pop %v2335
  %v2338 = vmul.f32 %v2327, %v2336
  %v2339 = vmul.f32 %v2329, %v2337
  %2340 = vrot.lane.b32.xlu0 %v1791, 88
  %v2341 = vpop.permute.xlu0 %2340
  %2342 = vrot.lane.b32.xlu0 %v1796, 88
  %v2343 = vpop.permute.xlu0 %2342
  %v2347 = vsel %vm1511, %v2338, 0
  %2349 = vmatprep.subr.mxu0 0.0
  %2350 = vmatpush1.msra.mxu0 %v2341
  %2351 = vmatprep.subr.mxu0 0.0
  %2352 = vmatpush1.msra.mxu0 %v2343
  %2353 = vmatprep.subr.mxu0 0.0
  %2354 = vmatpush1.msra.mxu0 0.0
  %2355 = vmatprep.subr.mxu0 0.0
  %2356 = vmatpush1.msra.mxu0 0.0
  %2357 = vmatprep.subr.mxu0 0.0
  %2358 = vmatpush1.msra.mxu0 0.0
  %2359 = vmatprep.subr.mxu0 0.0
  %2360 = vmatpush1.msra.mxu0 0.0
  %2361 = vmatprep.subr.mxu0 0.0
  %2362 = vmatpush1.msra.mxu0 0.0
  %2363 = vmatprep.subr.mxu0 0.0
  %2364 = vmatpush1.msra.mxu0 0.0
  %2365 = vmatprep.subr.mxu0 0.0
  %2366 = vmatpush1.msra.mxu0 0.0
  %2367 = vmatprep.subr.mxu0 0.0
  %2368 = vmatpush1.msra.mxu0 0.0
  %2369 = vmatprep.subr.mxu0 0.0
  %2370 = vmatpush1.msra.mxu0 0.0
  %2371 = vmatprep.subr.mxu0 0.0
  %2372 = vmatpush1.msra.mxu0 0.0
  %2373 = vmatprep.subr.mxu0 0.0
  %2374 = vmatpush1.msra.mxu0 0.0
  %2375 = vmatprep.subr.mxu0 0.0
  %2376 = vmatpush1.msra.mxu0 0.0
  %2377 = vmatprep.subr.mxu0 0.0
  %2378 = vmatpush1.msra.mxu0 0.0
  %2379 = vmatprep.subr.mxu0 0.0
  %2380 = vmatpush1.msra.mxu0 0.0
  %2381 = vmatprep.subr.mxu0 0.0
  %2382 = vmatpush1.msra.mxu0 0.0
  %2383 = vmatprep.subr.mxu0 0.0
  %2384 = vmatpush1.msra.mxu0 0.0
  %2385 = vmatprep.subr.mxu0 0.0
  %2386 = vmatpush1.msra.mxu0 0.0
  %2387 = vmatprep.subr.mxu0 0.0
  %2388 = vmatpush1.msra.mxu0 0.0
  %2389 = vmatprep.subr.mxu0 0.0
  %2390 = vmatpush1.msra.mxu0 0.0
  %2391 = vmatprep.subr.mxu0 0.0
  %2392 = vmatpush1.msra.mxu0 0.0
  %2393 = vmatprep.subr.mxu0 0.0
  %2394 = vmatpush1.msra.mxu0 0.0
  %2395 = vmatprep.subr.mxu0 0.0
  %2396 = vmatpush1.msra.mxu0 0.0
  %2397 = vmatprep.subr.mxu0 0.0
  %2398 = vmatpush1.msra.mxu0 0.0
  %2399 = vmatprep.subr.mxu0 0.0
  %2400 = vmatpush1.msra.mxu0 0.0
  %2401 = vmatprep.subr.mxu0 0.0
  %2402 = vmatpush1.msra.mxu0 0.0
  %2403 = vmatprep.subr.mxu0 0.0
  %2404 = vmatpush1.msra.mxu0 0.0
  %2405 = vmatprep.subr.mxu0 0.0
  %2406 = vmatpush1.msra.mxu0 0.0
  %2407 = vmatprep.subr.mxu0 0.0
  %2408 = vmatpush1.msra.mxu0 0.0
  %2409 = vmatprep.subr.mxu0 0.0
  %2410 = vmatpush1.msra.mxu0 0.0
  %2411 = vmatprep.subr.mxu0 0.0
  %2412 = vmatpush1.msra.mxu0 0.0
  %2413 = vmatprep.mubr.f32.mxu0 0.0
  %2414 = vmatmul.mubr.f32.gmra.mrb[0].mxu0 %v2347
  %v2415 = vpop.f32.mrb[0].mxu0
  %v2416 = vadd.f32 0.0, %v2415
  %v2417 = vpop.f32.mrb[0].mxu0
  %2418 = vdwg.mxu0
  %2419 = vrot.lane.b32.xlu0 %v1801, 88
  %v2420 = vpop.permute.xlu0 %2419
  %2421 = vrot.lane.b32.xlu0 %v1806, 88
  %v2422 = vpop.permute.xlu0 %2421
  %v2426 = vsel %vm1511, %v2339, 0
  %2428 = vmatprep.subr.mxu0 0.0
  %2429 = vmatpush1.msra.mxu0 %v2420
  %2430 = vmatprep.subr.mxu0 0.0
  %2431 = vmatpush1.msra.mxu0 %v2422
  %2432 = vmatprep.subr.mxu0 0.0
  %2433 = vmatpush1.msra.mxu0 0.0
  %2434 = vmatprep.subr.mxu0 0.0
  %2435 = vmatpush1.msra.mxu0 0.0
  %2436 = vmatprep.subr.mxu0 0.0
  %2437 = vmatpush1.msra.mxu0 0.0
  %2438 = vmatprep.subr.mxu0 0.0
  %2439 = vmatpush1.msra.mxu0 0.0
  %2440 = vmatprep.subr.mxu0 0.0
  %2441 = vmatpush1.msra.mxu0 0.0
  %2442 = vmatprep.subr.mxu0 0.0
  %2443 = vmatpush1.msra.mxu0 0.0
  %2444 = vmatprep.subr.mxu0 0.0
  %2445 = vmatpush1.msra.mxu0 0.0
  %2446 = vmatprep.subr.mxu0 0.0
  %2447 = vmatpush1.msra.mxu0 0.0
  %2448 = vmatprep.subr.mxu0 0.0
  %2449 = vmatpush1.msra.mxu0 0.0
  %2450 = vmatprep.subr.mxu0 0.0
  %2451 = vmatpush1.msra.mxu0 0.0
  %2452 = vmatprep.subr.mxu0 0.0
  %2453 = vmatpush1.msra.mxu0 0.0
  %2454 = vmatprep.subr.mxu0 0.0
  %2455 = vmatpush1.msra.mxu0 0.0
  %2456 = vmatprep.subr.mxu0 0.0
  %2457 = vmatpush1.msra.mxu0 0.0
  %2458 = vmatprep.subr.mxu0 0.0
  %2459 = vmatpush1.msra.mxu0 0.0
  %2460 = vmatprep.subr.mxu0 0.0
  %2461 = vmatpush1.msra.mxu0 0.0
  %2462 = vmatprep.subr.mxu0 0.0
  %2463 = vmatpush1.msra.mxu0 0.0
  %2464 = vmatprep.subr.mxu0 0.0
  %2465 = vmatpush1.msra.mxu0 0.0
  %2466 = vmatprep.subr.mxu0 0.0
  %2467 = vmatpush1.msra.mxu0 0.0
  %2468 = vmatprep.subr.mxu0 0.0
  %2469 = vmatpush1.msra.mxu0 0.0
  %2470 = vmatprep.subr.mxu0 0.0
  %2471 = vmatpush1.msra.mxu0 0.0
  %2472 = vmatprep.subr.mxu0 0.0
  %2473 = vmatpush1.msra.mxu0 0.0
  %2474 = vmatprep.subr.mxu0 0.0
  %2475 = vmatpush1.msra.mxu0 0.0
  %2476 = vmatprep.subr.mxu0 0.0
  %2477 = vmatpush1.msra.mxu0 0.0
  %2478 = vmatprep.subr.mxu0 0.0
  %2479 = vmatpush1.msra.mxu0 0.0
  %2480 = vmatprep.subr.mxu0 0.0
  %2481 = vmatpush1.msra.mxu0 0.0
  %2482 = vmatprep.subr.mxu0 0.0
  %2483 = vmatpush1.msra.mxu0 0.0
  %2484 = vmatprep.subr.mxu0 0.0
  %2485 = vmatpush1.msra.mxu0 0.0
  %2486 = vmatprep.subr.mxu0 0.0
  %2487 = vmatpush1.msra.mxu0 0.0
  %2488 = vmatprep.subr.mxu0 0.0
  %2489 = vmatpush1.msra.mxu0 0.0
  %2490 = vmatprep.subr.mxu0 0.0
  %2491 = vmatpush1.msra.mxu0 0.0
  %2492 = vmatprep.mubr.f32.mxu0 0.0
  %2493 = vmatmul.mubr.f32.gmra.mrb[0].mxu0 %v2426
  %v2494 = vpop.f32.mrb[0].mxu0
  %v2495 = vadd.f32 0.0, %v2494
  %v2496 = vpop.f32.mrb[0].mxu0
  %2497 = vdwg.mxu0
  %2498 = vrot.lane.b32.xlu0 %v1809, 112
  %v2499 = vpop.permute.xlu0 %2498
  %2500 = vrot.lane.b32.xlu0 %v1791, 112
  %v2501 = vpop.permute.xlu0 %2500
  %2502 = vrot.lane.b32.xlu0 %v1796, 112
  %v2503 = vpop.permute.xlu0 %2502
  %v2504 = vsel %vm167, %v2499, 0
  %v2506 = vsel %vm167, %v2501, 0
  %v2508 = vsel %vm167, %v2503, 0
  %2510 = vmatprep.subr.mxu0 0.0
  %2511 = vmatpush1.xpose.msra.mxu0 %v2506
  %2512 = vmatprep.subr.mxu0 0.0
  %2513 = vmatpush1.xpose.msra.mxu0 %v2508
  %2514 = vmatprep.subr.mxu0 0.0
  %2515 = vmatpush1.xpose.msra.mxu0 0.0
  %2516 = vmatprep.subr.mxu0 0.0
  %2517 = vmatpush1.xpose.msra.mxu0 0.0
  %2518 = vmatprep.subr.mxu0 0.0
  %2519 = vmatpush1.xpose.msra.mxu0 0.0
  %2520 = vmatprep.subr.mxu0 0.0
  %2521 = vmatpush1.xpose.msra.mxu0 0.0
  %2522 = vmatprep.subr.mxu0 0.0
  %2523 = vmatpush1.xpose.msra.mxu0 0.0
  %2524 = vmatprep.subr.mxu0 0.0
  %2525 = vmatpush1.xpose.msra.mxu0 0.0
  %2526 = vmatprep.subr.mxu0 0.0
  %2527 = vmatpush1.xpose.msra.mxu0 0.0
  %2528 = vmatprep.subr.mxu0 0.0
  %2529 = vmatpush1.xpose.msra.mxu0 0.0
  %2530 = vmatprep.subr.mxu0 0.0
  %2531 = vmatpush1.xpose.msra.mxu0 0.0
  %2532 = vmatprep.subr.mxu0 0.0
  %2533 = vmatpush1.xpose.msra.mxu0 0.0
  %2534 = vmatprep.subr.mxu0 0.0
  %2535 = vmatpush1.xpose.msra.mxu0 0.0
  %2536 = vmatprep.subr.mxu0 0.0
  %2537 = vmatpush1.xpose.msra.mxu0 0.0
  %2538 = vmatprep.subr.mxu0 0.0
  %2539 = vmatpush1.xpose.msra.mxu0 0.0
  %2540 = vmatprep.subr.mxu0 0.0
  %2541 = vmatpush1.xpose.msra.mxu0 0.0
  %2542 = vmatprep.subr.mxu0 0.0
  %2543 = vmatpush1.xpose.msra.mxu0 0.0
  %2544 = vmatprep.subr.mxu0 0.0
  %2545 = vmatpush1.xpose.msra.mxu0 0.0
  %2546 = vmatprep.subr.mxu0 0.0
  %2547 = vmatpush1.xpose.msra.mxu0 0.0
  %2548 = vmatprep.subr.mxu0 0.0
  %2549 = vmatpush1.xpose.msra.mxu0 0.0
  %2550 = vmatprep.subr.mxu0 0.0
  %2551 = vmatpush1.xpose.msra.mxu0 0.0
  %2552 = vmatprep.subr.mxu0 0.0
  %2553 = vmatpush1.xpose.msra.mxu0 0.0
  %2554 = vmatprep.subr.mxu0 0.0
  %2555 = vmatpush1.xpose.msra.mxu0 0.0
  %2556 = vmatprep.subr.mxu0 0.0
  %2557 = vmatpush1.xpose.msra.mxu0 0.0
  %2558 = vmatprep.subr.mxu0 0.0
  %2559 = vmatpush1.xpose.msra.mxu0 0.0
  %2560 = vmatprep.subr.mxu0 0.0
  %2561 = vmatpush1.xpose.msra.mxu0 0.0
  %2562 = vmatprep.subr.mxu0 0.0
  %2563 = vmatpush1.xpose.msra.mxu0 0.0
  %2564 = vmatprep.subr.mxu0 0.0
  %2565 = vmatpush1.xpose.msra.mxu0 0.0
  %2566 = vmatprep.subr.mxu0 0.0
  %2567 = vmatpush1.xpose.msra.mxu0 0.0
  %2568 = vmatprep.subr.mxu0 0.0
  %2569 = vmatpush1.xpose.msra.mxu0 0.0
  %2570 = vmatprep.subr.mxu0 0.0
  %2571 = vmatpush1.xpose.msra.mxu0 0.0
  %2572 = vmatprep.subr.mxu0 0.0
  %2573 = vmatpush1.xpose.msra.mxu0 0.0
  %2574 = vmatprep.mubr.f32.mxu0 0.0
  %2575 = vmatmul.mubr.f32.gmra.mrb[0].mxu0 %v2504
  %v2576 = vpop.f32.mrb[0].mxu0
  %v2577 = vadd.f32 0.0, %v2576
  %v2578 = vpop.f32.mrb[0].mxu0
  %2579 = vdwg.mxu0
  %2580 = vrot.lane.b32.xlu0 %v1810, 112
  %v2581 = vpop.permute.xlu0 %2580
  %2582 = vrot.lane.b32.xlu0 %v1801, 112
  %v2583 = vpop.permute.xlu0 %2582
  %2584 = vrot.lane.b32.xlu0 %v1806, 112
  %v2585 = vpop.permute.xlu0 %2584
  %v2586 = vsel %vm167, %v2581, 0
  %v2588 = vsel %vm167, %v2583, 0
  %v2590 = vsel %vm167, %v2585, 0
  %2592 = vmatprep.subr.mxu0 0.0
  %2593 = vmatpush1.xpose.msra.mxu0 %v2588
  %2594 = vmatprep.subr.mxu0 0.0
  %2595 = vmatpush1.xpose.msra.mxu0 %v2590
  %2596 = vmatprep.subr.mxu0 0.0
  %2597 = vmatpush1.xpose.msra.mxu0 0.0
  %2598 = vmatprep.subr.mxu0 0.0
  %2599 = vmatpush1.xpose.msra.mxu0 0.0
  %2600 = vmatprep.subr.mxu0 0.0
  %2601 = vmatpush1.xpose.msra.mxu0 0.0
  %2602 = vmatprep.subr.mxu0 0.0
  %2603 = vmatpush1.xpose.msra.mxu0 0.0
  %2604 = vmatprep.subr.mxu0 0.0
  %2605 = vmatpush1.xpose.msra.mxu0 0.0
  %2606 = vmatprep.subr.mxu0 0.0
  %2607 = vmatpush1.xpose.msra.mxu0 0.0
  %2608 = vmatprep.subr.mxu0 0.0
  %2609 = vmatpush1.xpose.msra.mxu0 0.0
  %2610 = vmatprep.subr.mxu0 0.0
  %2611 = vmatpush1.xpose.msra.mxu0 0.0
  %2612 = vmatprep.subr.mxu0 0.0
  %2613 = vmatpush1.xpose.msra.mxu0 0.0
  %2614 = vmatprep.subr.mxu0 0.0
  %2615 = vmatpush1.xpose.msra.mxu0 0.0
  %2616 = vmatprep.subr.mxu0 0.0
  %2617 = vmatpush1.xpose.msra.mxu0 0.0
  %2618 = vmatprep.subr.mxu0 0.0
  %2619 = vmatpush1.xpose.msra.mxu0 0.0
  %2620 = vmatprep.subr.mxu0 0.0
  %2621 = vmatpush1.xpose.msra.mxu0 0.0
  %2622 = vmatprep.subr.mxu0 0.0
  %2623 = vmatpush1.xpose.msra.mxu0 0.0
  %2624 = vmatprep.subr.mxu0 0.0
  %2625 = vmatpush1.xpose.msra.mxu0 0.0
  %2626 = vmatprep.subr.mxu0 0.0
  %2627 = vmatpush1.xpose.msra.mxu0 0.0
  %2628 = vmatprep.subr.mxu0 0.0
  %2629 = vmatpush1.xpose.msra.mxu0 0.0
  %2630 = vmatprep.subr.mxu0 0.0
  %2631 = vmatpush1.xpose.msra.mxu0 0.0
  %2632 = vmatprep.subr.mxu0 0.0
  %2633 = vmatpush1.xpose.msra.mxu0 0.0
  %2634 = vmatprep.subr.mxu0 0.0
  %2635 = vmatpush1.xpose.msra.mxu0 0.0
  %2636 = vmatprep.subr.mxu0 0.0
  %2637 = vmatpush1.xpose.msra.mxu0 0.0
  %2638 = vmatprep.subr.mxu0 0.0
  %2639 = vmatpush1.xpose.msra.mxu0 0.0
  %2640 = vmatprep.subr.mxu0 0.0
  %2641 = vmatpush1.xpose.msra.mxu0 0.0
  %2642 = vmatprep.subr.mxu0 0.0
  %2643 = vmatpush1.xpose.msra.mxu0 0.0
  %2644 = vmatprep.subr.mxu0 0.0
  %2645 = vmatpush1.xpose.msra.mxu0 0.0
  %2646 = vmatprep.subr.mxu0 0.0
  %2647 = vmatpush1.xpose.msra.mxu0 0.0
  %2648 = vmatprep.subr.mxu0 0.0
  %2649 = vmatpush1.xpose.msra.mxu0 0.0
  %2650 = vmatprep.subr.mxu0 0.0
  %2651 = vmatpush1.xpose.msra.mxu0 0.0
  %2652 = vmatprep.subr.mxu0 0.0
  %2653 = vmatpush1.xpose.msra.mxu0 0.0
  %2654 = vmatprep.subr.mxu0 0.0
  %2655 = vmatpush1.xpose.msra.mxu0 0.0
  %2656 = vmatprep.mubr.f32.mxu0 0.0
  %2657 = vmatmul.mubr.f32.gmra.mrb[0].mxu0 %v2586
  %v2658 = vpop.f32.mrb[0].mxu0
  %v2659 = vadd.f32 0.0, %v2658
  %v2660 = vpop.f32.mrb[0].mxu0
  %2661 = vdwg.mxu0
  %v2662 = vsel %vm1511, %v2577, -inf
  %2663 = vmax.xlane.f32.xlu0 %v2662
  %v2664 = vpop.xlane.xlu0 %2663
  %v2665 = vsel %vm1511, %v2659, -inf
  %2666 = vmax.xlane.f32.xlu0 %v2665
  %v2667 = vpop.xlane.xlu0 %2666
  %v2668 = vsub.f32 %v2577, %v2664
  %v2669 = vsub.f32 %v2659, %v2667
  %v2670 = vmul.f32 %v2668, 1.442695
  %v2671 = vpow.pop %v2670
  %v2672 = vmul.f32 %v2669, 1.442695
  %v2673 = vpow.pop %v2672
  %v2674 = vsel %vm1511, %v2671, 0.0
  %2675 = vadd.xlane.f32.xlu0 %v2674
  %v2676 = vpop.xlane.xlu0 %2675
  %v2677 = vsel %vm1511, %v2673, 0.0
  %2678 = vadd.xlane.f32.xlu0 %v2677
  %v2679 = vpop.xlane.xlu0 %2678
  %v2680 = vrcp.pop %v2676
  %v2681 = vrcp.pop %v2679
  %v2682 = vmul.f32 %v2671, %v2680
  %v2683 = vmul.f32 %v2673, %v2681
  %2684 = vrot.lane.b32.xlu0 %v1791, 80
  %v2685 = vpop.permute.xlu0 %2684
  %2686 = vrot.lane.b32.xlu0 %v1796, 80
  %v2687 = vpop.permute.xlu0 %2686
  %v2691 = vsel %vm1511, %v2682, 0
  %2693 = vmatprep.subr.mxu0 0.0
  %2694 = vmatpush1.msra.mxu0 %v2685
  %2695 = vmatprep.subr.mxu0 0.0
  %2696 = vmatpush1.msra.mxu0 %v2687
  %2697 = vmatprep.subr.mxu0 0.0
  %2698 = vmatpush1.msra.mxu0 0.0
  %2699 = vmatprep.subr.mxu0 0.0
  %2700 = vmatpush1.msra.mxu0 0.0
  %2701 = vmatprep.subr.mxu0 0.0
  %2702 = vmatpush1.msra.mxu0 0.0
  %2703 = vmatprep.subr.mxu0 0.0
  %2704 = vmatpush1.msra.mxu0 0.0
  %2705 = vmatprep.subr.mxu0 0.0
  %2706 = vmatpush1.msra.mxu0 0.0
  %2707 = vmatprep.subr.mxu0 0.0
  %2708 = vmatpush1.msra.mxu0 0.0
  %2709 = vmatprep.subr.mxu0 0.0
  %2710 = vmatpush1.msra.mxu0 0.0
  %2711 = vmatprep.subr.mxu0 0.0
  %2712 = vmatpush1.msra.mxu0 0.0
  %2713 = vmatprep.subr.mxu0 0.0
  %2714 = vmatpush1.msra.mxu0 0.0
  %2715 = vmatprep.subr.mxu0 0.0
  %2716 = vmatpush1.msra.mxu0 0.0
  %2717 = vmatprep.subr.mxu0 0.0
  %2718 = vmatpush1.msra.mxu0 0.0
  %2719 = vmatprep.subr.mxu0 0.0
  %2720 = vmatpush1.msra.mxu0 0.0
  %2721 = vmatprep.subr.mxu0 0.0
  %2722 = vmatpush1.msra.mxu0 0.0
  %2723 = vmatprep.subr.mxu0 0.0
  %2724 = vmatpush1.msra.mxu0 0.0
  %2725 = vmatprep.subr.mxu0 0.0
  %2726 = vmatpush1.msra.mxu0 0.0
  %2727 = vmatprep.subr.mxu0 0.0
  %2728 = vmatpush1.msra.mxu0 0.0
  %2729 = vmatprep.subr.mxu0 0.0
  %2730 = vmatpush1.msra.mxu0 0.0
  %2731 = vmatprep.subr.mxu0 0.0
  %2732 = vmatpush1.msra.mxu0 0.0
  %2733 = vmatprep.subr.mxu0 0.0
  %2734 = vmatpush1.msra.mxu0 0.0
  %2735 = vmatprep.subr.mxu0 0.0
  %2736 = vmatpush1.msra.mxu0 0.0
  %2737 = vmatprep.subr.mxu0 0.0
  %2738 = vmatpush1.msra.mxu0 0.0
  %2739 = vmatprep.subr.mxu0 0.0
  %2740 = vmatpush1.msra.mxu0 0.0
  %2741 = vmatprep.subr.mxu0 0.0
  %2742 = vmatpush1.msra.mxu0 0.0
  %2743 = vmatprep.subr.mxu0 0.0
  %2744 = vmatpush1.msra.mxu0 0.0
  %2745 = vmatprep.subr.mxu0 0.0
  %2746 = vmatpush1.msra.mxu0 0.0
  %2747 = vmatprep.subr.mxu0 0.0
  %2748 = vmatpush1.msra.mxu0 0.0
  %2749 = vmatprep.subr.mxu0 0.0
  %2750 = vmatpush1.msra.mxu0 0.0
  %2751 = vmatprep.subr.mxu0 0.0
  %2752 = vmatpush1.msra.mxu0 0.0
  %2753 = vmatprep.subr.mxu0 0.0
  %2754 = vmatpush1.msra.mxu0 0.0
  %2755 = vmatprep.subr.mxu0 0.0
  %2756 = vmatpush1.msra.mxu0 0.0
  %2757 = vmatprep.mubr.f32.mxu0 0.0
  %2758 = vmatmul.mubr.f32.gmra.mrb[0].mxu0 %v2691
  %v2759 = vpop.f32.mrb[0].mxu0
  %v2760 = vadd.f32 0.0, %v2759
  %v2761 = vpop.f32.mrb[0].mxu0
  %2762 = vdwg.mxu0
  %2763 = vrot.lane.b32.xlu0 %v1801, 80
  %v2764 = vpop.permute.xlu0 %2763
  %2765 = vrot.lane.b32.xlu0 %v1806, 80
  %v2766 = vpop.permute.xlu0 %2765
  %v2770 = vsel %vm1511, %v2683, 0
  %2772 = vmatprep.subr.mxu0 0.0
  %2773 = vmatpush1.msra.mxu0 %v2764
  %2774 = vmatprep.subr.mxu0 0.0
  %2775 = vmatpush1.msra.mxu0 %v2766
  %2776 = vmatprep.subr.mxu0 0.0
  %2777 = vmatpush1.msra.mxu0 0.0
  %2778 = vmatprep.subr.mxu0 0.0
  %2779 = vmatpush1.msra.mxu0 0.0
  %2780 = vmatprep.subr.mxu0 0.0
  %2781 = vmatpush1.msra.mxu0 0.0
  %2782 = vmatprep.subr.mxu0 0.0
  %2783 = vmatpush1.msra.mxu0 0.0
  %2784 = vmatprep.subr.mxu0 0.0
  %2785 = vmatpush1.msra.mxu0 0.0
  %2786 = vmatprep.subr.mxu0 0.0
  %2787 = vmatpush1.msra.mxu0 0.0
  %2788 = vmatprep.subr.mxu0 0.0
  %2789 = vmatpush1.msra.mxu0 0.0
  %2790 = vmatprep.subr.mxu0 0.0
  %2791 = vmatpush1.msra.mxu0 0.0
  %2792 = vmatprep.subr.mxu0 0.0
  %2793 = vmatpush1.msra.mxu0 0.0
  %2794 = vmatprep.subr.mxu0 0.0
  %2795 = vmatpush1.msra.mxu0 0.0
  %2796 = vmatprep.subr.mxu0 0.0
  %2797 = vmatpush1.msra.mxu0 0.0
  %2798 = vmatprep.subr.mxu0 0.0
  %2799 = vmatpush1.msra.mxu0 0.0
  %2800 = vmatprep.subr.mxu0 0.0
  %2801 = vmatpush1.msra.mxu0 0.0
  %2802 = vmatprep.subr.mxu0 0.0
  %2803 = vmatpush1.msra.mxu0 0.0
  %2804 = vmatprep.subr.mxu0 0.0
  %2805 = vmatpush1.msra.mxu0 0.0
  %2806 = vmatprep.subr.mxu0 0.0
  %2807 = vmatpush1.msra.mxu0 0.0
  %2808 = vmatprep.subr.mxu0 0.0
  %2809 = vmatpush1.msra.mxu0 0.0
  %2810 = vmatprep.subr.mxu0 0.0
  %2811 = vmatpush1.msra.mxu0 0.0
  %2812 = vmatprep.subr.mxu0 0.0
  %2813 = vmatpush1.msra.mxu0 0.0
  %2814 = vmatprep.subr.mxu0 0.0
  %2815 = vmatpush1.msra.mxu0 0.0
  %2816 = vmatprep.subr.mxu0 0.0
  %2817 = vmatpush1.msra.mxu0 0.0
  %2818 = vmatprep.subr.mxu0 0.0
  %2819 = vmatpush1.msra.mxu0 0.0
  %2820 = vmatprep.subr.mxu0 0.0
  %2821 = vmatpush1.msra.mxu0 0.0
  %2822 = vmatprep.subr.mxu0 0.0
  %2823 = vmatpush1.msra.mxu0 0.0
  %2824 = vmatprep.subr.mxu0 0.0
  %2825 = vmatpush1.msra.mxu0 0.0
  %2826 = vmatprep.subr.mxu0 0.0
  %2827 = vmatpush1.msra.mxu0 0.0
  %2828 = vmatprep.subr.mxu0 0.0
  %2829 = vmatpush1.msra.mxu0 0.0
  %2830 = vmatprep.subr.mxu0 0.0
  %2831 = vmatpush1.msra.mxu0 0.0
  %2832 = vmatprep.subr.mxu0 0.0
  %2833 = vmatpush1.msra.mxu0 0.0
  %2834 = vmatprep.subr.mxu0 0.0
  %2835 = vmatpush1.msra.mxu0 0.0
  %2836 = vmatprep.mubr.f32.mxu0 0.0
  %2837 = vmatmul.mubr.f32.gmra.mrb[0].mxu0 %v2770
  %v2838 = vpop.f32.mrb[0].mxu0
  %v2839 = vadd.f32 0.0, %v2838
  %v2840 = vpop.f32.mrb[0].mxu0
  %2841 = vdwg.mxu0
  %2842 = vrot.lane.b32.xlu0 %v1809, 104
  %v2843 = vpop.permute.xlu0 %2842
  %2844 = vrot.lane.b32.xlu0 %v1791, 104
  %v2845 = vpop.permute.xlu0 %2844
  %2846 = vrot.lane.b32.xlu0 %v1796, 104
  %v2847 = vpop.permute.xlu0 %2846
  %v2848 = vsel %vm167, %v2843, 0
  %v2850 = vsel %vm167, %v2845, 0
  %v2852 = vsel %vm167, %v2847, 0
  %2854 = vmatprep.subr.mxu0 0.0
  %2855 = vmatpush1.xpose.msra.mxu0 %v2850
  %2856 = vmatprep.subr.mxu0 0.0
  %2857 = vmatpush1.xpose.msra.mxu0 %v2852
  %2858 = vmatprep.subr.mxu0 0.0
  %2859 = vmatpush1.xpose.msra.mxu0 0.0
  %2860 = vmatprep.subr.mxu0 0.0
  %2861 = vmatpush1.xpose.msra.mxu0 0.0
  %2862 = vmatprep.subr.mxu0 0.0
  %2863 = vmatpush1.xpose.msra.mxu0 0.0
  %2864 = vmatprep.subr.mxu0 0.0
  %2865 = vmatpush1.xpose.msra.mxu0 0.0
  %2866 = vmatprep.subr.mxu0 0.0
  %2867 = vmatpush1.xpose.msra.mxu0 0.0
  %2868 = vmatprep.subr.mxu0 0.0
  %2869 = vmatpush1.xpose.msra.mxu0 0.0
  %2870 = vmatprep.subr.mxu0 0.0
  %2871 = vmatpush1.xpose.msra.mxu0 0.0
  %2872 = vmatprep.subr.mxu0 0.0
  %2873 = vmatpush1.xpose.msra.mxu0 0.0
  %2874 = vmatprep.subr.mxu0 0.0
  %2875 = vmatpush1.xpose.msra.mxu0 0.0
  %2876 = vmatprep.subr.mxu0 0.0
  %2877 = vmatpush1.xpose.msra.mxu0 0.0
  %2878 = vmatprep.subr.mxu0 0.0
  %2879 = vmatpush1.xpose.msra.mxu0 0.0
  %2880 = vmatprep.subr.mxu0 0.0
  %2881 = vmatpush1.xpose.msra.mxu0 0.0
  %2882 = vmatprep.subr.mxu0 0.0
  %2883 = vmatpush1.xpose.msra.mxu0 0.0
  %2884 = vmatprep.subr.mxu0 0.0
  %2885 = vmatpush1.xpose.msra.mxu0 0.0
  %2886 = vmatprep.subr.mxu0 0.0
  %2887 = vmatpush1.xpose.msra.mxu0 0.0
  %2888 = vmatprep.subr.mxu0 0.0
  %2889 = vmatpush1.xpose.msra.mxu0 0.0
  %2890 = vmatprep.subr.mxu0 0.0
  %2891 = vmatpush1.xpose.msra.mxu0 0.0
  %2892 = vmatprep.subr.mxu0 0.0
  %2893 = vmatpush1.xpose.msra.mxu0 0.0
  %2894 = vmatprep.subr.mxu0 0.0
  %2895 = vmatpush1.xpose.msra.mxu0 0.0
  %2896 = vmatprep.subr.mxu0 0.0
  %2897 = vmatpush1.xpose.msra.mxu0 0.0
  %2898 = vmatprep.subr.mxu0 0.0
  %2899 = vmatpush1.xpose.msra.mxu0 0.0
  %2900 = vmatprep.subr.mxu0 0.0
  %2901 = vmatpush1.xpose.msra.mxu0 0.0
  %2902 = vmatprep.subr.mxu0 0.0
  %2903 = vmatpush1.xpose.msra.mxu0 0.0
  %2904 = vmatprep.subr.mxu0 0.0
  %2905 = vmatpush1.xpose.msra.mxu0 0.0
  %2906 = vmatprep.subr.mxu0 0.0
  %2907 = vmatpush1.xpose.msra.mxu0 0.0
  %2908 = vmatprep.subr.mxu0 0.0
  %2909 = vmatpush1.xpose.msra.mxu0 0.0
  %2910 = vmatprep.subr.mxu0 0.0
  %2911 = vmatpush1.xpose.msra.mxu0 0.0
  %2912 = vmatprep.subr.mxu0 0.0
  %2913 = vmatpush1.xpose.msra.mxu0 0.0
  %2914 = vmatprep.subr.mxu0 0.0
  %2915 = vmatpush1.xpose.msra.mxu0 0.0
  %2916 = vmatprep.subr.mxu0 0.0
  %2917 = vmatpush1.xpose.msra.mxu0 0.0
  %2918 = vmatprep.mubr.f32.mxu0 0.0
  %2919 = vmatmul.mubr.f32.gmra.mrb[0].mxu0 %v2848
  %v2920 = vpop.f32.mrb[0].mxu0
  %v2921 = vadd.f32 0.0, %v2920
  %v2922 = vpop.f32.mrb[0].mxu0
  %2923 = vdwg.mxu0
  %2924 = vrot.lane.b32.xlu0 %v1810, 104
  %v2925 = vpop.permute.xlu0 %2924
  %2926 = vrot.lane.b32.xlu0 %v1801, 104
  %v2927 = vpop.permute.xlu0 %2926
  %2928 = vrot.lane.b32.xlu0 %v1806, 104
  %v2929 = vpop.permute.xlu0 %2928
  %v2930 = vsel %vm167, %v2925, 0
  %v2932 = vsel %vm167, %v2927, 0
  %v2934 = vsel %vm167, %v2929, 0
  %2936 = vmatprep.subr.mxu0 0.0
  %2937 = vmatpush1.xpose.msra.mxu0 %v2932
  %2938 = vmatprep.subr.mxu0 0.0
  %2939 = vmatpush1.xpose.msra.mxu0 %v2934
  %2940 = vmatprep.subr.mxu0 0.0
  %2941 = vmatpush1.xpose.msra.mxu0 0.0
  %2942 = vmatprep.subr.mxu0 0.0
  %2943 = vmatpush1.xpose.msra.mxu0 0.0
  %2944 = vmatprep.subr.mxu0 0.0
  %2945 = vmatpush1.xpose.msra.mxu0 0.0
  %2946 = vmatprep.subr.mxu0 0.0
  %2947 = vmatpush1.xpose.msra.mxu0 0.0
  %2948 = vmatprep.subr.mxu0 0.0
  %2949 = vmatpush1.xpose.msra.mxu0 0.0
  %2950 = vmatprep.subr.mxu0 0.0
  %2951 = vmatpush1.xpose.msra.mxu0 0.0
  %2952 = vmatprep.subr.mxu0 0.0
  %2953 = vmatpush1.xpose.msra.mxu0 0.0
  %2954 = vmatprep.subr.mxu0 0.0
  %2955 = vmatpush1.xpose.msra.mxu0 0.0
  %2956 = vmatprep.subr.mxu0 0.0
  %2957 = vmatpush1.xpose.msra.mxu0 0.0
  %2958 = vmatprep.subr.mxu0 0.0
  %2959 = vmatpush1.xpose.msra.mxu0 0.0
  %2960 = vmatprep.subr.mxu0 0.0
  %2961 = vmatpush1.xpose.msra.mxu0 0.0
  %2962 = vmatprep.subr.mxu0 0.0
  %2963 = vmatpush1.xpose.msra.mxu0 0.0
  %2964 = vmatprep.subr.mxu0 0.0
  %2965 = vmatpush1.xpose.msra.mxu0 0.0
  %2966 = vmatprep.subr.mxu0 0.0
  %2967 = vmatpush1.xpose.msra.mxu0 0.0
  %2968 = vmatprep.subr.mxu0 0.0
  %2969 = vmatpush1.xpose.msra.mxu0 0.0
  %2970 = vmatprep.subr.mxu0 0.0
  %2971 = vmatpush1.xpose.msra.mxu0 0.0
  %2972 = vmatprep.subr.mxu0 0.0
  %2973 = vmatpush1.xpose.msra.mxu0 0.0
  %2974 = vmatprep.subr.mxu0 0.0
  %2975 = vmatpush1.xpose.msra.mxu0 0.0
  %2976 = vmatprep.subr.mxu0 0.0
  %2977 = vmatpush1.xpose.msra.mxu0 0.0
  %2978 = vmatprep.subr.mxu0 0.0
  %2979 = vmatpush1.xpose.msra.mxu0 0.0
  %2980 = vmatprep.subr.mxu0 0.0
  %2981 = vmatpush1.xpose.msra.mxu0 0.0
  %2982 = vmatprep.subr.mxu0 0.0
  %2983 = vmatpush1.xpose.msra.mxu0 0.0
  %2984 = vmatprep.subr.mxu0 0.0
  %2985 = vmatpush1.xpose.msra.mxu0 0.0
  %2986 = vmatprep.subr.mxu0 0.0
  %2987 = vmatpush1.xpose.msra.mxu0 0.0
  %2988 = vmatprep.subr.mxu0 0.0
  %2989 = vmatpush1.xpose.msra.mxu0 0.0
  %2990 = vmatprep.subr.mxu0 0.0
  %2991 = vmatpush1.xpose.msra.mxu0 0.0
  %2992 = vmatprep.subr.mxu0 0.0
  %2993 = vmatpush1.xpose.msra.mxu0 0.0
  %2994 = vmatprep.subr.mxu0 0.0
  %2995 = vmatpush1.xpose.msra.mxu0 0.0
  %2996 = vmatprep.subr.mxu0 0.0
  %2997 = vmatpush1.xpose.msra.mxu0 0.0
  %2998 = vmatprep.subr.mxu0 0.0
  %2999 = vmatpush1.xpose.msra.mxu0 0.0
  %3000 = vmatprep.mubr.f32.mxu0 0.0
  %3001 = vmatmul.mubr.f32.gmra.mrb[0].mxu0 %v2930
  %v3002 = vpop.f32.mrb[0].mxu0
  %v3003 = vadd.f32 0.0, %v3002
  %v3004 = vpop.f32.mrb[0].mxu0
  %3005 = vdwg.mxu0
  %v3006 = vsel %vm1511, %v2921, -inf
  %3007 = vmax.xlane.f32.xlu0 %v3006
  %v3008 = vpop.xlane.xlu0 %3007
  %v3009 = vsel %vm1511, %v3003, -inf
  %3010 = vmax.xlane.f32.xlu0 %v3009
  %v3011 = vpop.xlane.xlu0 %3010
  %v3012 = vsub.f32 %v2921, %v3008
  %v3013 = vsub.f32 %v3003, %v3011
  %v3014 = vmul.f32 %v3012, 1.442695
  %v3015 = vpow.pop %v3014
  %v3016 = vmul.f32 %v3013, 1.442695
  %v3017 = vpow.pop %v3016
  %v3018 = vsel %vm1511, %v3015, 0.0
  %3019 = vadd.xlane.f32.xlu0 %v3018
  %v3020 = vpop.xlane.xlu0 %3019
  %v3021 = vsel %vm1511, %v3017, 0.0
  %3022 = vadd.xlane.f32.xlu0 %v3021
  %v3023 = vpop.xlane.xlu0 %3022
  %v3024 = vrcp.pop %v3020
  %v3025 = vrcp.pop %v3023
  %v3026 = vmul.f32 %v3015, %v3024
  %v3027 = vmul.f32 %v3017, %v3025
  %3028 = vrot.lane.b32.xlu0 %v1791, 72
  %v3029 = vpop.permute.xlu0 %3028
  %3030 = vrot.lane.b32.xlu0 %v1796, 72
  %v3031 = vpop.permute.xlu0 %3030
  %v3035 = vsel %vm1511, %v3026, 0
  %3037 = vmatprep.subr.mxu0 0.0
  %3038 = vmatpush1.msra.mxu0 %v3029
  %3039 = vmatprep.subr.mxu0 0.0
  %3040 = vmatpush1.msra.mxu0 %v3031
  %3041 = vmatprep.subr.mxu0 0.0
  %3042 = vmatpush1.msra.mxu0 0.0
  %3043 = vmatprep.subr.mxu0 0.0
  %3044 = vmatpush1.msra.mxu0 0.0
  %3045 = vmatprep.subr.mxu0 0.0
  %3046 = vmatpush1.msra.mxu0 0.0
  %3047 = vmatprep.subr.mxu0 0.0
  %3048 = vmatpush1.msra.mxu0 0.0
  %3049 = vmatprep.subr.mxu0 0.0
  %3050 = vmatpush1.msra.mxu0 0.0
  %3051 = vmatprep.subr.mxu0 0.0
  %3052 = vmatpush1.msra.mxu0 0.0
  %3053 = vmatprep.subr.mxu0 0.0
  %3054 = vmatpush1.msra.mxu0 0.0
  %3055 = vmatprep.subr.mxu0 0.0
  %3056 = vmatpush1.msra.mxu0 0.0
  %3057 = vmatprep.subr.mxu0 0.0
  %3058 = vmatpush1.msra.mxu0 0.0
  %3059 = vmatprep.subr.mxu0 0.0
  %3060 = vmatpush1.msra.mxu0 0.0
  %3061 = vmatprep.subr.mxu0 0.0
  %3062 = vmatpush1.msra.mxu0 0.0
  %3063 = vmatprep.subr.mxu0 0.0
  %3064 = vmatpush1.msra.mxu0 0.0
  %3065 = vmatprep.subr.mxu0 0.0
  %3066 = vmatpush1.msra.mxu0 0.0
  %3067 = vmatprep.subr.mxu0 0.0
  %3068 = vmatpush1.msra.mxu0 0.0
  %3069 = vmatprep.subr.mxu0 0.0
  %3070 = vmatpush1.msra.mxu0 0.0
  %3071 = vmatprep.subr.mxu0 0.0
  %3072 = vmatpush1.msra.mxu0 0.0
  %3073 = vmatprep.subr.mxu0 0.0
  %3074 = vmatpush1.msra.mxu0 0.0
  %3075 = vmatprep.subr.mxu0 0.0
  %3076 = vmatpush1.msra.mxu0 0.0
  %3077 = vmatprep.subr.mxu0 0.0
  %3078 = vmatpush1.msra.mxu0 0.0
  %3079 = vmatprep.subr.mxu0 0.0
  %3080 = vmatpush1.msra.mxu0 0.0
  %3081 = vmatprep.subr.mxu0 0.0
  %3082 = vmatpush1.msra.mxu0 0.0
  %3083 = vmatprep.subr.mxu0 0.0
  %3084 = vmatpush1.msra.mxu0 0.0
  %3085 = vmatprep.subr.mxu0 0.0
  %3086 = vmatpush1.msra.mxu0 0.0
  %3087 = vmatprep.subr.mxu0 0.0
  %3088 = vmatpush1.msra.mxu0 0.0
  %3089 = vmatprep.subr.mxu0 0.0
  %3090 = vmatpush1.msra.mxu0 0.0
  %3091 = vmatprep.subr.mxu0 0.0
  %3092 = vmatpush1.msra.mxu0 0.0
  %3093 = vmatprep.subr.mxu0 0.0
  %3094 = vmatpush1.msra.mxu0 0.0
  %3095 = vmatprep.subr.mxu0 0.0
  %3096 = vmatpush1.msra.mxu0 0.0
  %3097 = vmatprep.subr.mxu0 0.0
  %3098 = vmatpush1.msra.mxu0 0.0
  %3099 = vmatprep.subr.mxu0 0.0
  %3100 = vmatpush1.msra.mxu0 0.0
  %3101 = vmatprep.mubr.f32.mxu0 0.0
  %3102 = vmatmul.mubr.f32.gmra.mrb[0].mxu0 %v3035
  %v3103 = vpop.f32.mrb[0].mxu0
  %v3104 = vadd.f32 0.0, %v3103
  %v3105 = vpop.f32.mrb[0].mxu0
  %3106 = vdwg.mxu0
  %3107 = vrot.lane.b32.xlu0 %v1801, 72
  %v3108 = vpop.permute.xlu0 %3107
  %3109 = vrot.lane.b32.xlu0 %v1806, 72
  %v3110 = vpop.permute.xlu0 %3109
  %v3114 = vsel %vm1511, %v3027, 0
  %3116 = vmatprep.subr.mxu0 0.0
  %3117 = vmatpush1.msra.mxu0 %v3108
  %3118 = vmatprep.subr.mxu0 0.0
  %3119 = vmatpush1.msra.mxu0 %v3110
  %3120 = vmatprep.subr.mxu0 0.0
  %3121 = vmatpush1.msra.mxu0 0.0
  %3122 = vmatprep.subr.mxu0 0.0
  %3123 = vmatpush1.msra.mxu0 0.0
  %3124 = vmatprep.subr.mxu0 0.0
  %3125 = vmatpush1.msra.mxu0 0.0
  %3126 = vmatprep.subr.mxu0 0.0
  %3127 = vmatpush1.msra.mxu0 0.0
  %3128 = vmatprep.subr.mxu0 0.0
  %3129 = vmatpush1.msra.mxu0 0.0
  %3130 = vmatprep.subr.mxu0 0.0
  %3131 = vmatpush1.msra.mxu0 0.0
  %3132 = vmatprep.subr.mxu0 0.0
  %3133 = vmatpush1.msra.mxu0 0.0
  %3134 = vmatprep.subr.mxu0 0.0
  %3135 = vmatpush1.msra.mxu0 0.0
  %3136 = vmatprep.subr.mxu0 0.0
  %3137 = vmatpush1.msra.mxu0 0.0
  %3138 = vmatprep.subr.mxu0 0.0
  %3139 = vmatpush1.msra.mxu0 0.0
  %3140 = vmatprep.subr.mxu0 0.0
  %3141 = vmatpush1.msra.mxu0 0.0
  %3142 = vmatprep.subr.mxu0 0.0
  %3143 = vmatpush1.msra.mxu0 0.0
  %3144 = vmatprep.subr.mxu0 0.0
  %3145 = vmatpush1.msra.mxu0 0.0
  %3146 = vmatprep.subr.mxu0 0.0
  %3147 = vmatpush1.msra.mxu0 0.0
  %3148 = vmatprep.subr.mxu0 0.0
  %3149 = vmatpush1.msra.mxu0 0.0
  %3150 = vmatprep.subr.mxu0 0.0
  %3151 = vmatpush1.msra.mxu0 0.0
  %3152 = vmatprep.subr.mxu0 0.0
  %3153 = vmatpush1.msra.mxu0 0.0
  %3154 = vmatprep.subr.mxu0 0.0
  %3155 = vmatpush1.msra.mxu0 0.0
  %3156 = vmatprep.subr.mxu0 0.0
  %3157 = vmatpush1.msra.mxu0 0.0
  %3158 = vmatprep.subr.mxu0 0.0
  %3159 = vmatpush1.msra.mxu0 0.0
  %3160 = vmatprep.subr.mxu0 0.0
  %3161 = vmatpush1.msra.mxu0 0.0
  %3162 = vmatprep.subr.mxu0 0.0
  %3163 = vmatpush1.msra.mxu0 0.0
  %3164 = vmatprep.subr.mxu0 0.0
  %3165 = vmatpush1.msra.mxu0 0.0
  %3166 = vmatprep.subr.mxu0 0.0
  %3167 = vmatpush1.msra.mxu0 0.0
  %3168 = vmatprep.subr.mxu0 0.0
  %3169 = vmatpush1.msra.mxu0 0.0
  %3170 = vmatprep.subr.mxu0 0.0
  %3171 = vmatpush1.msra.mxu0 0.0
  %3172 = vmatprep.subr.mxu0 0.0
  %3173 = vmatpush1.msra.mxu0 0.0
  %3174 = vmatprep.subr.mxu0 0.0
  %3175 = vmatpush1.msra.mxu0 0.0
  %3176 = vmatprep.subr.mxu0 0.0
  %3177 = vmatpush1.msra.mxu0 0.0
  %3178 = vmatprep.subr.mxu0 0.0
  %3179 = vmatpush1.msra.mxu0 0.0
  %3180 = vmatprep.mubr.f32.mxu0 0.0
  %3181 = vmatmul.mubr.f32.gmra.mrb[0].mxu0 %v3114
  %v3182 = vpop.f32.mrb[0].mxu0
  %v3183 = vadd.f32 0.0, %v3182
  %v3184 = vpop.f32.mrb[0].mxu0
  %3185 = vdwg.mxu0
  %3188 = vrot.lane.b32.xlu0 %v2416, 8
  %v3189 = vpop.permute.xlu0 %3188
  %3190 = vrot.lane.b32.xlu0 %v2495, 8
  %v3191 = vpop.permute.xlu0 %3190
  %3196 = vrot.lane.b32.xlu0 %v2760, 16
  %v3197 = vpop.permute.xlu0 %3196
  %3198 = vrot.lane.b32.xlu0 %v2839, 16
  %v3199 = vpop.permute.xlu0 %3198
  %3204 = vrot.lane.b32.xlu0 %v3104, 24
  %v3205 = vpop.permute.xlu0 %3204
  %3206 = vrot.lane.b32.xlu0 %v3183, 24
  %v3207 = vpop.permute.xlu0 %3206
  %v3210 = vsel %vm167, %v2072, %v3189
  %v3211 = vsel %vm167, %v2151, %v3191
  %v3212 = vsel %vm1511, %v3210, %v3197
  %v3213 = vsel %vm1511, %v3211, %v3199
  %v3214 = vsel %vm1514, %v3212, %v3205
  %v3215 = vsel %vm1514, %v3213, %v3207
  %v3217 = vlaneseq
  %v3218 = vshrl.u32 %v3217, 7
  %v3219 = vsub.s32 0, %v3218
  %v3220 = vrot.slane %v1815, %v3219
  %v3223 = vsel %vm75, %v3214, 0
  %v3226 = vsel %vm75, %v3215, 0
  %3228 = vmatprep.subr.mxu0 0.0
  %3229 = vmatpush1.msra.mxu0 %v1811
  %3230 = vmatprep.subr.mxu0 0.0
  %3231 = vmatpush1.msra.mxu0 %v1812
  %3232 = vmatprep.subr.mxu0 0.0
  %3233 = vmatpush1.msra.mxu0 %v1813
  %3234 = vmatprep.subr.mxu0 0.0
  %3235 = vmatpush1.msra.mxu0 %v1814
  %3236 = vmatprep.subr.mxu0 0.0
  %3237 = vmatpush1.msra.mxu0 0.0
  %3238 = vmatprep.subr.mxu0 0.0
  %3239 = vmatpush1.msra.mxu0 0.0
  %3240 = vmatprep.subr.mxu0 0.0
  %3241 = vmatpush1.msra.mxu0 0.0
  %3242 = vmatprep.subr.mxu0 0.0
  %3243 = vmatpush1.msra.mxu0 0.0
  %3244 = vmatprep.subr.mxu0 0.0
  %3245 = vmatpush1.msra.mxu0 0.0
  %3246 = vmatprep.subr.mxu0 0.0
  %3247 = vmatpush1.msra.mxu0 0.0
  %3248 = vmatprep.subr.mxu0 0.0
  %3249 = vmatpush1.msra.mxu0 0.0
  %3250 = vmatprep.subr.mxu0 0.0
  %3251 = vmatpush1.msra.mxu0 0.0
  %3252 = vmatprep.subr.mxu0 0.0
  %3253 = vmatpush1.msra.mxu0 0.0
  %3254 = vmatprep.subr.mxu0 0.0
  %3255 = vmatpush1.msra.mxu0 0.0
  %3256 = vmatprep.subr.mxu0 0.0
  %3257 = vmatpush1.msra.mxu0 0.0
  %3258 = vmatprep.subr.mxu0 0.0
  %3259 = vmatpush1.msra.mxu0 0.0
  %3260 = vmatprep.subr.mxu0 0.0
  %3261 = vmatpush1.msra.mxu0 0.0
  %3262 = vmatprep.subr.mxu0 0.0
  %3263 = vmatpush1.msra.mxu0 0.0
  %3264 = vmatprep.subr.mxu0 0.0
  %3265 = vmatpush1.msra.mxu0 0.0
  %3266 = vmatprep.subr.mxu0 0.0
  %3267 = vmatpush1.msra.mxu0 0.0
  %3268 = vmatprep.subr.mxu0 0.0
  %3269 = vmatpush1.msra.mxu0 0.0
  %3270 = vmatprep.subr.mxu0 0.0
  %3271 = vmatpush1.msra.mxu0 0.0
  %3272 = vmatprep.subr.mxu0 0.0
  %3273 = vmatpush1.msra.mxu0 0.0
  %3274 = vmatprep.subr.mxu0 0.0
  %3275 = vmatpush1.msra.mxu0 0.0
  %3276 = vmatprep.subr.mxu0 0.0
  %3277 = vmatpush1.msra.mxu0 0.0
  %3278 = vmatprep.subr.mxu0 0.0
  %3279 = vmatpush1.msra.mxu0 0.0
  %3280 = vmatprep.subr.mxu0 0.0
  %3281 = vmatpush1.msra.mxu0 0.0
  %3282 = vmatprep.subr.mxu0 0.0
  %3283 = vmatpush1.msra.mxu0 0.0
  %3284 = vmatprep.subr.mxu0 0.0
  %3285 = vmatpush1.msra.mxu0 0.0
  %3286 = vmatprep.subr.mxu0 0.0
  %3287 = vmatpush1.msra.mxu0 0.0
  %3288 = vmatprep.subr.mxu0 0.0
  %3289 = vmatpush1.msra.mxu0 0.0
  %3290 = vmatprep.subr.mxu0 0.0
  %3291 = vmatpush1.msra.mxu0 0.0
  %3292 = vmatprep.mubr.f32.mxu0 0.0
  %3293 = vmatmul.mubr.f32.gmra.mrb[0].mxu0 %v3223
  %v3294 = vpop.f32.mrb[0].mxu0
  %v3295 = vadd.f32 %v3220, %v3294
  %v3296 = vpop.f32.mrb[0].mxu0
  %3297 = vmatprep.mubr.f32.mxu0 0.0
  %3298 = vmatmul.mubr.f32.gmra.mrb[0].mxu0 %v3226
  %v3299 = vpop.f32.mrb[0].mxu0
  %v3300 = vadd.f32 %v3220, %v3299
  %v3301 = vpop.f32.mrb[0].mxu0
  %3302 = vdwg.mxu0
  %v3303 = vmul.f32 %v1604, %v3295
  %v3304 = vmul.f32 %v1604, %v3300
  %v3305 = vadd.f32 %v1607, %v3303
  %v3306 = vadd.f32 %v1608, %v3304
  %v3307 = vld [vmem:[%s12] sm:$0xff]
  %v3308 = vld [vmem:[%s12 + $0x8] sm:$0xff]
  %v3309 = vld [vmem:[%s12 + $0x10] sm:$0xff]
  %v3310 = vld [vmem:[%s12 + $0x18] sm:$0xff]
  %v3311 = vld [vmem:[%s13] sm:$0x1]
  %v3313 = vlaneseq
  %v3314 = vshrl.u32 %v3313, 7
  %v3315 = vsub.s32 0, %v3314
  %v3316 = vrot.slane %v3311, %v3315
  %v3319 = vsel %vm75, %v3305, 0
  %v3322 = vsel %vm75, %v3306, 0
  %3324 = vmatprep.subr.mxu0 0.0
  %3325 = vmatpush1.msra.mxu0 %v3307
  %3326 = vmatprep.subr.mxu0 0.0
  %3327 = vmatpush1.msra.mxu0 %v3308
  %3328 = vmatprep.subr.mxu0 0.0
  %3329 = vmatpush1.msra.mxu0 %v3309
  %3330 = vmatprep.subr.mxu0 0.0
  %3331 = vmatpush1.msra.mxu0 %v3310
  %3332 = vmatprep.subr.mxu0 0.0
  %3333 = vmatpush1.msra.mxu0 0.0
  %3334 = vmatprep.subr.mxu0 0.0
  %3335 = vmatpush1.msra.mxu0 0.0
  %3336 = vmatprep.subr.mxu0 0.0
  %3337 = vmatpush1.msra.mxu0 0.0
  %3338 = vmatprep.subr.mxu0 0.0
  %3339 = vmatpush1.msra.mxu0 0.0
  %3340 = vmatprep.subr.mxu0 0.0
  %3341 = vmatpush1.msra.mxu0 0.0
  %3342 = vmatprep.subr.mxu0 0.0
  %3343 = vmatpush1.msra.mxu0 0.0
  %3344 = vmatprep.subr.mxu0 0.0
  %3345 = vmatpush1.msra.mxu0 0.0
  %3346 = vmatprep.subr.mxu0 0.0
  %3347 = vmatpush1.msra.mxu0 0.0
  %3348 = vmatprep.subr.mxu0 0.0
  %3349 = vmatpush1.msra.mxu0 0.0
  %3350 = vmatprep.subr.mxu0 0.0
  %3351 = vmatpush1.msra.mxu0 0.0
  %3352 = vmatprep.subr.mxu0 0.0
  %3353 = vmatpush1.msra.mxu0 0.0
  %3354 = vmatprep.subr.mxu0 0.0
  %3355 = vmatpush1.msra.mxu0 0.0
  %3356 = vmatprep.subr.mxu0 0.0
  %3357 = vmatpush1.msra.mxu0 0.0
  %3358 = vmatprep.subr.mxu0 0.0
  %3359 = vmatpush1.msra.mxu0 0.0
  %3360 = vmatprep.subr.mxu0 0.0
  %3361 = vmatpush1.msra.mxu0 0.0
  %3362 = vmatprep.subr.mxu0 0.0
  %3363 = vmatpush1.msra.mxu0 0.0
  %3364 = vmatprep.subr.mxu0 0.0
  %3365 = vmatpush1.msra.mxu0 0.0
  %3366 = vmatprep.subr.mxu0 0.0
  %3367 = vmatpush1.msra.mxu0 0.0
  %3368 = vmatprep.subr.mxu0 0.0
  %3369 = vmatpush1.msra.mxu0 0.0
  %3370 = vmatprep.subr.mxu0 0.0
  %3371 = vmatpush1.msra.mxu0 0.0
  %3372 = vmatprep.subr.mxu0 0.0
  %3373 = vmatpush1.msra.mxu0 0.0
  %3374 = vmatprep.subr.mxu0 0.0
  %3375 = vmatpush1.msra.mxu0 0.0
  %3376 = vmatprep.subr.mxu0 0.0
  %3377 = vmatpush1.msra.mxu0 0.0
  %3378 = vmatprep.subr.mxu0 0.0
  %3379 = vmatpush1.msra.mxu0 0.0
  %3380 = vmatprep.subr.mxu0 0.0
  %3381 = vmatpush1.msra.mxu0 0.0
  %3382 = vmatprep.subr.mxu0 0.0
  %3383 = vmatpush1.msra.mxu0 0.0
  %3384 = vmatprep.subr.mxu0 0.0
  %3385 = vmatpush1.msra.mxu0 0.0
  %3386 = vmatprep.subr.mxu0 0.0
  %3387 = vmatpush1.msra.mxu0 0.0
  %3388 = vmatprep.mubr.f32.mxu0 0.0
  %3389 = vmatmul.mubr.f32.gmra.mrb[0].mxu0 %v3319
  %v3390 = vpop.f32.mrb[0].mxu0
  %v3391 = vadd.f32 %v3316, %v3390
  %v3392 = vpop.f32.mrb[0].mxu0
  %3393 = vmatprep.mubr.f32.mxu0 0.0
  %3394 = vmatmul.mubr.f32.gmra.mrb[0].mxu0 %v3322
  %v3395 = vpop.f32.mrb[0].mxu0
  %v3396 = vadd.f32 %v3316, %v3395
  %v3397 = vpop.f32.mrb[0].mxu0
  %3398 = vdwg.mxu0
  %v3399 = vmax.f32 %v3391, 0.0
  %v3400 = vmax.f32 %v3396, 0.0
  %v3401 = vld [vmem:[%s14] sm:$0xff]
  %v3402 = vld [vmem:[%s14 + $0x8] sm:$0xff]
  %v3403 = vld [vmem:[%s14 + $0x10] sm:$0xff]
  %v3404 = vld [vmem:[%s14 + $0x18] sm:$0xff]
  %v3405 = vld [vmem:[%s14 + $0x20] sm:$0xff]
  %v3406 = vld [vmem:[%s14 + $0x28] sm:$0xff]
  %v3407 = vld [vmem:[%s14 + $0x30] sm:$0xff]
  %v3408 = vld [vmem:[%s14 + $0x38] sm:$0xff]
  %v3409 = vld [vmem:[%s15] sm:$0x1]
  %v3411 = vlaneseq
  %v3412 = vshrl.u32 %v3411, 7
  %v3413 = vsub.s32 0, %v3412
  %v3414 = vrot.slane %v3409, %v3413
  %vm3416 = vcmask 523264
  %v3418 = vsel %vm3416, %v3399, 0
  %v3421 = vsel %vm3416, %v3400, 0
  %3423 = vmatprep.subr.mxu0 0.0
  %3424 = vmatpush1.msra.mxu0 %v3401
  %3425 = vmatprep.subr.mxu0 0.0
  %3426 = vmatpush1.msra.mxu0 %v3402
  %3427 = vmatprep.subr.mxu0 0.0
  %3428 = vmatpush1.msra.mxu0 %v3403
  %3429 = vmatprep.subr.mxu0 0.0
  %3430 = vmatpush1.msra.mxu0 %v3404
  %3431 = vmatprep.subr.mxu0 0.0
  %3432 = vmatpush1.msra.mxu0 %v3405
  %3433 = vmatprep.subr.mxu0 0.0
  %3434 = vmatpush1.msra.mxu0 %v3406
  %3435 = vmatprep.subr.mxu0 0.0
  %3436 = vmatpush1.msra.mxu0 %v3407
  %3437 = vmatprep.subr.mxu0 0.0
  %3438 = vmatpush1.msra.mxu0 %v3408
  %3439 = vmatprep.subr.mxu0 0.0
  %3440 = vmatpush1.msra.mxu0 0.0
  %3441 = vmatprep.subr.mxu0 0.0
  %3442 = vmatpush1.msra.mxu0 0.0
  %3443 = vmatprep.subr.mxu0 0.0
  %3444 = vmatpush1.msra.mxu0 0.0
  %3445 = vmatprep.subr.mxu0 0.0
  %3446 = vmatpush1.msra.mxu0 0.0
  %3447 = vmatprep.subr.mxu0 0.0
  %3448 = vmatpush1.msra.mxu0 0.0
  %3449 = vmatprep.subr.mxu0 0.0
  %3450 = vmatpush1.msra.mxu0 0.0
  %3451 = vmatprep.subr.mxu0 0.0
  %3452 = vmatpush1.msra.mxu0 0.0
  %3453 = vmatprep.subr.mxu0 0.0
  %3454 = vmatpush1.msra.mxu0 0.0
  %3455 = vmatprep.subr.mxu0 0.0
  %3456 = vmatpush1.msra.mxu0 0.0
  %3457 = vmatprep.subr.mxu0 0.0
  %3458 = vmatpush1.msra.mxu0 0.0
  %3459 = vmatprep.subr.mxu0 0.0
  %3460 = vmatpush1.msra.mxu0 0.0
  %3461 = vmatprep.subr.mxu0 0.0
  %3462 = vmatpush1.msra.mxu0 0.0
  %3463 = vmatprep.subr.mxu0 0.0
  %3464 = vmatpush1.msra.mxu0 0.0
  %3465 = vmatprep.subr.mxu0 0.0
  %3466 = vmatpush1.msra.mxu0 0.0
  %3467 = vmatprep.subr.mxu0 0.0
  %3468 = vmatpush1.msra.mxu0 0.0
  %3469 = vmatprep.subr.mxu0 0.0
  %3470 = vmatpush1.msra.mxu0 0.0
  %3471 = vmatprep.subr.mxu0 0.0
  %3472 = vmatpush1.msra.mxu0 0.0
  %3473 = vmatprep.subr.mxu0 0.0
  %3474 = vmatpush1.msra.mxu0 0.0
  %3475 = vmatprep.subr.mxu0 0.0
  %3476 = vmatpush1.msra.mxu0 0.0
  %3477 = vmatprep.subr.mxu0 0.0
  %3478 = vmatpush1.msra.mxu0 0.0
  %3479 = vmatprep.subr.mxu0 0.0
  %3480 = vmatpush1.msra.mxu0 0.0
  %3481 = vmatprep.subr.mxu0 0.0
  %3482 = vmatpush1.msra.mxu0 0.0
  %3483 = vmatprep.subr.mxu0 0.0
  %3484 = vmatpush1.msra.mxu0 0.0
  %3485 = vmatprep.subr.mxu0 0.0
  %3486 = vmatpush1.msra.mxu0 0.0
  %3487 = vmatprep.mubr.f32.mxu0 0.0
  %3488 = vmatmul.mubr.f32.gmra.mrb[0].mxu0 %v3418
  %v3489 = vpop.f32.mrb[0].mxu0
  %v3490 = vadd.f32 %v3414, %v3489
  %v3491 = vpop.f32.mrb[0].mxu0
  %3492 = vmatprep.mubr.f32.mxu0 0.0
  %3493 = vmatmul.mubr.f32.gmra.mrb[0].mxu0 %v3421
  %v3494 = vpop.f32.mrb[0].mxu0
  %v3495 = vadd.f32 %v3414, %v3494
  %v3496 = vpop.f32.mrb[0].mxu0
  %3497 = vdwg.mxu0
  %v3498 = vmul.f32 %v1604, %v3490
  %v3499 = vmul.f32 %v1604, %v3495
  %v3500 = vadd.f32 %v3305, %v3498
  %v3501 = vadd.f32 %v3306, %v3499
  %3502 = vst.msk [vmem:[%s17] sm:$0xff] %vm75, %v3500
  %3503 = vst.msk [vmem:[%s17 + $0x8] sm:$0xff] %vm75, %v3501
  // Predicated region
  $region70: #{rztx_decoder_layer.1} parent=0 // pred_check
    _
  $region71: #{rztx_decoder_layer.1} parent=0 // pred_check_branch
    %3505 = sbr.rel (0) target = $region73
  $region72: #{rztx_decoder_layer.1} parent=0 // pred_region
    _
  $region73: #{rztx_decoder_layer.1} parent=0 // pred_fallthru
    _
  // Predicated region
  $region74: #{rztx_decoder_layer.1} parent=0 // pred_check
    _
  $region75: #{rztx_decoder_layer.1} parent=0 // pred_check_branch
    %3507 = sbr.rel (0) target = $region77
  $region76: #{rztx_decoder_layer.1} parent=0 // pred_region
    _
  $region77: #{rztx_decoder_layer.1} parent=0 // pred_fallthru
    _

</llo_original>
